<compile_context>
chip_gen: v7x
topology: tpu7x:2x2x1
jax: 0.10.0
libtpu: 0.0.40
codegen_flags: <defaults>
</compile_context>

<pallas_src>
import functools

import numpy as np

import jax
import jax.numpy as jnp
from jax import lax
from jax.experimental import pallas as pl
from jax.experimental.pallas import tpu as pltpu


# ----------------------------------------------------------------------------
# Single fused kernel: projections + batched MQA + output 1x1 conv.
# ----------------------------------------------------------------------------
def _mqa_fused_kernel(wq_ref, wk_ref, kb_ref, wv_ref, vb_ref, wo_ref,
                      xf_ref, xk_ref, xv_ref, o_ref,
                      qcf_scr, vcf_scr, qp_scr, vp_scr, ctx_scr,
                      *, key_dim, nk, n_slabs, n_j, exact, cdt):
    def mxu(a, b):
        return jnp.dot(a.astype(cdt), b.astype(cdt),
                       preferred_element_type=jnp.float32)

    # --- fused projections (one dot each) -----------------------------------
    # Query 1x1 conv, softmax scale pre-folded into wq:  (NK, C) @ (C, L).
    qcf_scr[...] = mxu(wq_ref[...], xf_ref[0])
    # K: dwconv+BN+1x1 pre-folded into (kd, CK); the kv input is lane-permuted
    # (sigma) in the wrapper so K's columns are already in the attention order.
    k_p = mxu(wk_ref[...], xk_ref[0]) + kb_ref[...]                # (kd, S)
    # V (channels-first, natural spatial order); raw-view interleave below.
    vcf_scr[...] = mxu(wv_ref[...], xv_ref[0]) + vb_ref[...]       # (kd, S)

    # --- raw torch views as contiguous static block copies ------------------
    # q.view(B, nh, -1, kd): row block g of q_perm == lane slab g of q_cf.
    for g in range(n_slabs):
        qp_scr[g * nk:(g + 1) * nk, :] = qcf_scr[:, g * key_dim:(g + 1) * key_dim]
    # v.view(B, -1, kd) under the sigma-permuted kv axis: n_j (kd, kd) copies.
    for j in range(n_j):
        vp_scr[j * key_dim:(j + 1) * key_dim, :] = \
            vcf_scr[:, j * key_dim:(j + 1) * key_dim]

    # --- batched attention: 2 matmuls + 1 row-wise softmax ------------------
    s_all = mxu(qp_scr[...], k_p)                                  # (nh*L, S)
    m = jnp.max(s_all, axis=-1, keepdims=True)
    p = jnp.exp(s_all - m)
    denom = jnp.sum(p, axis=-1, keepdims=True)
    # approx=True -> EUP slot (production); exact kept for the fp32 parity run.
    p = p * pl.reciprocal(denom, approx=not exact)
    ctx_scr[...] = mxu(p, vp_scr[...])                             # (nh*L, kd)

    # --- output 1x1 conv, per kd-lane slab of the lane-dense (C, L) output --
    wo = wo_ref[...]
    for g in range(n_slabs):
        o_ref[0, :, g * key_dim:(g + 1) * key_dim] = mxu(
            wo, ctx_scr[g * nk:(g + 1) * nk, :]).astype(o_ref.dtype)


# ----------------------------------------------------------------------------
# Forward wrapper: builds the lane-dense tap matrix / permutations / folded
# weights views and issues ONE pallas_call.
# ----------------------------------------------------------------------------
def mqa_forward(x, params, *, num_heads, key_dim, kv_strides, dw_kernel_size,
                compute_dtype=jnp.float32, exact_softmax=True):
    B, C, H, W = x.shape
    assert B == 1, "the torch module's raw views are only well defined for B == 1"
    assert H == W, "context.view(B, nh*kd, px, px) requires H == W"
    L = H * W
    NK = num_heads * key_dim
    assert L % key_dim == 0, "slab decomposition requires key_dim | H*W"
    n_slabs = L // key_dim
    cdt = compute_dtype

    xf = x.reshape(B, C, L)

    if kv_strides > 1:
        assert kv_strides == 2, "only kv_strides in {1, 2} (as used by the model specs)"
        ks = dw_kernel_size
        pad = (ks - 1) // 2
        Ho = (H + 2 * pad - ks) // 2 + 1
        Wo = (W + 2 * pad - ks) // 2 + 1
        S = Ho * Wo
        # Lane-dense tap matrix (T*C, S): row t*C + c holds tap (di, dj) of
        # channel c at every downsampled output position (S on the lane dim).
        xpad = jnp.pad(x, ((0, 0), (0, 0), (pad, pad), (pad, pad)))
        tap_list = []
        for di in range(ks):
            for dj in range(ks):
                tap_list.append(
                    xpad[:, :, di:di + 2 * Ho:2, dj:dj + 2 * Wo:2].reshape(B, C, S))
        xv_in = jnp.concatenate(tap_list, axis=1)            # (B, T*C, S)
        wk_in, kb = params["wk_eff"], params["kb"]            # dw+BN+1x1 folded
        wv_in, vb = params["wv_eff"], params["vb"]
    else:
        S = L
        xv_in = xf
        wk_in, kb = params["wk"], jnp.zeros((key_dim, 1), jnp.float32)
        wv_in, vb = params["wv"], jnp.zeros((key_dim, 1), jnp.float32)

    assert S % key_dim == 0, "v.view block decomposition requires key_dim | S"
    n_j = S // key_dim
    # sigma-permuted kv axis: new index i = j*kd + c  ->  old kv index c*n_j + j.
    idx = np.arange(S)
    sigma = (idx % key_dim) * n_j + idx // key_dim
    xk_in = xv_in[:, :, sigma]          # K-path input with sigma-ordered columns
    CK = wk_in.shape[1]

    # Production mode ships MXU operands in bf16 (halves activation DMA).
    wq_s = params["wq_s"].astype(cdt)
    wk_c = wk_in.astype(cdt)
    wv_c = wv_in.astype(cdt)
    wo_c = params["wo"].astype(cdt)
    xf_c = xf.astype(cdt)
    xk_c = xk_in.astype(cdt)
    xv_c = xv_in.astype(cdt)

    kernel = functools.partial(
        _mqa_fused_kernel, key_dim=key_dim, nk=NK, n_slabs=n_slabs, n_j=n_j,
        exact=exact_softmax, cdt=cdt)

    out = pl.pallas_call(
        kernel,
        out_shape=jax.ShapeDtypeStruct((B, C, L), jnp.float32),
        grid=(B,),
        in_specs=[
            pl.BlockSpec((NK, C), lambda b: (0, 0)),
            pl.BlockSpec((key_dim, CK), lambda b: (0, 0)),
            pl.BlockSpec((key_dim, 1), lambda b: (0, 0)),
            pl.BlockSpec((key_dim, CK), lambda b: (0, 0)),
            pl.BlockSpec((key_dim, 1), lambda b: (0, 0)),
            pl.BlockSpec((C, NK), lambda b: (0, 0)),
            pl.BlockSpec((1, C, L), lambda b: (b, 0, 0)),
            pl.BlockSpec((1, CK, S), lambda b: (b, 0, 0)),
            pl.BlockSpec((1, CK, S), lambda b: (b, 0, 0)),
        ],
        out_specs=pl.BlockSpec((1, C, L), lambda b: (b, 0, 0)),
        scratch_shapes=[
            pltpu.VMEM((NK, L), jnp.float32),                 # q channels-first
            pltpu.VMEM((key_dim, S), jnp.float32),            # v channels-first
            pltpu.VMEM((num_heads * L, key_dim), jnp.float32),  # q raw-view rows
            pltpu.VMEM((S, key_dim), jnp.float32),            # v raw-view rows (sigma)
            pltpu.VMEM((num_heads * L, key_dim), jnp.float32),  # context rows
        ],
        compiler_params=pltpu.CompilerParams(
            dimension_semantics=("arbitrary",)),
    )(wq_s, wk_c, kb, wv_c, vb, wo_c, xf_c, xk_c, xv_c)

    return out.reshape(B, C, H, W)


# ----------------------------------------------------------------------------
# Deterministic synthetic parameters + folding (BN + dwconv + 1x1 into one
# weight, softmax scale into wq).
# ----------------------------------------------------------------------------
def init_params(key, *, inp, num_heads, key_dim, dw_kernel_size, eps=1e-5):
    NK = num_heads * key_dim
    head_dim = key_dim // num_heads
    T = dw_kernel_size * dw_kernel_size
    ks = jax.random.split(key, 12)

    def n(k, shape, s=0.1):
        return (s * jax.random.normal(k, shape)).astype(jnp.float32)

    raw = dict(
        wq=n(ks[0], (NK, inp)),
        wk=n(ks[1], (key_dim, inp)),
        wv=n(ks[2], (key_dim, inp)),
        wo=n(ks[3], (inp, NK)),
        k_dw=n(ks[4], (inp, dw_kernel_size, dw_kernel_size), 0.2),
        v_dw=n(ks[5], (inp, dw_kernel_size, dw_kernel_size), 0.2),
        k_gamma=1.0 + n(ks[6], (inp,)),
        k_beta=n(ks[7], (inp,)),
        k_mean=n(ks[8], (inp,)),
        k_var=1.0 + jnp.abs(n(ks[9], (inp,))),
        v_gamma=1.0 + n(ks[10], (inp,)),
        v_beta=n(ks[11], (inp,)),
        v_mean=jnp.zeros((inp,), jnp.float32),
        v_var=jnp.ones((inp,), jnp.float32),
    )

    def fold(dw, gamma, beta, mean, var, w1x1):
        s = gamma / jnp.sqrt(var + eps)                               # (C,)
        w_ct = dw.reshape(inp, T) * s[:, None]                        # (C, T)
        # w_eff[kd, t*C + c] = w1x1[kd, c] * dw_bn[c, t]
        w_eff = (w1x1[:, None, :] * w_ct.T[None, :, :]).reshape(key_dim, T * inp)
        b_eff = (w1x1 @ (beta - mean * s)).reshape(key_dim, 1)
        return w_eff.astype(jnp.float32), b_eff.astype(jnp.float32)

    wk_eff, kb = fold(raw["k_dw"], raw["k_gamma"], raw["k_beta"],
                      raw["k_mean"], raw["k_var"], raw["wk"])
    wv_eff, vb = fold(raw["v_dw"], raw["v_gamma"], raw["v_beta"],
                      raw["v_mean"], raw["v_var"], raw["wv"])

    params = dict(
        wq_s=(raw["wq"] * (head_dim ** -0.5)).astype(jnp.float32),
        wk=raw["wk"], wv=raw["wv"], wo=raw["wo"],
        wk_eff=wk_eff, kb=kb, wv_eff=wv_eff, vb=vb)
    return params, raw


# ----------------------------------------------------------------------------
# Pure-JAX reference of the same forward (correctness check).
# ----------------------------------------------------------------------------
def mqa_reference(x, raw, *, num_heads, key_dim, kv_strides, dw_kernel_size, eps=1e-5):
    B, C, H, W = x.shape
    NK = num_heads * key_dim
    head_dim = key_dim // num_heads
    pad = (dw_kernel_size - 1) // 2

    q = jnp.einsum("oc,bchw->bohw", raw["wq"], x)
    q = q.reshape(B, num_heads, -1, key_dim)

    def dw_bn(xx, dw, gamma, beta, mean, var):
        w = dw[:, None, :, :]
        y = lax.conv_general_dilated(
            xx, w, window_strides=(kv_strides, kv_strides),
            padding=[(pad, pad), (pad, pad)],
            dimension_numbers=("NCHW", "OIHW", "NCHW"),
            feature_group_count=C)
        s = gamma / jnp.sqrt(var + eps)
        return y * s[None, :, None, None] + (beta - mean * s)[None, :, None, None]

    if kv_strides > 1:
        xk = dw_bn(x, raw["k_dw"], raw["k_gamma"], raw["k_beta"], raw["k_mean"], raw["k_var"])
        xv = dw_bn(x, raw["v_dw"], raw["v_gamma"], raw["v_beta"], raw["v_mean"], raw["v_var"])
    else:
        xk = xv = x
    k = jnp.einsum("oc,bchw->bohw", raw["wk"], xk).reshape(B, key_dim, -1)
    v = jnp.einsum("oc,bchw->bohw", raw["wv"], xv).reshape(B, -1, key_dim)

    attn = jnp.einsum("bnld,bds->bnls", q, k) / (head_dim ** 0.5)
    attn = jax.nn.softmax(attn, axis=-1)
    ctx = jnp.einsum("bnls,bsd->bnld", attn, v).reshape(B, NK, H, H)
    return jnp.einsum("oc,bchw->bohw", raw["wo"], ctx)


if __name__ == "__main__":
    # Small config consistent with the module's constraints (B = 1).
    inp, num_heads, key_dim = 8, 2, 16
    dw_kernel_size = 3
    B, H, W = 1, 16, 16

    key = jax.random.PRNGKey(0)
    kx, kp = jax.random.split(key)
    x = jax.random.normal(kx, (B, inp, H, W), dtype=jnp.float32)
    params, raw = init_params(kp, inp=inp, num_heads=num_heads,
                              key_dim=key_dim, dw_kernel_size=dw_kernel_size)

    def run(kv_strides, compute_dtype, exact):
        fwd = jax.jit(functools.partial(
            mqa_forward, num_heads=num_heads, key_dim=key_dim,
            kv_strides=kv_strides, dw_kernel_size=dw_kernel_size,
            compute_dtype=compute_dtype, exact_softmax=exact))
        return jax.block_until_ready(fwd(x, params))

    # kv_strides = 2 (depthwise-downsampled K/V), fp32 exact path.
    out2 = run(2, jnp.float32, True)
    ref2 = mqa_reference(x, raw, num_heads=num_heads, key_dim=key_dim,
                         kv_strides=2, dw_kernel_size=dw_kernel_size)
    assert out2.shape == (B, inp, H, W)
    err2 = float(jnp.max(jnp.abs(out2 - ref2)))
    assert jnp.allclose(out2, ref2, atol=5e-4, rtol=5e-4), err2

    # kv_strides = 1 (no K/V downsampling), fp32 exact path.
    out1 = run(1, jnp.float32, True)
    ref1 = mqa_reference(x, raw, num_heads=num_heads, key_dim=key_dim,
                         kv_strides=1, dw_kernel_size=dw_kernel_size)
    err1 = float(jnp.max(jnp.abs(out1 - ref1)))
    assert jnp.allclose(out1, ref1, atol=5e-4, rtol=5e-4), err1

    # Production mode: bf16 MXU operands + approx (EUP) softmax reciprocal.
    out2b = run(2, jnp.bfloat16, False)
    err2b = float(jnp.max(jnp.abs(out2b - ref2)))
    assert jnp.allclose(out2b, ref2, atol=3e-2, rtol=3e-2), err2b

    print("KERNEL_OK")
</pallas_src>

<mosaic_0001>
module attributes {stable_mosaic.version = 11 : i64} {
  func.func @_mqa_fused_kernel(%arg0: i32, %arg1: memref<32x8xf32, #tpu.memory_space<vmem>>, %arg2: memref<16x72xf32, #tpu.memory_space<vmem>>, %arg3: memref<16x1xf32, #tpu.memory_space<vmem>>, %arg4: memref<16x72xf32, #tpu.memory_space<vmem>>, %arg5: memref<16x1xf32, #tpu.memory_space<vmem>>, %arg6: memref<8x32xf32, #tpu.memory_space<vmem>>, %arg7: memref<1x8x256xf32, #tpu.memory_space<vmem>>, %arg8: memref<1x72x64xf32, #tpu.memory_space<vmem>>, %arg9: memref<1x72x64xf32, #tpu.memory_space<vmem>>, %arg10: memref<1x8x256xf32, #tpu.memory_space<vmem>>, %arg11: memref<32x256xf32, #tpu.memory_space<vmem>>, %arg12: memref<16x64xf32, #tpu.memory_space<vmem>>, %arg13: memref<512x16xf32, #tpu.memory_space<vmem>>, %arg14: memref<64x16xf32, #tpu.memory_space<vmem>>, %arg15: memref<512x16xf32, #tpu.memory_space<vmem>>) attributes {dimension_semantics = [#tpu.dimension_semantics<arbitrary>], iteration_bounds = array<i64: 1>, scalar_prefetch = 0 : i64, scratch_operands = 5 : i64, tpu.core_type = #tpu.core_type<tc>, window_params = [{pipeline_mode = #tpu.pipeline_mode<synchronous>, transform_indices = @transform_0, window_bounds = array<i64: 32, 8>}, {pipeline_mode = #tpu.pipeline_mode<synchronous>, transform_indices = @transform_1, window_bounds = array<i64: 16, 72>}, {pipeline_mode = #tpu.pipeline_mode<synchronous>, transform_indices = @transform_2, window_bounds = array<i64: 16, 1>}, {pipeline_mode = #tpu.pipeline_mode<synchronous>, transform_indices = @transform_3, window_bounds = array<i64: 16, 72>}, {pipeline_mode = #tpu.pipeline_mode<synchronous>, transform_indices = @transform_4, window_bounds = array<i64: 16, 1>}, {pipeline_mode = #tpu.pipeline_mode<synchronous>, transform_indices = @transform_5, window_bounds = array<i64: 8, 32>}, {transform_indices = @transform_6, window_bounds = array<i64: 1, 8, 256>}, {transform_indices = @transform_7, window_bounds = array<i64: 1, 72, 64>}, {transform_indices = @transform_8, window_bounds = array<i64: 1, 72, 64>}, {transform_indices = @transform_9, window_bounds = array<i64: 1, 8, 256>}]} {
    %c0 = arith.constant 0 : index
    %c0_0 = arith.constant 0 : index
    %0 = vector.load %arg1[%c0, %c0_0] : memref<32x8xf32, #tpu.memory_space<vmem>>, vector<32x8xf32>
    %c0_1 = arith.constant 0 : index
    %c0_2 = arith.constant 0 : index
    %c0_3 = arith.constant 0 : index
    %1 = vector.load %arg7[%c0_1, %c0_2, %c0_3] : memref<1x8x256xf32, #tpu.memory_space<vmem>>, vector<1x8x256xf32>
    %2 = vector.shape_cast %1 : vector<1x8x256xf32> to vector<8x256xf32>
    %cst = arith.constant dense<0.000000e+00> : vector<32x256xf32>
    %3 = tpu.matmul %0, %2, %cst {dimension_numbers = #tpu.dot_dimension_numbers<[1], [0], [0], [1], [0, 0, 1, 1], [], []>} : vector<32x8xf32>, vector<8x256xf32>, vector<32x256xf32> -> vector<32x256xf32>
    %c0_4 = arith.constant 0 : index
    %c0_5 = arith.constant 0 : index
    %4 = vector.load %arg11[%c0_4, %c0_5] : memref<32x256xf32, #tpu.memory_space<vmem>>, vector<32x256xf32>
    tpu.vector_store %arg11[%c0_4, %c0_5], %3 {strides = array<i32>} : memref<32x256xf32, #tpu.memory_space<vmem>>, vector<32x256xf32>,
    %c0_6 = arith.constant 0 : index
    %c0_7 = arith.constant 0 : index
    %5 = vector.load %arg2[%c0_6, %c0_7] : memref<16x72xf32, #tpu.memory_space<vmem>>, vector<16x72xf32>
    %c0_8 = arith.constant 0 : index
    %c0_9 = arith.constant 0 : index
    %c0_10 = arith.constant 0 : index
    %6 = vector.load %arg8[%c0_8, %c0_9, %c0_10] : memref<1x72x64xf32, #tpu.memory_space<vmem>>, vector<1x72x64xf32>
    %7 = vector.shape_cast %6 : vector<1x72x64xf32> to vector<72x64xf32>
    %cst_11 = arith.constant dense<0.000000e+00> : vector<16x64xf32>
    %8 = tpu.matmul %5, %7, %cst_11 {dimension_numbers = #tpu.dot_dimension_numbers<[1], [0], [0], [1], [0, 0, 1, 1], [], []>} : vector<16x72xf32>, vector<72x64xf32>, vector<16x64xf32> -> vector<16x64xf32>
    %c0_12 = arith.constant 0 : index
    %c0_13 = arith.constant 0 : index
    %9 = vector.load %arg3[%c0_12, %c0_13] : memref<16x1xf32, #tpu.memory_space<vmem>>, vector<16x1xf32>
    %10 = vector.broadcast %9 : vector<16x1xf32> to vector<16x64xf32>
    %11 = arith.addf %8, %10 : vector<16x64xf32>
    %c0_14 = arith.constant 0 : index
    %c0_15 = arith.constant 0 : index
    %12 = vector.load %arg4[%c0_14, %c0_15] : memref<16x72xf32, #tpu.memory_space<vmem>>, vector<16x72xf32>
    %c0_16 = arith.constant 0 : index
    %c0_17 = arith.constant 0 : index
    %c0_18 = arith.constant 0 : index
    %13 = vector.load %arg9[%c0_16, %c0_17, %c0_18] : memref<1x72x64xf32, #tpu.memory_space<vmem>>, vector<1x72x64xf32>
    %14 = vector.shape_cast %13 : vector<1x72x64xf32> to vector<72x64xf32>
    %cst_19 = arith.constant dense<0.000000e+00> : vector<16x64xf32>
    %15 = tpu.matmul %12, %14, %cst_19 {dimension_numbers = #tpu.dot_dimension_numbers<[1], [0], [0], [1], [0, 0, 1, 1], [], []>} : vector<16x72xf32>, vector<72x64xf32>, vector<16x64xf32> -> vector<16x64xf32>
    %c0_20 = arith.constant 0 : index
    %c0_21 = arith.constant 0 : index
    %16 = vector.load %arg5[%c0_20, %c0_21] : memref<16x1xf32, #tpu.memory_space<vmem>>, vector<16x1xf32>
    %17 = vector.broadcast %16 : vector<16x1xf32> to vector<16x64xf32>
    %18 = arith.addf %15, %17 : vector<16x64xf32>
    %c0_22 = arith.constant 0 : index
    %c0_23 = arith.constant 0 : index
    %19 = vector.load %arg12[%c0_22, %c0_23] : memref<16x64xf32, #tpu.memory_space<vmem>>, vector<16x64xf32>
    tpu.vector_store %arg12[%c0_22, %c0_23], %18 {strides = array<i32>} : memref<16x64xf32, #tpu.memory_space<vmem>>, vector<16x64xf32>,
    %c0_24 = arith.constant 0 : index
    %c0_25 = arith.constant 0 : index
    %20 = vector.load %arg11[%c0_24, %c0_25] : memref<32x256xf32, #tpu.memory_space<vmem>>, vector<32x16xf32>
    %c0_26 = arith.constant 0 : index
    %c0_27 = arith.constant 0 : index
    %21 = vector.load %arg13[%c0_26, %c0_27] : memref<512x16xf32, #tpu.memory_space<vmem>>, vector<32x16xf32>
    tpu.vector_store %arg13[%c0_26, %c0_27], %20 {strides = array<i32>} : memref<512x16xf32, #tpu.memory_space<vmem>>, vector<32x16xf32>,
    %c0_28 = arith.constant 0 : index
    %c16 = arith.constant 16 : index
    %22 = vector.load %arg11[%c0_28, %c16] : memref<32x256xf32, #tpu.memory_space<vmem>>, vector<32x16xf32>
    %c32 = arith.constant 32 : index
    %c0_29 = arith.constant 0 : index
    %23 = vector.load %arg13[%c32, %c0_29] : memref<512x16xf32, #tpu.memory_space<vmem>>, vector<32x16xf32>
    tpu.vector_store %arg13[%c32, %c0_29], %22 {strides = array<i32>} : memref<512x16xf32, #tpu.memory_space<vmem>>, vector<32x16xf32>,
    %c0_30 = arith.constant 0 : index
    %c32_31 = arith.constant 32 : index
    %24 = vector.load %arg11[%c0_30, %c32_31] : memref<32x256xf32, #tpu.memory_space<vmem>>, vector<32x16xf32>
    %c64 = arith.constant 64 : index
    %c0_32 = arith.constant 0 : index
    %25 = vector.load %arg13[%c64, %c0_32] : memref<512x16xf32, #tpu.memory_space<vmem>>, vector<32x16xf32>
    tpu.vector_store %arg13[%c64, %c0_32], %24 {strides = array<i32>} : memref<512x16xf32, #tpu.memory_space<vmem>>, vector<32x16xf32>,
    %c0_33 = arith.constant 0 : index
    %c48 = arith.constant 48 : index
    %26 = vector.load %arg11[%c0_33, %c48] : memref<32x256xf32, #tpu.memory_space<vmem>>, vector<32x16xf32>
    %c96 = arith.constant 96 : index
    %c0_34 = arith.constant 0 : index
    %27 = vector.load %arg13[%c96, %c0_34] : memref<512x16xf32, #tpu.memory_space<vmem>>, vector<32x16xf32>
    tpu.vector_store %arg13[%c96, %c0_34], %26 {strides = array<i32>} : memref<512x16xf32, #tpu.memory_space<vmem>>, vector<32x16xf32>,
    %c0_35 = arith.constant 0 : index
    %c64_36 = arith.constant 64 : index
    %28 = vector.load %arg11[%c0_35, %c64_36] : memref<32x256xf32, #tpu.memory_space<vmem>>, vector<32x16xf32>
    %c128 = arith.constant 128 : index
    %c0_37 = arith.constant 0 : index
    %29 = vector.load %arg13[%c128, %c0_37] : memref<512x16xf32, #tpu.memory_space<vmem>>, vector<32x16xf32>
    tpu.vector_store %arg13[%c128, %c0_37], %28 {strides = array<i32>} : memref<512x16xf32, #tpu.memory_space<vmem>>, vector<32x16xf32>,
    %c0_38 = arith.constant 0 : index
    %c80 = arith.constant 80 : index
    %30 = vector.load %arg11[%c0_38, %c80] : memref<32x256xf32, #tpu.memory_space<vmem>>, vector<32x16xf32>
    %c160 = arith.constant 160 : index
    %c0_39 = arith.constant 0 : index
    %31 = vector.load %arg13[%c160, %c0_39] : memref<512x16xf32, #tpu.memory_space<vmem>>, vector<32x16xf32>
    tpu.vector_store %arg13[%c160, %c0_39], %30 {strides = array<i32>} : memref<512x16xf32, #tpu.memory_space<vmem>>, vector<32x16xf32>,
    %c0_40 = arith.constant 0 : index
    %c96_41 = arith.constant 96 : index
    %32 = vector.load %arg11[%c0_40, %c96_41] : memref<32x256xf32, #tpu.memory_space<vmem>>, vector<32x16xf32>
    %c192 = arith.constant 192 : index
    %c0_42 = arith.constant 0 : index
    %33 = vector.load %arg13[%c192, %c0_42] : memref<512x16xf32, #tpu.memory_space<vmem>>, vector<32x16xf32>
    tpu.vector_store %arg13[%c192, %c0_42], %32 {strides = array<i32>} : memref<512x16xf32, #tpu.memory_space<vmem>>, vector<32x16xf32>,
    %c0_43 = arith.constant 0 : index
    %c112 = arith.constant 112 : index
    %34 = vector.load %arg11[%c0_43, %c112] : memref<32x256xf32, #tpu.memory_space<vmem>>, vector<32x16xf32>
    %c224 = arith.constant 224 : index
    %c0_44 = arith.constant 0 : index
    %35 = vector.load %arg13[%c224, %c0_44] : memref<512x16xf32, #tpu.memory_space<vmem>>, vector<32x16xf32>
    tpu.vector_store %arg13[%c224, %c0_44], %34 {strides = array<i32>} : memref<512x16xf32, #tpu.memory_space<vmem>>, vector<32x16xf32>,
    %c0_45 = arith.constant 0 : index
    %c128_46 = arith.constant 128 : index
    %36 = vector.load %arg11[%c0_45, %c128_46] : memref<32x256xf32, #tpu.memory_space<vmem>>, vector<32x16xf32>
    %c256 = arith.constant 256 : index
    %c0_47 = arith.constant 0 : index
    %37 = vector.load %arg13[%c256, %c0_47] : memref<512x16xf32, #tpu.memory_space<vmem>>, vector<32x16xf32>
    tpu.vector_store %arg13[%c256, %c0_47], %36 {strides = array<i32>} : memref<512x16xf32, #tpu.memory_space<vmem>>, vector<32x16xf32>,
    %c0_48 = arith.constant 0 : index
    %c144 = arith.constant 144 : index
    %38 = vector.load %arg11[%c0_48, %c144] : memref<32x256xf32, #tpu.memory_space<vmem>>, vector<32x16xf32>
    %c288 = arith.constant 288 : index
    %c0_49 = arith.constant 0 : index
    %39 = vector.load %arg13[%c288, %c0_49] : memref<512x16xf32, #tpu.memory_space<vmem>>, vector<32x16xf32>
    tpu.vector_store %arg13[%c288, %c0_49], %38 {strides = array<i32>} : memref<512x16xf32, #tpu.memory_space<vmem>>, vector<32x16xf32>,
    %c0_50 = arith.constant 0 : index
    %c160_51 = arith.constant 160 : index
    %40 = vector.load %arg11[%c0_50, %c160_51] : memref<32x256xf32, #tpu.memory_space<vmem>>, vector<32x16xf32>
    %c320 = arith.constant 320 : index
    %c0_52 = arith.constant 0 : index
    %41 = vector.load %arg13[%c320, %c0_52] : memref<512x16xf32, #tpu.memory_space<vmem>>, vector<32x16xf32>
    tpu.vector_store %arg13[%c320, %c0_52], %40 {strides = array<i32>} : memref<512x16xf32, #tpu.memory_space<vmem>>, vector<32x16xf32>,
    %c0_53 = arith.constant 0 : index
    %c176 = arith.constant 176 : index
    %42 = vector.load %arg11[%c0_53, %c176] : memref<32x256xf32, #tpu.memory_space<vmem>>, vector<32x16xf32>
    %c352 = arith.constant 352 : index
    %c0_54 = arith.constant 0 : index
    %43 = vector.load %arg13[%c352, %c0_54] : memref<512x16xf32, #tpu.memory_space<vmem>>, vector<32x16xf32>
    tpu.vector_store %arg13[%c352, %c0_54], %42 {strides = array<i32>} : memref<512x16xf32, #tpu.memory_space<vmem>>, vector<32x16xf32>,
    %c0_55 = arith.constant 0 : index
    %c192_56 = arith.constant 192 : index
    %44 = vector.load %arg11[%c0_55, %c192_56] : memref<32x256xf32, #tpu.memory_space<vmem>>, vector<32x16xf32>
    %c384 = arith.constant 384 : index
    %c0_57 = arith.constant 0 : index
    %45 = vector.load %arg13[%c384, %c0_57] : memref<512x16xf32, #tpu.memory_space<vmem>>, vector<32x16xf32>
    tpu.vector_store %arg13[%c384, %c0_57], %44 {strides = array<i32>} : memref<512x16xf32, #tpu.memory_space<vmem>>, vector<32x16xf32>,
    %c0_58 = arith.constant 0 : index
    %c208 = arith.constant 208 : index
    %46 = vector.load %arg11[%c0_58, %c208] : memref<32x256xf32, #tpu.memory_space<vmem>>, vector<32x16xf32>
    %c416 = arith.constant 416 : index
    %c0_59 = arith.constant 0 : index
    %47 = vector.load %arg13[%c416, %c0_59] : memref<512x16xf32, #tpu.memory_space<vmem>>, vector<32x16xf32>
    tpu.vector_store %arg13[%c416, %c0_59], %46 {strides = array<i32>} : memref<512x16xf32, #tpu.memory_space<vmem>>, vector<32x16xf32>,
    %c0_60 = arith.constant 0 : index
    %c224_61 = arith.constant 224 : index
    %48 = vector.load %arg11[%c0_60, %c224_61] : memref<32x256xf32, #tpu.memory_space<vmem>>, vector<32x16xf32>
    %c448 = arith.constant 448 : index
    %c0_62 = arith.constant 0 : index
    %49 = vector.load %arg13[%c448, %c0_62] : memref<512x16xf32, #tpu.memory_space<vmem>>, vector<32x16xf32>
    tpu.vector_store %arg13[%c448, %c0_62], %48 {strides = array<i32>} : memref<512x16xf32, #tpu.memory_space<vmem>>, vector<32x16xf32>,
    %c0_63 = arith.constant 0 : index
    %c240 = arith.constant 240 : index
    %50 = vector.load %arg11[%c0_63, %c240] : memref<32x256xf32, #tpu.memory_space<vmem>>, vector<32x16xf32>
    %c480 = arith.constant 480 : index
    %c0_64 = arith.constant 0 : index
    %51 = vector.load %arg13[%c480, %c0_64] : memref<512x16xf32, #tpu.memory_space<vmem>>, vector<32x16xf32>
    tpu.vector_store %arg13[%c480, %c0_64], %50 {strides = array<i32>} : memref<512x16xf32, #tpu.memory_space<vmem>>, vector<32x16xf32>,
    %c0_65 = arith.constant 0 : index
    %c0_66 = arith.constant 0 : index
    %52 = vector.load %arg12[%c0_65, %c0_66] : memref<16x64xf32, #tpu.memory_space<vmem>>, vector<16x16xf32>
    %c0_67 = arith.constant 0 : index
    %c0_68 = arith.constant 0 : index
    %53 = vector.load %arg14[%c0_67, %c0_68] : memref<64x16xf32, #tpu.memory_space<vmem>>, vector<16x16xf32>
    tpu.vector_store %arg14[%c0_67, %c0_68], %52 {strides = array<i32>} : memref<64x16xf32, #tpu.memory_space<vmem>>, vector<16x16xf32>,
    %c0_69 = arith.constant 0 : index
    %c16_70 = arith.constant 16 : index
    %54 = vector.load %arg12[%c0_69, %c16_70] : memref<16x64xf32, #tpu.memory_space<vmem>>, vector<16x16xf32>
    %c16_71 = arith.constant 16 : index
    %c0_72 = arith.constant 0 : index
    %55 = vector.load %arg14[%c16_71, %c0_72] : memref<64x16xf32, #tpu.memory_space<vmem>>, vector<16x16xf32>
    tpu.vector_store %arg14[%c16_71, %c0_72], %54 {strides = array<i32>} : memref<64x16xf32, #tpu.memory_space<vmem>>, vector<16x16xf32>,
    %c0_73 = arith.constant 0 : index
    %c32_74 = arith.constant 32 : index
    %56 = vector.load %arg12[%c0_73, %c32_74] : memref<16x64xf32, #tpu.memory_space<vmem>>, vector<16x16xf32>
    %c32_75 = arith.constant 32 : index
    %c0_76 = arith.constant 0 : index
    %57 = vector.load %arg14[%c32_75, %c0_76] : memref<64x16xf32, #tpu.memory_space<vmem>>, vector<16x16xf32>
    tpu.vector_store %arg14[%c32_75, %c0_76], %56 {strides = array<i32>} : memref<64x16xf32, #tpu.memory_space<vmem>>, vector<16x16xf32>,
    %c0_77 = arith.constant 0 : index
    %c48_78 = arith.constant 48 : index
    %58 = vector.load %arg12[%c0_77, %c48_78] : memref<16x64xf32, #tpu.memory_space<vmem>>, vector<16x16xf32>
    %c48_79 = arith.constant 48 : index
    %c0_80 = arith.constant 0 : index
    %59 = vector.load %arg14[%c48_79, %c0_80] : memref<64x16xf32, #tpu.memory_space<vmem>>, vector<16x16xf32>
    tpu.vector_store %arg14[%c48_79, %c0_80], %58 {strides = array<i32>} : memref<64x16xf32, #tpu.memory_space<vmem>>, vector<16x16xf32>,
    %c0_81 = arith.constant 0 : index
    %c0_82 = arith.constant 0 : index
    %60 = vector.load %arg13[%c0_81, %c0_82] : memref<512x16xf32, #tpu.memory_space<vmem>>, vector<512x16xf32>
    %cst_83 = arith.constant dense<0.000000e+00> : vector<512x64xf32>
    %61 = tpu.matmul %60, %11, %cst_83 {dimension_numbers = #tpu.dot_dimension_numbers<[1], [0], [0], [1], [0, 0, 1, 1], [], []>} : vector<512x16xf32>, vector<16x64xf32>, vector<512x64xf32> -> vector<512x64xf32>
    %cst_84 = arith.constant dense<0xFF800000> : vector<512xf32>
    %62 = vector.multi_reduction <maximumf>, %61, %cst_84 [1] : vector<512x64xf32> to vector<512xf32>
    %63 = vector.shape_cast %62 : vector<512xf32> to vector<512x1xf32>
    %64 = vector.broadcast %63 : vector<512x1xf32> to vector<512x64xf32>
    %65 = arith.subf %61, %64 : vector<512x64xf32>
    %66 = math.exp %65 : vector<512x64xf32>
    %cst_85 = arith.constant dense<0.000000e+00> : vector<512xf32>
    %67 = vector.multi_reduction <add>, %66, %cst_85 [1] : vector<512x64xf32> to vector<512xf32>
    %68 = vector.shape_cast %67 : vector<512xf32> to vector<512x1xf32>
    %69 = tpu.reciprocal %68 : vector<512x1xf32> -> vector<512x1xf32>
    %70 = vector.broadcast %69 : vector<512x1xf32> to vector<512x64xf32>
    %71 = arith.mulf %66, %70 : vector<512x64xf32>
    %c0_86 = arith.constant 0 : index
    %c0_87 = arith.constant 0 : index
    %72 = vector.load %arg14[%c0_86, %c0_87] : memref<64x16xf32, #tpu.memory_space<vmem>>, vector<64x16xf32>
    %cst_88 = arith.constant dense<0.000000e+00> : vector<512x16xf32>
    %73 = tpu.matmul %71, %72, %cst_88 {dimension_numbers = #tpu.dot_dimension_numbers<[1], [0], [0], [1], [0, 0, 1, 1], [], []>} : vector<512x64xf32>, vector<64x16xf32>, vector<512x16xf32> -> vector<512x16xf32>
    %c0_89 = arith.constant 0 : index
    %c0_90 = arith.constant 0 : index
    %74 = vector.load %arg15[%c0_89, %c0_90] : memref<512x16xf32, #tpu.memory_space<vmem>>, vector<512x16xf32>
    tpu.vector_store %arg15[%c0_89, %c0_90], %73 {strides = array<i32>} : memref<512x16xf32, #tpu.memory_space<vmem>>, vector<512x16xf32>,
    %c0_91 = arith.constant 0 : index
    %c0_92 = arith.constant 0 : index
    %75 = vector.load %arg6[%c0_91, %c0_92] : memref<8x32xf32, #tpu.memory_space<vmem>>, vector<8x32xf32>
    %c0_93 = arith.constant 0 : index
    %c0_94 = arith.constant 0 : index
    %76 = vector.load %arg15[%c0_93, %c0_94] : memref<512x16xf32, #tpu.memory_space<vmem>>, vector<32x16xf32>
    %cst_95 = arith.constant dense<0.000000e+00> : vector<8x16xf32>
    %77 = tpu.matmul %75, %76, %cst_95 {dimension_numbers = #tpu.dot_dimension_numbers<[1], [0], [0], [1], [0, 0, 1, 1], [], []>} : vector<8x32xf32>, vector<32x16xf32>, vector<8x16xf32> -> vector<8x16xf32>
    %c0_96 = arith.constant 0 : index
    %c0_97 = arith.constant 0 : index
    %c0_98 = arith.constant 0 : index
    %78 = vector.load %arg10[%c0_96, %c0_97, %c0_98] : memref<1x8x256xf32, #tpu.memory_space<vmem>>, vector<1x8x16xf32>
    %79 = vector.shape_cast %78 : vector<1x8x16xf32> to vector<8x16xf32>
    %80 = vector.shape_cast %77 : vector<8x16xf32> to vector<1x8x16xf32>
    tpu.vector_store %arg10[%c0_96, %c0_97, %c0_98], %80 {strides = array<i32>} : memref<1x8x256xf32, #tpu.memory_space<vmem>>, vector<1x8x16xf32>,
    %c32_99 = arith.constant 32 : index
    %c0_100 = arith.constant 0 : index
    %81 = vector.load %arg15[%c32_99, %c0_100] : memref<512x16xf32, #tpu.memory_space<vmem>>, vector<32x16xf32>
    %cst_101 = arith.constant dense<0.000000e+00> : vector<8x16xf32>
    %82 = tpu.matmul %75, %81, %cst_101 {dimension_numbers = #tpu.dot_dimension_numbers<[1], [0], [0], [1], [0, 0, 1, 1], [], []>} : vector<8x32xf32>, vector<32x16xf32>, vector<8x16xf32> -> vector<8x16xf32>
    %c0_102 = arith.constant 0 : index
    %c0_103 = arith.constant 0 : index
    %c16_104 = arith.constant 16 : index
    %83 = vector.load %arg10[%c0_102, %c0_103, %c16_104] : memref<1x8x256xf32, #tpu.memory_space<vmem>>, vector<1x8x16xf32>
    %84 = vector.shape_cast %83 : vector<1x8x16xf32> to vector<8x16xf32>
    %85 = vector.shape_cast %82 : vector<8x16xf32> to vector<1x8x16xf32>
    tpu.vector_store %arg10[%c0_102, %c0_103, %c16_104], %85 {strides = array<i32>} : memref<1x8x256xf32, #tpu.memory_space<vmem>>, vector<1x8x16xf32>,
    %c64_105 = arith.constant 64 : index
    %c0_106 = arith.constant 0 : index
    %86 = vector.load %arg15[%c64_105, %c0_106] : memref<512x16xf32, #tpu.memory_space<vmem>>, vector<32x16xf32>
    %cst_107 = arith.constant dense<0.000000e+00> : vector<8x16xf32>
    %87 = tpu.matmul %75, %86, %cst_107 {dimension_numbers = #tpu.dot_dimension_numbers<[1], [0], [0], [1], [0, 0, 1, 1], [], []>} : vector<8x32xf32>, vector<32x16xf32>, vector<8x16xf32> -> vector<8x16xf32>
    %c0_108 = arith.constant 0 : index
    %c0_109 = arith.constant 0 : index
    %c32_110 = arith.constant 32 : index
    %88 = vector.load %arg10[%c0_108, %c0_109, %c32_110] : memref<1x8x256xf32, #tpu.memory_space<vmem>>, vector<1x8x16xf32>
    %89 = vector.shape_cast %88 : vector<1x8x16xf32> to vector<8x16xf32>
    %90 = vector.shape_cast %87 : vector<8x16xf32> to vector<1x8x16xf32>
    tpu.vector_store %arg10[%c0_108, %c0_109, %c32_110], %90 {strides = array<i32>} : memref<1x8x256xf32, #tpu.memory_space<vmem>>, vector<1x8x16xf32>,
    %c96_111 = arith.constant 96 : index
    %c0_112 = arith.constant 0 : index
    %91 = vector.load %arg15[%c96_111, %c0_112] : memref<512x16xf32, #tpu.memory_space<vmem>>, vector<32x16xf32>
    %cst_113 = arith.constant dense<0.000000e+00> : vector<8x16xf32>
    %92 = tpu.matmul %75, %91, %cst_113 {dimension_numbers = #tpu.dot_dimension_numbers<[1], [0], [0], [1], [0, 0, 1, 1], [], []>} : vector<8x32xf32>, vector<32x16xf32>, vector<8x16xf32> -> vector<8x16xf32>
    %c0_114 = arith.constant 0 : index
    %c0_115 = arith.constant 0 : index
    %c48_116 = arith.constant 48 : index
    %93 = vector.load %arg10[%c0_114, %c0_115, %c48_116] : memref<1x8x256xf32, #tpu.memory_space<vmem>>, vector<1x8x16xf32>
    %94 = vector.shape_cast %93 : vector<1x8x16xf32> to vector<8x16xf32>
    %95 = vector.shape_cast %92 : vector<8x16xf32> to vector<1x8x16xf32>
    tpu.vector_store %arg10[%c0_114, %c0_115, %c48_116], %95 {strides = array<i32>} : memref<1x8x256xf32, #tpu.memory_space<vmem>>, vector<1x8x16xf32>,
    %c128_117 = arith.constant 128 : index
    %c0_118 = arith.constant 0 : index
    %96 = vector.load %arg15[%c128_117, %c0_118] : memref<512x16xf32, #tpu.memory_space<vmem>>, vector<32x16xf32>
    %cst_119 = arith.constant dense<0.000000e+00> : vector<8x16xf32>
    %97 = tpu.matmul %75, %96, %cst_119 {dimension_numbers = #tpu.dot_dimension_numbers<[1], [0], [0], [1], [0, 0, 1, 1], [], []>} : vector<8x32xf32>, vector<32x16xf32>, vector<8x16xf32> -> vector<8x16xf32>
    %c0_120 = arith.constant 0 : index
    %c0_121 = arith.constant 0 : index
    %c64_122 = arith.constant 64 : index
    %98 = vector.load %arg10[%c0_120, %c0_121, %c64_122] : memref<1x8x256xf32, #tpu.memory_space<vmem>>, vector<1x8x16xf32>
    %99 = vector.shape_cast %98 : vector<1x8x16xf32> to vector<8x16xf32>
    %100 = vector.shape_cast %97 : vector<8x16xf32> to vector<1x8x16xf32>
    tpu.vector_store %arg10[%c0_120, %c0_121, %c64_122], %100 {strides = array<i32>} : memref<1x8x256xf32, #tpu.memory_space<vmem>>, vector<1x8x16xf32>,
    %c160_123 = arith.constant 160 : index
    %c0_124 = arith.constant 0 : index
    %101 = vector.load %arg15[%c160_123, %c0_124] : memref<512x16xf32, #tpu.memory_space<vmem>>, vector<32x16xf32>
    %cst_125 = arith.constant dense<0.000000e+00> : vector<8x16xf32>
    %102 = tpu.matmul %75, %101, %cst_125 {dimension_numbers = #tpu.dot_dimension_numbers<[1], [0], [0], [1], [0, 0, 1, 1], [], []>} : vector<8x32xf32>, vector<32x16xf32>, vector<8x16xf32> -> vector<8x16xf32>
    %c0_126 = arith.constant 0 : index
    %c0_127 = arith.constant 0 : index
    %c80_128 = arith.constant 80 : index
    %103 = vector.load %arg10[%c0_126, %c0_127, %c80_128] : memref<1x8x256xf32, #tpu.memory_space<vmem>>, vector<1x8x16xf32>
    %104 = vector.shape_cast %103 : vector<1x8x16xf32> to vector<8x16xf32>
    %105 = vector.shape_cast %102 : vector<8x16xf32> to vector<1x8x16xf32>
    tpu.vector_store %arg10[%c0_126, %c0_127, %c80_128], %105 {strides = array<i32>} : memref<1x8x256xf32, #tpu.memory_space<vmem>>, vector<1x8x16xf32>,
    %c192_129 = arith.constant 192 : index
    %c0_130 = arith.constant 0 : index
    %106 = vector.load %arg15[%c192_129, %c0_130] : memref<512x16xf32, #tpu.memory_space<vmem>>, vector<32x16xf32>
    %cst_131 = arith.constant dense<0.000000e+00> : vector<8x16xf32>
    %107 = tpu.matmul %75, %106, %cst_131 {dimension_numbers = #tpu.dot_dimension_numbers<[1], [0], [0], [1], [0, 0, 1, 1], [], []>} : vector<8x32xf32>, vector<32x16xf32>, vector<8x16xf32> -> vector<8x16xf32>
    %c0_132 = arith.constant 0 : index
    %c0_133 = arith.constant 0 : index
    %c96_134 = arith.constant 96 : index
    %108 = vector.load %arg10[%c0_132, %c0_133, %c96_134] : memref<1x8x256xf32, #tpu.memory_space<vmem>>, vector<1x8x16xf32>
    %109 = vector.shape_cast %108 : vector<1x8x16xf32> to vector<8x16xf32>
    %110 = vector.shape_cast %107 : vector<8x16xf32> to vector<1x8x16xf32>
    tpu.vector_store %arg10[%c0_132, %c0_133, %c96_134], %110 {strides = array<i32>} : memref<1x8x256xf32, #tpu.memory_space<vmem>>, vector<1x8x16xf32>,
    %c224_135 = arith.constant 224 : index
    %c0_136 = arith.constant 0 : index
    %111 = vector.load %arg15[%c224_135, %c0_136] : memref<512x16xf32, #tpu.memory_space<vmem>>, vector<32x16xf32>
    %cst_137 = arith.constant dense<0.000000e+00> : vector<8x16xf32>
    %112 = tpu.matmul %75, %111, %cst_137 {dimension_numbers = #tpu.dot_dimension_numbers<[1], [0], [0], [1], [0, 0, 1, 1], [], []>} : vector<8x32xf32>, vector<32x16xf32>, vector<8x16xf32> -> vector<8x16xf32>
    %c0_138 = arith.constant 0 : index
    %c0_139 = arith.constant 0 : index
    %c112_140 = arith.constant 112 : index
    %113 = vector.load %arg10[%c0_138, %c0_139, %c112_140] : memref<1x8x256xf32, #tpu.memory_space<vmem>>, vector<1x8x16xf32>
    %114 = vector.shape_cast %113 : vector<1x8x16xf32> to vector<8x16xf32>
    %115 = vector.shape_cast %112 : vector<8x16xf32> to vector<1x8x16xf32>
    tpu.vector_store %arg10[%c0_138, %c0_139, %c112_140], %115 {strides = array<i32>} : memref<1x8x256xf32, #tpu.memory_space<vmem>>, vector<1x8x16xf32>,
    %c256_141 = arith.constant 256 : index
    %c0_142 = arith.constant 0 : index
    %116 = vector.load %arg15[%c256_141, %c0_142] : memref<512x16xf32, #tpu.memory_space<vmem>>, vector<32x16xf32>
    %cst_143 = arith.constant dense<0.000000e+00> : vector<8x16xf32>
    %117 = tpu.matmul %75, %116, %cst_143 {dimension_numbers = #tpu.dot_dimension_numbers<[1], [0], [0], [1], [0, 0, 1, 1], [], []>} : vector<8x32xf32>, vector<32x16xf32>, vector<8x16xf32> -> vector<8x16xf32>
    %c0_144 = arith.constant 0 : index
    %c0_145 = arith.constant 0 : index
    %c128_146 = arith.constant 128 : index
    %118 = vector.load %arg10[%c0_144, %c0_145, %c128_146] : memref<1x8x256xf32, #tpu.memory_space<vmem>>, vector<1x8x16xf32>
    %119 = vector.shape_cast %118 : vector<1x8x16xf32> to vector<8x16xf32>
    %120 = vector.shape_cast %117 : vector<8x16xf32> to vector<1x8x16xf32>
    tpu.vector_store %arg10[%c0_144, %c0_145, %c128_146], %120 {strides = array<i32>} : memref<1x8x256xf32, #tpu.memory_space<vmem>>, vector<1x8x16xf32>,
    %c288_147 = arith.constant 288 : index
    %c0_148 = arith.constant 0 : index
    %121 = vector.load %arg15[%c288_147, %c0_148] : memref<512x16xf32, #tpu.memory_space<vmem>>, vector<32x16xf32>
    %cst_149 = arith.constant dense<0.000000e+00> : vector<8x16xf32>
    %122 = tpu.matmul %75, %121, %cst_149 {dimension_numbers = #tpu.dot_dimension_numbers<[1], [0], [0], [1], [0, 0, 1, 1], [], []>} : vector<8x32xf32>, vector<32x16xf32>, vector<8x16xf32> -> vector<8x16xf32>
    %c0_150 = arith.constant 0 : index
    %c0_151 = arith.constant 0 : index
    %c144_152 = arith.constant 144 : index
    %123 = vector.load %arg10[%c0_150, %c0_151, %c144_152] : memref<1x8x256xf32, #tpu.memory_space<vmem>>, vector<1x8x16xf32>
    %124 = vector.shape_cast %123 : vector<1x8x16xf32> to vector<8x16xf32>
    %125 = vector.shape_cast %122 : vector<8x16xf32> to vector<1x8x16xf32>
    tpu.vector_store %arg10[%c0_150, %c0_151, %c144_152], %125 {strides = array<i32>} : memref<1x8x256xf32, #tpu.memory_space<vmem>>, vector<1x8x16xf32>,
    %c320_153 = arith.constant 320 : index
    %c0_154 = arith.constant 0 : index
    %126 = vector.load %arg15[%c320_153, %c0_154] : memref<512x16xf32, #tpu.memory_space<vmem>>, vector<32x16xf32>
    %cst_155 = arith.constant dense<0.000000e+00> : vector<8x16xf32>
    %127 = tpu.matmul %75, %126, %cst_155 {dimension_numbers = #tpu.dot_dimension_numbers<[1], [0], [0], [1], [0, 0, 1, 1], [], []>} : vector<8x32xf32>, vector<32x16xf32>, vector<8x16xf32> -> vector<8x16xf32>
    %c0_156 = arith.constant 0 : index
    %c0_157 = arith.constant 0 : index
    %c160_158 = arith.constant 160 : index
    %128 = vector.load %arg10[%c0_156, %c0_157, %c160_158] : memref<1x8x256xf32, #tpu.memory_space<vmem>>, vector<1x8x16xf32>
    %129 = vector.shape_cast %128 : vector<1x8x16xf32> to vector<8x16xf32>
    %130 = vector.shape_cast %127 : vector<8x16xf32> to vector<1x8x16xf32>
    tpu.vector_store %arg10[%c0_156, %c0_157, %c160_158], %130 {strides = array<i32>} : memref<1x8x256xf32, #tpu.memory_space<vmem>>, vector<1x8x16xf32>,
    %c352_159 = arith.constant 352 : index
    %c0_160 = arith.constant 0 : index
    %131 = vector.load %arg15[%c352_159, %c0_160] : memref<512x16xf32, #tpu.memory_space<vmem>>, vector<32x16xf32>
    %cst_161 = arith.constant dense<0.000000e+00> : vector<8x16xf32>
    %132 = tpu.matmul %75, %131, %cst_161 {dimension_numbers = #tpu.dot_dimension_numbers<[1], [0], [0], [1], [0, 0, 1, 1], [], []>} : vector<8x32xf32>, vector<32x16xf32>, vector<8x16xf32> -> vector<8x16xf32>
    %c0_162 = arith.constant 0 : index
    %c0_163 = arith.constant 0 : index
    %c176_164 = arith.constant 176 : index
    %133 = vector.load %arg10[%c0_162, %c0_163, %c176_164] : memref<1x8x256xf32, #tpu.memory_space<vmem>>, vector<1x8x16xf32>
    %134 = vector.shape_cast %133 : vector<1x8x16xf32> to vector<8x16xf32>
    %135 = vector.shape_cast %132 : vector<8x16xf32> to vector<1x8x16xf32>
    tpu.vector_store %arg10[%c0_162, %c0_163, %c176_164], %135 {strides = array<i32>} : memref<1x8x256xf32, #tpu.memory_space<vmem>>, vector<1x8x16xf32>,
    %c384_165 = arith.constant 384 : index
    %c0_166 = arith.constant 0 : index
    %136 = vector.load %arg15[%c384_165, %c0_166] : memref<512x16xf32, #tpu.memory_space<vmem>>, vector<32x16xf32>
    %cst_167 = arith.constant dense<0.000000e+00> : vector<8x16xf32>
    %137 = tpu.matmul %75, %136, %cst_167 {dimension_numbers = #tpu.dot_dimension_numbers<[1], [0], [0], [1], [0, 0, 1, 1], [], []>} : vector<8x32xf32>, vector<32x16xf32>, vector<8x16xf32> -> vector<8x16xf32>
    %c0_168 = arith.constant 0 : index
    %c0_169 = arith.constant 0 : index
    %c192_170 = arith.constant 192 : index
    %138 = vector.load %arg10[%c0_168, %c0_169, %c192_170] : memref<1x8x256xf32, #tpu.memory_space<vmem>>, vector<1x8x16xf32>
    %139 = vector.shape_cast %138 : vector<1x8x16xf32> to vector<8x16xf32>
    %140 = vector.shape_cast %137 : vector<8x16xf32> to vector<1x8x16xf32>
    tpu.vector_store %arg10[%c0_168, %c0_169, %c192_170], %140 {strides = array<i32>} : memref<1x8x256xf32, #tpu.memory_space<vmem>>, vector<1x8x16xf32>,
    %c416_171 = arith.constant 416 : index
    %c0_172 = arith.constant 0 : index
    %141 = vector.load %arg15[%c416_171, %c0_172] : memref<512x16xf32, #tpu.memory_space<vmem>>, vector<32x16xf32>
    %cst_173 = arith.constant dense<0.000000e+00> : vector<8x16xf32>
    %142 = tpu.matmul %75, %141, %cst_173 {dimension_numbers = #tpu.dot_dimension_numbers<[1], [0], [0], [1], [0, 0, 1, 1], [], []>} : vector<8x32xf32>, vector<32x16xf32>, vector<8x16xf32> -> vector<8x16xf32>
    %c0_174 = arith.constant 0 : index
    %c0_175 = arith.constant 0 : index
    %c208_176 = arith.constant 208 : index
    %143 = vector.load %arg10[%c0_174, %c0_175, %c208_176] : memref<1x8x256xf32, #tpu.memory_space<vmem>>, vector<1x8x16xf32>
    %144 = vector.shape_cast %143 : vector<1x8x16xf32> to vector<8x16xf32>
    %145 = vector.shape_cast %142 : vector<8x16xf32> to vector<1x8x16xf32>
    tpu.vector_store %arg10[%c0_174, %c0_175, %c208_176], %145 {strides = array<i32>} : memref<1x8x256xf32, #tpu.memory_space<vmem>>, vector<1x8x16xf32>,
    %c448_177 = arith.constant 448 : index
    %c0_178 = arith.constant 0 : index
    %146 = vector.load %arg15[%c448_177, %c0_178] : memref<512x16xf32, #tpu.memory_space<vmem>>, vector<32x16xf32>
    %cst_179 = arith.constant dense<0.000000e+00> : vector<8x16xf32>
    %147 = tpu.matmul %75, %146, %cst_179 {dimension_numbers = #tpu.dot_dimension_numbers<[1], [0], [0], [1], [0, 0, 1, 1], [], []>} : vector<8x32xf32>, vector<32x16xf32>, vector<8x16xf32> -> vector<8x16xf32>
    %c0_180 = arith.constant 0 : index
    %c0_181 = arith.constant 0 : index
    %c224_182 = arith.constant 224 : index
    %148 = vector.load %arg10[%c0_180, %c0_181, %c224_182] : memref<1x8x256xf32, #tpu.memory_space<vmem>>, vector<1x8x16xf32>
    %149 = vector.shape_cast %148 : vector<1x8x16xf32> to vector<8x16xf32>
    %150 = vector.shape_cast %147 : vector<8x16xf32> to vector<1x8x16xf32>
    tpu.vector_store %arg10[%c0_180, %c0_181, %c224_182], %150 {strides = array<i32>} : memref<1x8x256xf32, #tpu.memory_space<vmem>>, vector<1x8x16xf32>,
    %c480_183 = arith.constant 480 : index
    %c0_184 = arith.constant 0 : index
    %151 = vector.load %arg15[%c480_183, %c0_184] : memref<512x16xf32, #tpu.memory_space<vmem>>, vector<32x16xf32>
    %cst_185 = arith.constant dense<0.000000e+00> : vector<8x16xf32>
    %152 = tpu.matmul %75, %151, %cst_185 {dimension_numbers = #tpu.dot_dimension_numbers<[1], [0], [0], [1], [0, 0, 1, 1], [], []>} : vector<8x32xf32>, vector<32x16xf32>, vector<8x16xf32> -> vector<8x16xf32>
    %c0_186 = arith.constant 0 : index
    %c0_187 = arith.constant 0 : index
    %c240_188 = arith.constant 240 : index
    %153 = vector.load %arg10[%c0_186, %c0_187, %c240_188] : memref<1x8x256xf32, #tpu.memory_space<vmem>>, vector<1x8x16xf32>
    %154 = vector.shape_cast %153 : vector<1x8x16xf32> to vector<8x16xf32>
    %155 = vector.shape_cast %152 : vector<8x16xf32> to vector<1x8x16xf32>
    tpu.vector_store %arg10[%c0_186, %c0_187, %c240_188], %155 {strides = array<i32>} : memref<1x8x256xf32, #tpu.memory_space<vmem>>, vector<1x8x16xf32>,
    return
  }
  func.func @transform_0(%arg0: i32) -> (i32, i32) {
    %c0_i32 = arith.constant 0 : i32
    %c0_i32_0 = arith.constant 0 : i32
    %c0_i32_1 = arith.constant 0 : i32
    return %c0_i32, %c0_i32_0 : i32, i32
  }
  func.func @transform_1(%arg0: i32) -> (i32, i32) {
    %c0_i32 = arith.constant 0 : i32
    %c0_i32_0 = arith.constant 0 : i32
    %c0_i32_1 = arith.constant 0 : i32
    return %c0_i32, %c0_i32_0 : i32, i32
  }
  func.func @transform_2(%arg0: i32) -> (i32, i32) {
    %c0_i32 = arith.constant 0 : i32
    %c0_i32_0 = arith.constant 0 : i32
    %c0_i32_1 = arith.constant 0 : i32
    return %c0_i32, %c0_i32_0 : i32, i32
  }
  func.func @transform_3(%arg0: i32) -> (i32, i32) {
    %c0_i32 = arith.constant 0 : i32
    %c0_i32_0 = arith.constant 0 : i32
    %c0_i32_1 = arith.constant 0 : i32
    return %c0_i32, %c0_i32_0 : i32, i32
  }
  func.func @transform_4(%arg0: i32) -> (i32, i32) {
    %c0_i32 = arith.constant 0 : i32
    %c0_i32_0 = arith.constant 0 : i32
    %c0_i32_1 = arith.constant 0 : i32
    return %c0_i32, %c0_i32_0 : i32, i32
  }
  func.func @transform_5(%arg0: i32) -> (i32, i32) {
    %c0_i32 = arith.constant 0 : i32
    %c0_i32_0 = arith.constant 0 : i32
    %c0_i32_1 = arith.constant 0 : i32
    return %c0_i32, %c0_i32_0 : i32, i32
  }
  func.func @transform_6(%arg0: i32) -> (i32, i32, i32) {
    %c0_i32 = arith.constant 0 : i32
    %c0_i32_0 = arith.constant 0 : i32
    %c0_i32_1 = arith.constant 0 : i32
    return %arg0, %c0_i32, %c0_i32_0 : i32, i32, i32
  }
  func.func @transform_7(%arg0: i32) -> (i32, i32, i32) {
    %c0_i32 = arith.constant 0 : i32
    %c0_i32_0 = arith.constant 0 : i32
    %c0_i32_1 = arith.constant 0 : i32
    return %arg0, %c0_i32, %c0_i32_0 : i32, i32, i32
  }
  func.func @transform_8(%arg0: i32) -> (i32, i32, i32) {
    %c0_i32 = arith.constant 0 : i32
    %c0_i32_0 = arith.constant 0 : i32
    %c0_i32_1 = arith.constant 0 : i32
    return %arg0, %c0_i32, %c0_i32_0 : i32, i32, i32
  }
  func.func @transform_9(%arg0: i32) -> (i32, i32, i32) {
    %c0_i32 = arith.constant 0 : i32
    %c0_i32_0 = arith.constant 0 : i32
    %c0_i32_1 = arith.constant 0 : i32
    return %arg0, %c0_i32, %c0_i32_0 : i32, i32, i32
  }
}

</mosaic_0001>

<llo_original>
// kernel: mqa_forward.1
$region0: #{mqa_forward.1}
  #allocation0 [shape = 'u32[]', space=smem, size = 0x4, offset = 0x4, fixed_abs, tag = 'smem constant byte address 0x4 - core index']
  #allocation1 [shape = 'u32[144,128]{1,0:T(1,128)}', space=vmem, size = 0x12000, scoped, tag = 'internal scratch']
  #allocation2 [shape = 'f32[32,256]{1,0:T(8,128)}', space=vmem, size = 0x8000, scoped, tag = 'scratch operand']
  #allocation3 [shape = 'f32[16,64]{1,0:T(8,128)}', space=vmem, size = 0x2000, scoped, tag = 'scratch operand']
  #allocation4 [shape = 'f32[512,16]{1,0:T(8,128)}', space=vmem, size = 0x40000, scoped, tag = 'scratch operand']
  #allocation5 [shape = 'f32[64,16]{1,0:T(8,128)}', space=vmem, size = 0x8000, scoped, tag = 'scratch operand']
  #allocation6 [shape = 'f32[512,16]{1,0:T(8,128)}', space=vmem, size = 0x40000, scoped, tag = 'scratch operand']
  %s0 = inlined_call_operand.vmem [shape: f32[32,8], index: 0, kind: input, shape index: {}]
  %s1 = inlined_call_operand.vmem [shape: f32[16,72], index: 1, kind: input, shape index: {}]
  %s2 = inlined_call_operand.vmem [shape: f32[16,1], index: 2, kind: input, shape index: {}]
  %s3 = inlined_call_operand.vmem [shape: f32[16,72], index: 3, kind: input, shape index: {}]
  %s4 = inlined_call_operand.vmem [shape: f32[16,1], index: 4, kind: input, shape index: {}]
  %s5 = inlined_call_operand.vmem [shape: f32[8,32], index: 5, kind: input, shape index: {}]
  %s6 = inlined_call_operand.vmem [shape: f32[1,8,256], index: 6, kind: input, shape index: {}]
  %s7 = inlined_call_operand.vmem [shape: f32[1,72,64], index: 7, kind: input, shape index: {}]
  %s8 = inlined_call_operand.vmem [shape: f32[1,72,64], index: 8, kind: input, shape index: {}]
  %s9 = inlined_call_operand.vmem [shape: f32[1,8,256], index: 9, kind: output, shape index: {}]
  %s10 = sld [smem:[#allocation0]]
  $region46: #{mqa_forward.1} parent=0
    _
  %s12 = ssub.s32 1, %s10
  %s13 = scalar_select 0, %s12, %s10
  // Predicated region
  $region2: #{mqa_forward.1} parent=0 // pred_check
    _
  $region3: #{mqa_forward.1} parent=0 // pred_check_branch
    %15 = sbr.rel (0) target = $region5
  $region4: #{mqa_forward.1} parent=0 // pred_region
    _
  $region5: #{mqa_forward.1} parent=0 // pred_fallthru
    _
  // Predicated region
  $region6: #{mqa_forward.1} parent=0 // pred_check
    _
  $region7: #{mqa_forward.1} parent=0 // pred_check_branch
    %17 = sbr.rel (0) target = $region9
  $region8: #{mqa_forward.1} parent=0 // pred_region
    _
  $region9: #{mqa_forward.1} parent=0 // pred_fallthru
    _
  // Predicated region
  $region10: #{mqa_forward.1} parent=0 // pred_check
    _
  $region11: #{mqa_forward.1} parent=0 // pred_check_branch
    %19 = sbr.rel (0) target = $region13
  $region12: #{mqa_forward.1} parent=0 // pred_region
    _
  $region13: #{mqa_forward.1} parent=0 // pred_fallthru
    _
  // Predicated region
  $region14: #{mqa_forward.1} parent=0 // pred_check
    _
  $region15: #{mqa_forward.1} parent=0 // pred_check_branch
    %21 = sbr.rel (0) target = $region17
  $region16: #{mqa_forward.1} parent=0 // pred_region
    _
  $region17: #{mqa_forward.1} parent=0 // pred_fallthru
    _
  // Predicated region
  $region18: #{mqa_forward.1} parent=0 // pred_check
    _
  $region19: #{mqa_forward.1} parent=0 // pred_check_branch
    %23 = sbr.rel (0) target = $region21
  $region20: #{mqa_forward.1} parent=0 // pred_region
    _
  $region21: #{mqa_forward.1} parent=0 // pred_fallthru
    _
  // Predicated region
  $region22: #{mqa_forward.1} parent=0 // pred_check
    _
  $region23: #{mqa_forward.1} parent=0 // pred_check_branch
    %25 = sbr.rel (0) target = $region25
  $region24: #{mqa_forward.1} parent=0 // pred_region
    _
  $region25: #{mqa_forward.1} parent=0 // pred_fallthru
    _
  // Predicated region
  $region26: #{mqa_forward.1} parent=0 // pred_check
    _
  $region27: #{mqa_forward.1} parent=0 // pred_check_branch
    %27 = sbr.rel (0) target = $region29
  $region28: #{mqa_forward.1} parent=0 // pred_region
    _
  $region29: #{mqa_forward.1} parent=0 // pred_fallthru
    _
  // Predicated region
  $region30: #{mqa_forward.1} parent=0 // pred_check
    _
  $region31: #{mqa_forward.1} parent=0 // pred_check_branch
    %29 = sbr.rel (0) target = $region33
  $region32: #{mqa_forward.1} parent=0 // pred_region
    _
  $region33: #{mqa_forward.1} parent=0 // pred_fallthru
    _
  // Predicated region
  $region34: #{mqa_forward.1} parent=0 // pred_check
    _
  $region35: #{mqa_forward.1} parent=0 // pred_check_branch
    %31 = sbr.rel (0) target = $region37
  $region36: #{mqa_forward.1} parent=0 // pred_region
    _
  $region37: #{mqa_forward.1} parent=0 // pred_fallthru
    _
  %v32 = vld [vmem:[%s0] sm:$0xff]
  %v33 = vld [vmem:[%s0 + $0x8] sm:$0xff]
  %v34 = vld [vmem:[%s0 + $0x10] sm:$0xff]
  %v35 = vld [vmem:[%s0 + $0x18] sm:$0xff]
  %v36 = vld [vmem:[%s6] sm:$0xff]
  %v37 = vld [vmem:[%s6 + $0x8] sm:$0xff]
  %vm38 = vcmask 64512
  %v40 = vsel %vm38, %v32, 0
  %v43 = vsel %vm38, %v33, 0
  %v46 = vsel %vm38, %v34, 0
  %v49 = vsel %vm38, %v35, 0
  %51 = vmatprep.subr.mxu0 %v37
  %52 = vmatpush1.msra.mxu0 %v36
  %53 = vmatprep.subr.mxu0 0.0
  %54 = vmatpush1.msra.mxu0 0.0
  %55 = vmatprep.subr.mxu0 0.0
  %56 = vmatpush1.msra.mxu0 0.0
  %57 = vmatprep.subr.mxu0 0.0
  %58 = vmatpush1.msra.mxu0 0.0
  %59 = vmatprep.subr.mxu0 0.0
  %60 = vmatpush1.msra.mxu0 0.0
  %61 = vmatprep.subr.mxu0 0.0
  %62 = vmatpush1.msra.mxu0 0.0
  %63 = vmatprep.subr.mxu0 0.0
  %64 = vmatpush1.msra.mxu0 0.0
  %65 = vmatprep.subr.mxu0 0.0
  %66 = vmatpush1.msra.mxu0 0.0
  %67 = vmatprep.subr.mxu0 0.0
  %68 = vmatpush1.msra.mxu0 0.0
  %69 = vmatprep.subr.mxu0 0.0
  %70 = vmatpush1.msra.mxu0 0.0
  %71 = vmatprep.subr.mxu0 0.0
  %72 = vmatpush1.msra.mxu0 0.0
  %73 = vmatprep.subr.mxu0 0.0
  %74 = vmatpush1.msra.mxu0 0.0
  %75 = vmatprep.subr.mxu0 0.0
  %76 = vmatpush1.msra.mxu0 0.0
  %77 = vmatprep.subr.mxu0 0.0
  %78 = vmatpush1.msra.mxu0 0.0
  %79 = vmatprep.subr.mxu0 0.0
  %80 = vmatpush1.msra.mxu0 0.0
  %81 = vmatprep.subr.mxu0 0.0
  %82 = vmatpush1.msra.mxu0 0.0
  %83 = vmatprep.subr.mxu0 0.0
  %84 = vmatpush1.msra.mxu0 0.0
  %85 = vmatprep.subr.mxu0 0.0
  %86 = vmatpush1.msra.mxu0 0.0
  %87 = vmatprep.subr.mxu0 0.0
  %88 = vmatpush1.msra.mxu0 0.0
  %89 = vmatprep.subr.mxu0 0.0
  %90 = vmatpush1.msra.mxu0 0.0
  %91 = vmatprep.subr.mxu0 0.0
  %92 = vmatpush1.msra.mxu0 0.0
  %93 = vmatprep.subr.mxu0 0.0
  %94 = vmatpush1.msra.mxu0 0.0
  %95 = vmatprep.subr.mxu0 0.0
  %96 = vmatpush1.msra.mxu0 0.0
  %97 = vmatprep.subr.mxu0 0.0
  %98 = vmatpush1.msra.mxu0 0.0
  %99 = vmatprep.subr.mxu0 0.0
  %100 = vmatpush1.msra.mxu0 0.0
  %101 = vmatprep.subr.mxu0 0.0
  %102 = vmatpush1.msra.mxu0 0.0
  %103 = vmatprep.subr.mxu0 0.0
  %104 = vmatpush1.msra.mxu0 0.0
  %105 = vmatprep.subr.mxu0 0.0
  %106 = vmatpush1.msra.mxu0 0.0
  %107 = vmatprep.subr.mxu0 0.0
  %108 = vmatpush1.msra.mxu0 0.0
  %109 = vmatprep.subr.mxu0 0.0
  %110 = vmatpush1.msra.mxu0 0.0
  %111 = vmatprep.subr.mxu0 0.0
  %112 = vmatpush1.msra.mxu0 0.0
  %113 = vmatprep.subr.mxu0 0.0
  %114 = vmatpush1.msra.mxu0 0.0
  %115 = vmatprep.mubr.f32.mxu0 0.0
  %116 = vmatmul.mubr.f32.gmra.mrb[0].mxu0 %v40
  %v117 = vpop.f32.mrb[0].mxu0
  %v118 = vadd.f32 0.0, %v117
  %v119 = vpop.f32.mrb[0].mxu0
  %v120 = vadd.f32 0.0, %v119
  %121 = vmatprep.mubr.f32.mxu0 0.0
  %122 = vmatmul.mubr.f32.gmra.mrb[0].mxu0 %v43
  %v123 = vpop.f32.mrb[0].mxu0
  %v124 = vadd.f32 0.0, %v123
  %v125 = vpop.f32.mrb[0].mxu0
  %v126 = vadd.f32 0.0, %v125
  %127 = vmatprep.mubr.f32.mxu0 0.0
  %128 = vmatmul.mubr.f32.gmra.mrb[0].mxu0 %v46
  %v129 = vpop.f32.mrb[0].mxu0
  %v130 = vadd.f32 0.0, %v129
  %v131 = vpop.f32.mrb[0].mxu0
  %v132 = vadd.f32 0.0, %v131
  %133 = vmatprep.mubr.f32.mxu0 0.0
  %134 = vmatmul.mubr.f32.gmra.mrb[0].mxu0 %v49
  %v135 = vpop.f32.mrb[0].mxu0
  %v136 = vadd.f32 0.0, %v135
  %v137 = vpop.f32.mrb[0].mxu0
  %v138 = vadd.f32 0.0, %v137
  %139 = vdwg.mxu0
  %140 = vst [vmem:[#allocation2] sm:$0xff] %v118
  %141 = vst [vmem:[#allocation2 + $0x8] sm:$0xff] %v120
  %142 = vst [vmem:[#allocation2 + $0x10] sm:$0xff] %v124
  %143 = vst [vmem:[#allocation2 + $0x18] sm:$0xff] %v126
  %144 = vst [vmem:[#allocation2 + $0x20] sm:$0xff] %v130
  %145 = vst [vmem:[#allocation2 + $0x28] sm:$0xff] %v132
  %146 = vst [vmem:[#allocation2 + $0x30] sm:$0xff] %v136
  %147 = vst [vmem:[#allocation2 + $0x38] sm:$0xff] %v138
  %v148 = vld [vmem:[%s1] sm:$0xff]
  %v149 = vld [vmem:[%s1 + $0x8] sm:$0xff]
  %v150 = vld [vmem:[%s7] sm:$0xff]
  %v151 = vld [vmem:[%s7 + $0x8] sm:$0xff]
  %v152 = vld [vmem:[%s7 + $0x10] sm:$0xff]
  %v153 = vld [vmem:[%s7 + $0x18] sm:$0xff]
  %v154 = vld [vmem:[%s7 + $0x20] sm:$0xff]
  %v155 = vld [vmem:[%s7 + $0x28] sm:$0xff]
  %v156 = vld [vmem:[%s7 + $0x30] sm:$0xff]
  %v157 = vld [vmem:[%s7 + $0x38] sm:$0xff]
  %v158 = vld [vmem:[%s7 + $0x40] sm:$0xff]
  %v159 = vld [vmem:[%s2] sm:$0xff]
  %v160 = vld [vmem:[%s2 + $0x8] sm:$0xff]
  %162 = vset.pattern.permute.xlu0 0
  %163 = vperm.xlu0 %162, %v159
  %v164 = vpop.permute.xlu0 %163
  %167 = vset.pattern.permute.xlu0 0
  %168 = vperm.xlu0 %167, %v160
  %v169 = vpop.permute.xlu0 %168
  %vm171 = vcmask 588800
  %v173 = vsel %vm171, %v148, 0
  %v176 = vsel %vm171, %v149, 0
  %178 = vmatprep.subr.mxu0 0.0
  %179 = vmatpush1.msra.mxu0 %v150
  %180 = vmatprep.subr.mxu0 0.0
  %181 = vmatpush1.msra.mxu0 %v151
  %182 = vmatprep.subr.mxu0 0.0
  %183 = vmatpush1.msra.mxu0 %v152
  %184 = vmatprep.subr.mxu0 0.0
  %185 = vmatpush1.msra.mxu0 %v153
  %186 = vmatprep.subr.mxu0 0.0
  %187 = vmatpush1.msra.mxu0 %v154
  %188 = vmatprep.subr.mxu0 0.0
  %189 = vmatpush1.msra.mxu0 %v155
  %190 = vmatprep.subr.mxu0 0.0
  %191 = vmatpush1.msra.mxu0 %v156
  %192 = vmatprep.subr.mxu0 0.0
  %193 = vmatpush1.msra.mxu0 %v157
  %194 = vmatprep.subr.mxu0 0.0
  %195 = vmatpush1.msra.mxu0 %v158
  %196 = vmatprep.subr.mxu0 0.0
  %197 = vmatpush1.msra.mxu0 0.0
  %198 = vmatprep.subr.mxu0 0.0
  %199 = vmatpush1.msra.mxu0 0.0
  %200 = vmatprep.subr.mxu0 0.0
  %201 = vmatpush1.msra.mxu0 0.0
  %202 = vmatprep.subr.mxu0 0.0
  %203 = vmatpush1.msra.mxu0 0.0
  %204 = vmatprep.subr.mxu0 0.0
  %205 = vmatpush1.msra.mxu0 0.0
  %206 = vmatprep.subr.mxu0 0.0
  %207 = vmatpush1.msra.mxu0 0.0
  %208 = vmatprep.subr.mxu0 0.0
  %209 = vmatpush1.msra.mxu0 0.0
  %210 = vmatprep.subr.mxu0 0.0
  %211 = vmatpush1.msra.mxu0 0.0
  %212 = vmatprep.subr.mxu0 0.0
  %213 = vmatpush1.msra.mxu0 0.0
  %214 = vmatprep.subr.mxu0 0.0
  %215 = vmatpush1.msra.mxu0 0.0
  %216 = vmatprep.subr.mxu0 0.0
  %217 = vmatpush1.msra.mxu0 0.0
  %218 = vmatprep.subr.mxu0 0.0
  %219 = vmatpush1.msra.mxu0 0.0
  %220 = vmatprep.subr.mxu0 0.0
  %221 = vmatpush1.msra.mxu0 0.0
  %222 = vmatprep.subr.mxu0 0.0
  %223 = vmatpush1.msra.mxu0 0.0
  %224 = vmatprep.subr.mxu0 0.0
  %225 = vmatpush1.msra.mxu0 0.0
  %226 = vmatprep.subr.mxu0 0.0
  %227 = vmatpush1.msra.mxu0 0.0
  %228 = vmatprep.subr.mxu0 0.0
  %229 = vmatpush1.msra.mxu0 0.0
  %230 = vmatprep.subr.mxu0 0.0
  %231 = vmatpush1.msra.mxu0 0.0
  %232 = vmatprep.subr.mxu0 0.0
  %233 = vmatpush1.msra.mxu0 0.0
  %234 = vmatprep.subr.mxu0 0.0
  %235 = vmatpush1.msra.mxu0 0.0
  %236 = vmatprep.subr.mxu0 0.0
  %237 = vmatpush1.msra.mxu0 0.0
  %238 = vmatprep.subr.mxu0 0.0
  %239 = vmatpush1.msra.mxu0 0.0
  %240 = vmatprep.subr.mxu0 0.0
  %241 = vmatpush1.msra.mxu0 0.0
  %242 = vmatprep.mubr.f32.mxu0 0.0
  %243 = vmatmul.mubr.f32.gmra.mrb[0].mxu0 %v173
  %v244 = vpop.f32.mrb[0].mxu0
  %v245 = vadd.f32 %v164, %v244
  %v246 = vpop.f32.mrb[0].mxu0
  %247 = vmatprep.mubr.f32.mxu0 0.0
  %248 = vmatmul.mubr.f32.gmra.mrb[0].mxu0 %v176
  %v249 = vpop.f32.mrb[0].mxu0
  %v250 = vadd.f32 %v169, %v249
  %v251 = vpop.f32.mrb[0].mxu0
  %252 = vdwg.mxu0
  %v253 = vld [vmem:[%s3] sm:$0xff]
  %v254 = vld [vmem:[%s3 + $0x8] sm:$0xff]
  %v255 = vld [vmem:[%s8] sm:$0xff]
  %v256 = vld [vmem:[%s8 + $0x8] sm:$0xff]
  %v257 = vld [vmem:[%s8 + $0x10] sm:$0xff]
  %v258 = vld [vmem:[%s8 + $0x18] sm:$0xff]
  %v259 = vld [vmem:[%s8 + $0x20] sm:$0xff]
  %v260 = vld [vmem:[%s8 + $0x28] sm:$0xff]
  %v261 = vld [vmem:[%s8 + $0x30] sm:$0xff]
  %v262 = vld [vmem:[%s8 + $0x38] sm:$0xff]
  %v263 = vld [vmem:[%s8 + $0x40] sm:$0xff]
  %v264 = vld [vmem:[%s4] sm:$0xff]
  %v265 = vld [vmem:[%s4 + $0x8] sm:$0xff]
  %267 = vset.pattern.permute.xlu0 0
  %268 = vperm.xlu0 %267, %v264
  %v269 = vpop.permute.xlu0 %268
  %272 = vset.pattern.permute.xlu0 0
  %273 = vperm.xlu0 %272, %v265
  %v274 = vpop.permute.xlu0 %273
  %v277 = vsel %vm171, %v253, 0
  %v280 = vsel %vm171, %v254, 0
  %282 = vmatprep.subr.mxu0 0.0
  %283 = vmatpush1.msra.mxu0 %v255
  %284 = vmatprep.subr.mxu0 0.0
  %285 = vmatpush1.msra.mxu0 %v256
  %286 = vmatprep.subr.mxu0 0.0
  %287 = vmatpush1.msra.mxu0 %v257
  %288 = vmatprep.subr.mxu0 0.0
  %289 = vmatpush1.msra.mxu0 %v258
  %290 = vmatprep.subr.mxu0 0.0
  %291 = vmatpush1.msra.mxu0 %v259
  %292 = vmatprep.subr.mxu0 0.0
  %293 = vmatpush1.msra.mxu0 %v260
  %294 = vmatprep.subr.mxu0 0.0
  %295 = vmatpush1.msra.mxu0 %v261
  %296 = vmatprep.subr.mxu0 0.0
  %297 = vmatpush1.msra.mxu0 %v262
  %298 = vmatprep.subr.mxu0 0.0
  %299 = vmatpush1.msra.mxu0 %v263
  %300 = vmatprep.subr.mxu0 0.0
  %301 = vmatpush1.msra.mxu0 0.0
  %302 = vmatprep.subr.mxu0 0.0
  %303 = vmatpush1.msra.mxu0 0.0
  %304 = vmatprep.subr.mxu0 0.0
  %305 = vmatpush1.msra.mxu0 0.0
  %306 = vmatprep.subr.mxu0 0.0
  %307 = vmatpush1.msra.mxu0 0.0
  %308 = vmatprep.subr.mxu0 0.0
  %309 = vmatpush1.msra.mxu0 0.0
  %310 = vmatprep.subr.mxu0 0.0
  %311 = vmatpush1.msra.mxu0 0.0
  %312 = vmatprep.subr.mxu0 0.0
  %313 = vmatpush1.msra.mxu0 0.0
  %314 = vmatprep.subr.mxu0 0.0
  %315 = vmatpush1.msra.mxu0 0.0
  %316 = vmatprep.subr.mxu0 0.0
  %317 = vmatpush1.msra.mxu0 0.0
  %318 = vmatprep.subr.mxu0 0.0
  %319 = vmatpush1.msra.mxu0 0.0
  %320 = vmatprep.subr.mxu0 0.0
  %321 = vmatpush1.msra.mxu0 0.0
  %322 = vmatprep.subr.mxu0 0.0
  %323 = vmatpush1.msra.mxu0 0.0
  %324 = vmatprep.subr.mxu0 0.0
  %325 = vmatpush1.msra.mxu0 0.0
  %326 = vmatprep.subr.mxu0 0.0
  %327 = vmatpush1.msra.mxu0 0.0
  %328 = vmatprep.subr.mxu0 0.0
  %329 = vmatpush1.msra.mxu0 0.0
  %330 = vmatprep.subr.mxu0 0.0
  %331 = vmatpush1.msra.mxu0 0.0
  %332 = vmatprep.subr.mxu0 0.0
  %333 = vmatpush1.msra.mxu0 0.0
  %334 = vmatprep.subr.mxu0 0.0
  %335 = vmatpush1.msra.mxu0 0.0
  %336 = vmatprep.subr.mxu0 0.0
  %337 = vmatpush1.msra.mxu0 0.0
  %338 = vmatprep.subr.mxu0 0.0
  %339 = vmatpush1.msra.mxu0 0.0
  %340 = vmatprep.subr.mxu0 0.0
  %341 = vmatpush1.msra.mxu0 0.0
  %342 = vmatprep.subr.mxu0 0.0
  %343 = vmatpush1.msra.mxu0 0.0
  %344 = vmatprep.subr.mxu0 0.0
  %345 = vmatpush1.msra.mxu0 0.0
  %346 = vmatprep.mubr.f32.mxu0 0.0
  %347 = vmatmul.mubr.f32.gmra.mrb[0].mxu0 %v277
  %v348 = vpop.f32.mrb[0].mxu0
  %v349 = vadd.f32 %v269, %v348
  %v350 = vpop.f32.mrb[0].mxu0
  %351 = vmatprep.mubr.f32.mxu0 0.0
  %352 = vmatmul.mubr.f32.gmra.mrb[0].mxu0 %v280
  %v353 = vpop.f32.mrb[0].mxu0
  %v354 = vadd.f32 %v274, %v353
  %v355 = vpop.f32.mrb[0].mxu0
  %356 = vdwg.mxu0
  %vm357 = vcmask 523264
  %358 = vst.msk [vmem:[#allocation3] sm:$0xff] %vm357, %v349
  %359 = vst.msk [vmem:[#allocation3 + $0x8] sm:$0xff] %vm357, %v354
  %v360 = vld [vmem:[#allocation2] sm:$0xff]
  %v361 = vld [vmem:[#allocation2 + $0x10] sm:$0xff]
  %v362 = vld [vmem:[#allocation2 + $0x20] sm:$0xff]
  %v363 = vld [vmem:[#allocation2 + $0x30] sm:$0xff]
  %vm364 = vcmask 130048
  %365 = vst.msk [vmem:[#allocation4] sm:$0xff] %vm364, %v360
  %366 = vst.msk [vmem:[#allocation4 + $0x8] sm:$0xff] %vm364, %v361
  %367 = vst.msk [vmem:[#allocation4 + $0x10] sm:$0xff] %vm364, %v362
  %368 = vst.msk [vmem:[#allocation4 + $0x18] sm:$0xff] %vm364, %v363
  %v369 = vld [vmem:[#allocation2] sm:$0xff]
  %v370 = vld [vmem:[#allocation2 + $0x10] sm:$0xff]
  %v371 = vld [vmem:[#allocation2 + $0x20] sm:$0xff]
  %v372 = vld [vmem:[#allocation2 + $0x30] sm:$0xff]
  %377 = vrot.lane.b32.xlu0 %v369, 112
  %v378 = vpop.permute.xlu0 %377
  %379 = vrot.lane.b32.xlu0 %v370, 112
  %v380 = vpop.permute.xlu0 %379
  %381 = vrot.lane.b32.xlu0 %v371, 112
  %v382 = vpop.permute.xlu0 %381
  %383 = vrot.lane.b32.xlu0 %v372, 112
  %v384 = vpop.permute.xlu0 %383
  %389 = vst.msk [vmem:[#allocation4 + $0x20] sm:$0xff] %vm364, %v378
  %390 = vst.msk [vmem:[#allocation4 + $0x28] sm:$0xff] %vm364, %v380
  %391 = vst.msk [vmem:[#allocation4 + $0x30] sm:$0xff] %vm364, %v382
  %392 = vst.msk [vmem:[#allocation4 + $0x38] sm:$0xff] %vm364, %v384
  %v393 = vld [vmem:[#allocation2] sm:$0xff]
  %v394 = vld [vmem:[#allocation2 + $0x10] sm:$0xff]
  %v395 = vld [vmem:[#allocation2 + $0x20] sm:$0xff]
  %v396 = vld [vmem:[#allocation2 + $0x30] sm:$0xff]
  %401 = vrot.lane.b32.xlu0 %v393, 96
  %v402 = vpop.permute.xlu0 %401
  %403 = vrot.lane.b32.xlu0 %v394, 96
  %v404 = vpop.permute.xlu0 %403
  %405 = vrot.lane.b32.xlu0 %v395, 96
  %v406 = vpop.permute.xlu0 %405
  %407 = vrot.lane.b32.xlu0 %v396, 96
  %v408 = vpop.permute.xlu0 %407
  %413 = vst.msk [vmem:[#allocation4 + $0x40] sm:$0xff] %vm364, %v402
  %414 = vst.msk [vmem:[#allocation4 + $0x48] sm:$0xff] %vm364, %v404
  %415 = vst.msk [vmem:[#allocation4 + $0x50] sm:$0xff] %vm364, %v406
  %416 = vst.msk [vmem:[#allocation4 + $0x58] sm:$0xff] %vm364, %v408
  %v417 = vld [vmem:[#allocation2] sm:$0xff]
  %v418 = vld [vmem:[#allocation2 + $0x10] sm:$0xff]
  %v419 = vld [vmem:[#allocation2 + $0x20] sm:$0xff]
  %v420 = vld [vmem:[#allocation2 + $0x30] sm:$0xff]
  %425 = vrot.lane.b32.xlu0 %v417, 80
  %v426 = vpop.permute.xlu0 %425
  %427 = vrot.lane.b32.xlu0 %v418, 80
  %v428 = vpop.permute.xlu0 %427
  %429 = vrot.lane.b32.xlu0 %v419, 80
  %v430 = vpop.permute.xlu0 %429
  %431 = vrot.lane.b32.xlu0 %v420, 80
  %v432 = vpop.permute.xlu0 %431
  %437 = vst.msk [vmem:[#allocation4 + $0x60] sm:$0xff] %vm364, %v426
  %438 = vst.msk [vmem:[#allocation4 + $0x68] sm:$0xff] %vm364, %v428
  %439 = vst.msk [vmem:[#allocation4 + $0x70] sm:$0xff] %vm364, %v430
  %440 = vst.msk [vmem:[#allocation4 + $0x78] sm:$0xff] %vm364, %v432
  %v441 = vld [vmem:[#allocation2] sm:$0xff]
  %v442 = vld [vmem:[#allocation2 + $0x10] sm:$0xff]
  %v443 = vld [vmem:[#allocation2 + $0x20] sm:$0xff]
  %v444 = vld [vmem:[#allocation2 + $0x30] sm:$0xff]
  %449 = vrot.lane.b32.xlu0 %v441, 64
  %v450 = vpop.permute.xlu0 %449
  %451 = vrot.lane.b32.xlu0 %v442, 64
  %v452 = vpop.permute.xlu0 %451
  %453 = vrot.lane.b32.xlu0 %v443, 64
  %v454 = vpop.permute.xlu0 %453
  %455 = vrot.lane.b32.xlu0 %v444, 64
  %v456 = vpop.permute.xlu0 %455
  %461 = vst.msk [vmem:[#allocation4 + $0x80] sm:$0xff] %vm364, %v450
  %462 = vst.msk [vmem:[#allocation4 + $0x88] sm:$0xff] %vm364, %v452
  %463 = vst.msk [vmem:[#allocation4 + $0x90] sm:$0xff] %vm364, %v454
  %464 = vst.msk [vmem:[#allocation4 + $0x98] sm:$0xff] %vm364, %v456
  %v465 = vld [vmem:[#allocation2] sm:$0xff]
  %v466 = vld [vmem:[#allocation2 + $0x10] sm:$0xff]
  %v467 = vld [vmem:[#allocation2 + $0x20] sm:$0xff]
  %v468 = vld [vmem:[#allocation2 + $0x30] sm:$0xff]
  %473 = vrot.lane.b32.xlu0 %v465, 48
  %v474 = vpop.permute.xlu0 %473
  %475 = vrot.lane.b32.xlu0 %v466, 48
  %v476 = vpop.permute.xlu0 %475
  %477 = vrot.lane.b32.xlu0 %v467, 48
  %v478 = vpop.permute.xlu0 %477
  %479 = vrot.lane.b32.xlu0 %v468, 48
  %v480 = vpop.permute.xlu0 %479
  %485 = vst.msk [vmem:[#allocation4 + $0xa0] sm:$0xff] %vm364, %v474
  %486 = vst.msk [vmem:[#allocation4 + $0xa8] sm:$0xff] %vm364, %v476
  %487 = vst.msk [vmem:[#allocation4 + $0xb0] sm:$0xff] %vm364, %v478
  %488 = vst.msk [vmem:[#allocation4 + $0xb8] sm:$0xff] %vm364, %v480
  %v489 = vld [vmem:[#allocation2] sm:$0xff]
  %v490 = vld [vmem:[#allocation2 + $0x10] sm:$0xff]
  %v491 = vld [vmem:[#allocation2 + $0x20] sm:$0xff]
  %v492 = vld [vmem:[#allocation2 + $0x30] sm:$0xff]
  %497 = vrot.lane.b32.xlu0 %v489, 32
  %v498 = vpop.permute.xlu0 %497
  %499 = vrot.lane.b32.xlu0 %v490, 32
  %v500 = vpop.permute.xlu0 %499
  %501 = vrot.lane.b32.xlu0 %v491, 32
  %v502 = vpop.permute.xlu0 %501
  %503 = vrot.lane.b32.xlu0 %v492, 32
  %v504 = vpop.permute.xlu0 %503
  %509 = vst.msk [vmem:[#allocation4 + $0xc0] sm:$0xff] %vm364, %v498
  %510 = vst.msk [vmem:[#allocation4 + $0xc8] sm:$0xff] %vm364, %v500
  %511 = vst.msk [vmem:[#allocation4 + $0xd0] sm:$0xff] %vm364, %v502
  %512 = vst.msk [vmem:[#allocation4 + $0xd8] sm:$0xff] %vm364, %v504
  %v513 = vld [vmem:[#allocation2] sm:$0xff]
  %v514 = vld [vmem:[#allocation2 + $0x10] sm:$0xff]
  %v515 = vld [vmem:[#allocation2 + $0x20] sm:$0xff]
  %v516 = vld [vmem:[#allocation2 + $0x30] sm:$0xff]
  %521 = vrot.lane.b32.xlu0 %v513, 16
  %v522 = vpop.permute.xlu0 %521
  %523 = vrot.lane.b32.xlu0 %v514, 16
  %v524 = vpop.permute.xlu0 %523
  %525 = vrot.lane.b32.xlu0 %v515, 16
  %v526 = vpop.permute.xlu0 %525
  %527 = vrot.lane.b32.xlu0 %v516, 16
  %v528 = vpop.permute.xlu0 %527
  %533 = vst.msk [vmem:[#allocation4 + $0xe0] sm:$0xff] %vm364, %v522
  %534 = vst.msk [vmem:[#allocation4 + $0xe8] sm:$0xff] %vm364, %v524
  %535 = vst.msk [vmem:[#allocation4 + $0xf0] sm:$0xff] %vm364, %v526
  %536 = vst.msk [vmem:[#allocation4 + $0xf8] sm:$0xff] %vm364, %v528
  %v537 = vld [vmem:[#allocation2 + $0x8] sm:$0xff]
  %v538 = vld [vmem:[#allocation2 + $0x18] sm:$0xff]
  %v539 = vld [vmem:[#allocation2 + $0x28] sm:$0xff]
  %v540 = vld [vmem:[#allocation2 + $0x38] sm:$0xff]
  %541 = vst.msk [vmem:[#allocation4 + $0x100] sm:$0xff] %vm364, %v537
  %542 = vst.msk [vmem:[#allocation4 + $0x108] sm:$0xff] %vm364, %v538
  %543 = vst.msk [vmem:[#allocation4 + $0x110] sm:$0xff] %vm364, %v539
  %544 = vst.msk [vmem:[#allocation4 + $0x118] sm:$0xff] %vm364, %v540
  %v545 = vld [vmem:[#allocation2 + $0x8] sm:$0xff]
  %v546 = vld [vmem:[#allocation2 + $0x18] sm:$0xff]
  %v547 = vld [vmem:[#allocation2 + $0x28] sm:$0xff]
  %v548 = vld [vmem:[#allocation2 + $0x38] sm:$0xff]
  %553 = vrot.lane.b32.xlu0 %v545, 112
  %v554 = vpop.permute.xlu0 %553
  %555 = vrot.lane.b32.xlu0 %v546, 112
  %v556 = vpop.permute.xlu0 %555
  %557 = vrot.lane.b32.xlu0 %v547, 112
  %v558 = vpop.permute.xlu0 %557
  %559 = vrot.lane.b32.xlu0 %v548, 112
  %v560 = vpop.permute.xlu0 %559
  %565 = vst.msk [vmem:[#allocation4 + $0x120] sm:$0xff] %vm364, %v554
  %566 = vst.msk [vmem:[#allocation4 + $0x128] sm:$0xff] %vm364, %v556
  %567 = vst.msk [vmem:[#allocation4 + $0x130] sm:$0xff] %vm364, %v558
  %568 = vst.msk [vmem:[#allocation4 + $0x138] sm:$0xff] %vm364, %v560
  %v569 = vld [vmem:[#allocation2 + $0x8] sm:$0xff]
  %v570 = vld [vmem:[#allocation2 + $0x18] sm:$0xff]
  %v571 = vld [vmem:[#allocation2 + $0x28] sm:$0xff]
  %v572 = vld [vmem:[#allocation2 + $0x38] sm:$0xff]
  %577 = vrot.lane.b32.xlu0 %v569, 96
  %v578 = vpop.permute.xlu0 %577
  %579 = vrot.lane.b32.xlu0 %v570, 96
  %v580 = vpop.permute.xlu0 %579
  %581 = vrot.lane.b32.xlu0 %v571, 96
  %v582 = vpop.permute.xlu0 %581
  %583 = vrot.lane.b32.xlu0 %v572, 96
  %v584 = vpop.permute.xlu0 %583
  %589 = vst.msk [vmem:[#allocation4 + $0x140] sm:$0xff] %vm364, %v578
  %590 = vst.msk [vmem:[#allocation4 + $0x148] sm:$0xff] %vm364, %v580
  %591 = vst.msk [vmem:[#allocation4 + $0x150] sm:$0xff] %vm364, %v582
  %592 = vst.msk [vmem:[#allocation4 + $0x158] sm:$0xff] %vm364, %v584
  %v593 = vld [vmem:[#allocation2 + $0x8] sm:$0xff]
  %v594 = vld [vmem:[#allocation2 + $0x18] sm:$0xff]
  %v595 = vld [vmem:[#allocation2 + $0x28] sm:$0xff]
  %v596 = vld [vmem:[#allocation2 + $0x38] sm:$0xff]
  %601 = vrot.lane.b32.xlu0 %v593, 80
  %v602 = vpop.permute.xlu0 %601
  %603 = vrot.lane.b32.xlu0 %v594, 80
  %v604 = vpop.permute.xlu0 %603
  %605 = vrot.lane.b32.xlu0 %v595, 80
  %v606 = vpop.permute.xlu0 %605
  %607 = vrot.lane.b32.xlu0 %v596, 80
  %v608 = vpop.permute.xlu0 %607
  %613 = vst.msk [vmem:[#allocation4 + $0x160] sm:$0xff] %vm364, %v602
  %614 = vst.msk [vmem:[#allocation4 + $0x168] sm:$0xff] %vm364, %v604
  %615 = vst.msk [vmem:[#allocation4 + $0x170] sm:$0xff] %vm364, %v606
  %616 = vst.msk [vmem:[#allocation4 + $0x178] sm:$0xff] %vm364, %v608
  %v617 = vld [vmem:[#allocation2 + $0x8] sm:$0xff]
  %v618 = vld [vmem:[#allocation2 + $0x18] sm:$0xff]
  %v619 = vld [vmem:[#allocation2 + $0x28] sm:$0xff]
  %v620 = vld [vmem:[#allocation2 + $0x38] sm:$0xff]
  %625 = vrot.lane.b32.xlu0 %v617, 64
  %v626 = vpop.permute.xlu0 %625
  %627 = vrot.lane.b32.xlu0 %v618, 64
  %v628 = vpop.permute.xlu0 %627
  %629 = vrot.lane.b32.xlu0 %v619, 64
  %v630 = vpop.permute.xlu0 %629
  %631 = vrot.lane.b32.xlu0 %v620, 64
  %v632 = vpop.permute.xlu0 %631
  %637 = vst.msk [vmem:[#allocation4 + $0x180] sm:$0xff] %vm364, %v626
  %638 = vst.msk [vmem:[#allocation4 + $0x188] sm:$0xff] %vm364, %v628
  %639 = vst.msk [vmem:[#allocation4 + $0x190] sm:$0xff] %vm364, %v630
  %640 = vst.msk [vmem:[#allocation4 + $0x198] sm:$0xff] %vm364, %v632
  %v641 = vld [vmem:[#allocation2 + $0x8] sm:$0xff]
  %v642 = vld [vmem:[#allocation2 + $0x18] sm:$0xff]
  %v643 = vld [vmem:[#allocation2 + $0x28] sm:$0xff]
  %v644 = vld [vmem:[#allocation2 + $0x38] sm:$0xff]
  %649 = vrot.lane.b32.xlu0 %v641, 48
  %v650 = vpop.permute.xlu0 %649
  %651 = vrot.lane.b32.xlu0 %v642, 48
  %v652 = vpop.permute.xlu0 %651
  %653 = vrot.lane.b32.xlu0 %v643, 48
  %v654 = vpop.permute.xlu0 %653
  %655 = vrot.lane.b32.xlu0 %v644, 48
  %v656 = vpop.permute.xlu0 %655
  %661 = vst.msk [vmem:[#allocation4 + $0x1a0] sm:$0xff] %vm364, %v650
  %662 = vst.msk [vmem:[#allocation4 + $0x1a8] sm:$0xff] %vm364, %v652
  %663 = vst.msk [vmem:[#allocation4 + $0x1b0] sm:$0xff] %vm364, %v654
  %664 = vst.msk [vmem:[#allocation4 + $0x1b8] sm:$0xff] %vm364, %v656
  %v665 = vld [vmem:[#allocation2 + $0x8] sm:$0xff]
  %v666 = vld [vmem:[#allocation2 + $0x18] sm:$0xff]
  %v667 = vld [vmem:[#allocation2 + $0x28] sm:$0xff]
  %v668 = vld [vmem:[#allocation2 + $0x38] sm:$0xff]
  %673 = vrot.lane.b32.xlu0 %v665, 32
  %v674 = vpop.permute.xlu0 %673
  %675 = vrot.lane.b32.xlu0 %v666, 32
  %v676 = vpop.permute.xlu0 %675
  %677 = vrot.lane.b32.xlu0 %v667, 32
  %v678 = vpop.permute.xlu0 %677
  %679 = vrot.lane.b32.xlu0 %v668, 32
  %v680 = vpop.permute.xlu0 %679
  %685 = vst.msk [vmem:[#allocation4 + $0x1c0] sm:$0xff] %vm364, %v674
  %686 = vst.msk [vmem:[#allocation4 + $0x1c8] sm:$0xff] %vm364, %v676
  %687 = vst.msk [vmem:[#allocation4 + $0x1d0] sm:$0xff] %vm364, %v678
  %688 = vst.msk [vmem:[#allocation4 + $0x1d8] sm:$0xff] %vm364, %v680
  %v689 = vld [vmem:[#allocation2 + $0x8] sm:$0xff]
  %v690 = vld [vmem:[#allocation2 + $0x18] sm:$0xff]
  %v691 = vld [vmem:[#allocation2 + $0x28] sm:$0xff]
  %v692 = vld [vmem:[#allocation2 + $0x38] sm:$0xff]
  %697 = vrot.lane.b32.xlu0 %v689, 16
  %v698 = vpop.permute.xlu0 %697
  %699 = vrot.lane.b32.xlu0 %v690, 16
  %v700 = vpop.permute.xlu0 %699
  %701 = vrot.lane.b32.xlu0 %v691, 16
  %v702 = vpop.permute.xlu0 %701
  %703 = vrot.lane.b32.xlu0 %v692, 16
  %v704 = vpop.permute.xlu0 %703
  %709 = vst.msk [vmem:[#allocation4 + $0x1e0] sm:$0xff] %vm364, %v698
  %710 = vst.msk [vmem:[#allocation4 + $0x1e8] sm:$0xff] %vm364, %v700
  %711 = vst.msk [vmem:[#allocation4 + $0x1f0] sm:$0xff] %vm364, %v702
  %712 = vst.msk [vmem:[#allocation4 + $0x1f8] sm:$0xff] %vm364, %v704
  %v713 = vld [vmem:[#allocation3] sm:$0xff]
  %v714 = vld [vmem:[#allocation3 + $0x8] sm:$0xff]
  %715 = vst.msk [vmem:[#allocation5] sm:$0xff] %vm364, %v713
  %716 = vst.msk [vmem:[#allocation5 + $0x8] sm:$0xff] %vm364, %v714
  %v717 = vld [vmem:[#allocation3] sm:$0xff]
  %v718 = vld [vmem:[#allocation3 + $0x8] sm:$0xff]
  %721 = vrot.lane.b32.xlu0 %v717, 112
  %v722 = vpop.permute.xlu0 %721
  %723 = vrot.lane.b32.xlu0 %v718, 112
  %v724 = vpop.permute.xlu0 %723
  %727 = vst.msk [vmem:[#allocation5 + $0x10] sm:$0xff] %vm364, %v722
  %728 = vst.msk [vmem:[#allocation5 + $0x18] sm:$0xff] %vm364, %v724
  %v729 = vld [vmem:[#allocation3] sm:$0xff]
  %v730 = vld [vmem:[#allocation3 + $0x8] sm:$0xff]
  %733 = vrot.lane.b32.xlu0 %v729, 96
  %v734 = vpop.permute.xlu0 %733
  %735 = vrot.lane.b32.xlu0 %v730, 96
  %v736 = vpop.permute.xlu0 %735
  %739 = vst.msk [vmem:[#allocation5 + $0x20] sm:$0xff] %vm364, %v734
  %740 = vst.msk [vmem:[#allocation5 + $0x28] sm:$0xff] %vm364, %v736
  %v741 = vld [vmem:[#allocation3] sm:$0xff]
  %v742 = vld [vmem:[#allocation3 + $0x8] sm:$0xff]
  %745 = vrot.lane.b32.xlu0 %v741, 80
  %v746 = vpop.permute.xlu0 %745
  %747 = vrot.lane.b32.xlu0 %v742, 80
  %v748 = vpop.permute.xlu0 %747
  %751 = vst.msk [vmem:[#allocation5 + $0x30] sm:$0xff] %vm364, %v746
  %752 = vst.msk [vmem:[#allocation5 + $0x38] sm:$0xff] %vm364, %v748
  %v753 = vld [vmem:[#allocation4] sm:$0xff]
  %v754 = vld [vmem:[#allocation4 + $0x8] sm:$0xff]
  %v755 = vld [vmem:[#allocation4 + $0x10] sm:$0xff]
  %v756 = vld [vmem:[#allocation4 + $0x18] sm:$0xff]
  %v757 = vld [vmem:[#allocation4 + $0x20] sm:$0xff]
  %v758 = vld [vmem:[#allocation4 + $0x28] sm:$0xff]
  %v759 = vld [vmem:[#allocation4 + $0x30] sm:$0xff]
  %v760 = vld [vmem:[#allocation4 + $0x38] sm:$0xff]
  %v761 = vld [vmem:[#allocation4 + $0x40] sm:$0xff]
  %v762 = vld [vmem:[#allocation4 + $0x48] sm:$0xff]
  %v763 = vld [vmem:[#allocation4 + $0x50] sm:$0xff]
  %v764 = vld [vmem:[#allocation4 + $0x58] sm:$0xff]
  %v765 = vld [vmem:[#allocation4 + $0x60] sm:$0xff]
  %v766 = vld [vmem:[#allocation4 + $0x68] sm:$0xff]
  %v767 = vld [vmem:[#allocation4 + $0x70] sm:$0xff]
  %v768 = vld [vmem:[#allocation4 + $0x78] sm:$0xff]
  %v769 = vld [vmem:[#allocation4 + $0x80] sm:$0xff]
  %v770 = vld [vmem:[#allocation4 + $0x88] sm:$0xff]
  %v771 = vld [vmem:[#allocation4 + $0x90] sm:$0xff]
  %v772 = vld [vmem:[#allocation4 + $0x98] sm:$0xff]
  %v773 = vld [vmem:[#allocation4 + $0xa0] sm:$0xff]
  %v774 = vld [vmem:[#allocation4 + $0xa8] sm:$0xff]
  %v775 = vld [vmem:[#allocation4 + $0xb0] sm:$0xff]
  %v776 = vld [vmem:[#allocation4 + $0xb8] sm:$0xff]
  %v777 = vld [vmem:[#allocation4 + $0xc0] sm:$0xff]
  %v778 = vld [vmem:[#allocation4 + $0xc8] sm:$0xff]
  %v779 = vld [vmem:[#allocation4 + $0xd0] sm:$0xff]
  %v780 = vld [vmem:[#allocation4 + $0xd8] sm:$0xff]
  %v781 = vld [vmem:[#allocation4 + $0xe0] sm:$0xff]
  %v782 = vld [vmem:[#allocation4 + $0xe8] sm:$0xff]
  %v783 = vld [vmem:[#allocation4 + $0xf0] sm:$0xff]
  %v784 = vld [vmem:[#allocation4 + $0xf8] sm:$0xff]
  %v785 = vld [vmem:[#allocation4 + $0x100] sm:$0xff]
  %v786 = vld [vmem:[#allocation4 + $0x108] sm:$0xff]
  %v787 = vld [vmem:[#allocation4 + $0x110] sm:$0xff]
  %v788 = vld [vmem:[#allocation4 + $0x118] sm:$0xff]
  %v789 = vld [vmem:[#allocation4 + $0x120] sm:$0xff]
  %v790 = vld [vmem:[#allocation4 + $0x128] sm:$0xff]
  %v791 = vld [vmem:[#allocation4 + $0x130] sm:$0xff]
  %v792 = vld [vmem:[#allocation4 + $0x138] sm:$0xff]
  %v793 = vld [vmem:[#allocation4 + $0x140] sm:$0xff]
  %v794 = vld [vmem:[#allocation4 + $0x148] sm:$0xff]
  %v795 = vld [vmem:[#allocation4 + $0x150] sm:$0xff]
  %v796 = vld [vmem:[#allocation4 + $0x158] sm:$0xff]
  %v797 = vld [vmem:[#allocation4 + $0x160] sm:$0xff]
  %v798 = vld [vmem:[#allocation4 + $0x168] sm:$0xff]
  %v799 = vld [vmem:[#allocation4 + $0x170] sm:$0xff]
  %v800 = vld [vmem:[#allocation4 + $0x178] sm:$0xff]
  %v801 = vld [vmem:[#allocation4 + $0x180] sm:$0xff]
  %v802 = vld [vmem:[#allocation4 + $0x188] sm:$0xff]
  %v803 = vld [vmem:[#allocation4 + $0x190] sm:$0xff]
  %v804 = vld [vmem:[#allocation4 + $0x198] sm:$0xff]
  %v805 = vld [vmem:[#allocation4 + $0x1a0] sm:$0xff]
  %v806 = vld [vmem:[#allocation4 + $0x1a8] sm:$0xff]
  %v807 = vld [vmem:[#allocation4 + $0x1b0] sm:$0xff]
  %v808 = vld [vmem:[#allocation4 + $0x1b8] sm:$0xff]
  %v809 = vld [vmem:[#allocation4 + $0x1c0] sm:$0xff]
  %v810 = vld [vmem:[#allocation4 + $0x1c8] sm:$0xff]
  %v811 = vld [vmem:[#allocation4 + $0x1d0] sm:$0xff]
  %v812 = vld [vmem:[#allocation4 + $0x1d8] sm:$0xff]
  %v813 = vld [vmem:[#allocation4 + $0x1e0] sm:$0xff]
  %v814 = vld [vmem:[#allocation4 + $0x1e8] sm:$0xff]
  %v815 = vld [vmem:[#allocation4 + $0x1f0] sm:$0xff]
  %v816 = vld [vmem:[#allocation4 + $0x1f8] sm:$0xff]
  %v818 = vsel %vm364, %v753, 0
  %v821 = vsel %vm364, %v754, 0
  %v824 = vsel %vm364, %v755, 0
  %v827 = vsel %vm364, %v756, 0
  %v830 = vsel %vm364, %v757, 0
  %v833 = vsel %vm364, %v758, 0
  %v836 = vsel %vm364, %v759, 0
  %v839 = vsel %vm364, %v760, 0
  %v842 = vsel %vm364, %v761, 0
  %v845 = vsel %vm364, %v762, 0
  %v848 = vsel %vm364, %v763, 0
  %v851 = vsel %vm364, %v764, 0
  %v854 = vsel %vm364, %v765, 0
  %v857 = vsel %vm364, %v766, 0
  %v860 = vsel %vm364, %v767, 0
  %v863 = vsel %vm364, %v768, 0
  %v866 = vsel %vm364, %v769, 0
  %v869 = vsel %vm364, %v770, 0
  %v872 = vsel %vm364, %v771, 0
  %v875 = vsel %vm364, %v772, 0
  %v878 = vsel %vm364, %v773, 0
  %v881 = vsel %vm364, %v774, 0
  %v884 = vsel %vm364, %v775, 0
  %v887 = vsel %vm364, %v776, 0
  %v890 = vsel %vm364, %v777, 0
  %v893 = vsel %vm364, %v778, 0
  %v896 = vsel %vm364, %v779, 0
  %v899 = vsel %vm364, %v780, 0
  %v902 = vsel %vm364, %v781, 0
  %v905 = vsel %vm364, %v782, 0
  %v908 = vsel %vm364, %v783, 0
  %v911 = vsel %vm364, %v784, 0
  %v914 = vsel %vm364, %v785, 0
  %v917 = vsel %vm364, %v786, 0
  %v920 = vsel %vm364, %v787, 0
  %v923 = vsel %vm364, %v788, 0
  %v926 = vsel %vm364, %v789, 0
  %v929 = vsel %vm364, %v790, 0
  %v932 = vsel %vm364, %v791, 0
  %v935 = vsel %vm364, %v792, 0
  %v938 = vsel %vm364, %v793, 0
  %v941 = vsel %vm364, %v794, 0
  %v944 = vsel %vm364, %v795, 0
  %v947 = vsel %vm364, %v796, 0
  %v950 = vsel %vm364, %v797, 0
  %v953 = vsel %vm364, %v798, 0
  %v956 = vsel %vm364, %v799, 0
  %v959 = vsel %vm364, %v800, 0
  %v962 = vsel %vm364, %v801, 0
  %v965 = vsel %vm364, %v802, 0
  %v968 = vsel %vm364, %v803, 0
  %v971 = vsel %vm364, %v804, 0
  %v974 = vsel %vm364, %v805, 0
  %v977 = vsel %vm364, %v806, 0
  %v980 = vsel %vm364, %v807, 0
  %v983 = vsel %vm364, %v808, 0
  %v986 = vsel %vm364, %v809, 0
  %v989 = vsel %vm364, %v810, 0
  %v992 = vsel %vm364, %v811, 0
  %v995 = vsel %vm364, %v812, 0
  %v998 = vsel %vm364, %v813, 0
  %v1001 = vsel %vm364, %v814, 0
  %v1004 = vsel %vm364, %v815, 0
  %v1007 = vsel %vm364, %v816, 0
  %1009 = vmatprep.subr.mxu0 0.0
  %1010 = vmatpush1.msra.mxu0 %v245
  %1011 = vmatprep.subr.mxu0 0.0
  %1012 = vmatpush1.msra.mxu0 %v250
  %1013 = vmatprep.subr.mxu0 0.0
  %1014 = vmatpush1.msra.mxu0 0.0
  %1015 = vmatprep.subr.mxu0 0.0
  %1016 = vmatpush1.msra.mxu0 0.0
  %1017 = vmatprep.subr.mxu0 0.0
  %1018 = vmatpush1.msra.mxu0 0.0
  %1019 = vmatprep.subr.mxu0 0.0
  %1020 = vmatpush1.msra.mxu0 0.0
  %1021 = vmatprep.subr.mxu0 0.0
  %1022 = vmatpush1.msra.mxu0 0.0
  %1023 = vmatprep.subr.mxu0 0.0
  %1024 = vmatpush1.msra.mxu0 0.0
  %1025 = vmatprep.subr.mxu0 0.0
  %1026 = vmatpush1.msra.mxu0 0.0
  %1027 = vmatprep.subr.mxu0 0.0
  %1028 = vmatpush1.msra.mxu0 0.0
  %1029 = vmatprep.subr.mxu0 0.0
  %1030 = vmatpush1.msra.mxu0 0.0
  %1031 = vmatprep.subr.mxu0 0.0
  %1032 = vmatpush1.msra.mxu0 0.0
  %1033 = vmatprep.subr.mxu0 0.0
  %1034 = vmatpush1.msra.mxu0 0.0
  %1035 = vmatprep.subr.mxu0 0.0
  %1036 = vmatpush1.msra.mxu0 0.0
  %1037 = vmatprep.subr.mxu0 0.0
  %1038 = vmatpush1.msra.mxu0 0.0
  %1039 = vmatprep.subr.mxu0 0.0
  %1040 = vmatpush1.msra.mxu0 0.0
  %1041 = vmatprep.subr.mxu0 0.0
  %1042 = vmatpush1.msra.mxu0 0.0
  %1043 = vmatprep.subr.mxu0 0.0
  %1044 = vmatpush1.msra.mxu0 0.0
  %1045 = vmatprep.subr.mxu0 0.0
  %1046 = vmatpush1.msra.mxu0 0.0
  %1047 = vmatprep.subr.mxu0 0.0
  %1048 = vmatpush1.msra.mxu0 0.0
  %1049 = vmatprep.subr.mxu0 0.0
  %1050 = vmatpush1.msra.mxu0 0.0
  %1051 = vmatprep.subr.mxu0 0.0
  %1052 = vmatpush1.msra.mxu0 0.0
  %1053 = vmatprep.subr.mxu0 0.0
  %1054 = vmatpush1.msra.mxu0 0.0
  %1055 = vmatprep.subr.mxu0 0.0
  %1056 = vmatpush1.msra.mxu0 0.0
  %1057 = vmatprep.subr.mxu0 0.0
  %1058 = vmatpush1.msra.mxu0 0.0
  %1059 = vmatprep.subr.mxu0 0.0
  %1060 = vmatpush1.msra.mxu0 0.0
  %1061 = vmatprep.subr.mxu0 0.0
  %1062 = vmatpush1.msra.mxu0 0.0
  %1063 = vmatprep.subr.mxu0 0.0
  %1064 = vmatpush1.msra.mxu0 0.0
  %1065 = vmatprep.subr.mxu0 0.0
  %1066 = vmatpush1.msra.mxu0 0.0
  %1067 = vmatprep.subr.mxu0 0.0
  %1068 = vmatpush1.msra.mxu0 0.0
  %1069 = vmatprep.subr.mxu0 0.0
  %1070 = vmatpush1.msra.mxu0 0.0
  %1071 = vmatprep.subr.mxu0 0.0
  %1072 = vmatpush1.msra.mxu0 0.0
  %1073 = vmatprep.mubr.f32.mxu0 0.0
  %1074 = vmatmul.mubr.f32.gmra.mrb[0].mxu0 %v818
  %v1075 = vpop.f32.mrb[0].mxu0
  %v1076 = vadd.f32 0.0, %v1075
  %v1077 = vpop.f32.mrb[0].mxu0
  %1078 = vmatprep.mubr.f32.mxu0 0.0
  %1079 = vmatmul.mubr.f32.gmra.mrb[0].mxu0 %v821
  %v1080 = vpop.f32.mrb[0].mxu0
  %v1081 = vadd.f32 0.0, %v1080
  %v1082 = vpop.f32.mrb[0].mxu0
  %1083 = vmatprep.mubr.f32.mxu0 0.0
  %1084 = vmatmul.mubr.f32.gmra.mrb[0].mxu0 %v824
  %v1085 = vpop.f32.mrb[0].mxu0
  %v1086 = vadd.f32 0.0, %v1085
  %v1087 = vpop.f32.mrb[0].mxu0
  %1088 = vmatprep.mubr.f32.mxu0 0.0
  %1089 = vmatmul.mubr.f32.gmra.mrb[0].mxu0 %v827
  %v1090 = vpop.f32.mrb[0].mxu0
  %v1091 = vadd.f32 0.0, %v1090
  %v1092 = vpop.f32.mrb[0].mxu0
  %1093 = vmatprep.mubr.f32.mxu0 0.0
  %1094 = vmatmul.mubr.f32.gmra.mrb[0].mxu0 %v830
  %v1095 = vpop.f32.mrb[0].mxu0
  %v1096 = vadd.f32 0.0, %v1095
  %v1097 = vpop.f32.mrb[0].mxu0
  %1098 = vmatprep.mubr.f32.mxu0 0.0
  %1099 = vmatmul.mubr.f32.gmra.mrb[0].mxu0 %v833
  %v1100 = vpop.f32.mrb[0].mxu0
  %v1101 = vadd.f32 0.0, %v1100
  %v1102 = vpop.f32.mrb[0].mxu0
  %1103 = vmatprep.mubr.f32.mxu0 0.0
  %1104 = vmatmul.mubr.f32.gmra.mrb[0].mxu0 %v836
  %v1105 = vpop.f32.mrb[0].mxu0
  %v1106 = vadd.f32 0.0, %v1105
  %v1107 = vpop.f32.mrb[0].mxu0
  %1108 = vmatprep.mubr.f32.mxu0 0.0
  %1109 = vmatmul.mubr.f32.gmra.mrb[0].mxu0 %v839
  %v1110 = vpop.f32.mrb[0].mxu0
  %v1111 = vadd.f32 0.0, %v1110
  %v1112 = vpop.f32.mrb[0].mxu0
  %1113 = vmatprep.mubr.f32.mxu0 0.0
  %1114 = vmatmul.mubr.f32.gmra.mrb[0].mxu0 %v842
  %v1115 = vpop.f32.mrb[0].mxu0
  %v1116 = vadd.f32 0.0, %v1115
  %v1117 = vpop.f32.mrb[0].mxu0
  %1118 = vmatprep.mubr.f32.mxu0 0.0
  %1119 = vmatmul.mubr.f32.gmra.mrb[0].mxu0 %v845
  %v1120 = vpop.f32.mrb[0].mxu0
  %v1121 = vadd.f32 0.0, %v1120
  %v1122 = vpop.f32.mrb[0].mxu0
  %1123 = vmatprep.mubr.f32.mxu0 0.0
  %1124 = vmatmul.mubr.f32.gmra.mrb[0].mxu0 %v848
  %v1125 = vpop.f32.mrb[0].mxu0
  %v1126 = vadd.f32 0.0, %v1125
  %v1127 = vpop.f32.mrb[0].mxu0
  %1128 = vmatprep.mubr.f32.mxu0 0.0
  %1129 = vmatmul.mubr.f32.gmra.mrb[0].mxu0 %v851
  %v1130 = vpop.f32.mrb[0].mxu0
  %v1131 = vadd.f32 0.0, %v1130
  %v1132 = vpop.f32.mrb[0].mxu0
  %1133 = vmatprep.mubr.f32.mxu0 0.0
  %1134 = vmatmul.mubr.f32.gmra.mrb[0].mxu0 %v854
  %v1135 = vpop.f32.mrb[0].mxu0
  %v1136 = vadd.f32 0.0, %v1135
  %v1137 = vpop.f32.mrb[0].mxu0
  %1138 = vmatprep.mubr.f32.mxu0 0.0
  %1139 = vmatmul.mubr.f32.gmra.mrb[0].mxu0 %v857
  %v1140 = vpop.f32.mrb[0].mxu0
  %v1141 = vadd.f32 0.0, %v1140
  %v1142 = vpop.f32.mrb[0].mxu0
  %1143 = vmatprep.mubr.f32.mxu0 0.0
  %1144 = vmatmul.mubr.f32.gmra.mrb[0].mxu0 %v860
  %v1145 = vpop.f32.mrb[0].mxu0
  %v1146 = vadd.f32 0.0, %v1145
  %v1147 = vpop.f32.mrb[0].mxu0
  %1148 = vmatprep.mubr.f32.mxu0 0.0
  %1149 = vmatmul.mubr.f32.gmra.mrb[0].mxu0 %v863
  %v1150 = vpop.f32.mrb[0].mxu0
  %v1151 = vadd.f32 0.0, %v1150
  %v1152 = vpop.f32.mrb[0].mxu0
  %1153 = vmatprep.mubr.f32.mxu0 0.0
  %1154 = vmatmul.mubr.f32.gmra.mrb[0].mxu0 %v866
  %v1155 = vpop.f32.mrb[0].mxu0
  %v1156 = vadd.f32 0.0, %v1155
  %v1157 = vpop.f32.mrb[0].mxu0
  %1158 = vmatprep.mubr.f32.mxu0 0.0
  %1159 = vmatmul.mubr.f32.gmra.mrb[0].mxu0 %v869
  %v1160 = vpop.f32.mrb[0].mxu0
  %v1161 = vadd.f32 0.0, %v1160
  %v1162 = vpop.f32.mrb[0].mxu0
  %1163 = vmatprep.mubr.f32.mxu0 0.0
  %1164 = vmatmul.mubr.f32.gmra.mrb[0].mxu0 %v872
  %v1165 = vpop.f32.mrb[0].mxu0
  %v1166 = vadd.f32 0.0, %v1165
  %v1167 = vpop.f32.mrb[0].mxu0
  %1168 = vmatprep.mubr.f32.mxu0 0.0
  %1169 = vmatmul.mubr.f32.gmra.mrb[0].mxu0 %v875
  %v1170 = vpop.f32.mrb[0].mxu0
  %v1171 = vadd.f32 0.0, %v1170
  %v1172 = vpop.f32.mrb[0].mxu0
  %1173 = vmatprep.mubr.f32.mxu0 0.0
  %1174 = vmatmul.mubr.f32.gmra.mrb[0].mxu0 %v878
  %v1175 = vpop.f32.mrb[0].mxu0
  %v1176 = vadd.f32 0.0, %v1175
  %v1177 = vpop.f32.mrb[0].mxu0
  %1178 = vmatprep.mubr.f32.mxu0 0.0
  %1179 = vmatmul.mubr.f32.gmra.mrb[0].mxu0 %v881
  %v1180 = vpop.f32.mrb[0].mxu0
  %v1181 = vadd.f32 0.0, %v1180
  %v1182 = vpop.f32.mrb[0].mxu0
  %1183 = vmatprep.mubr.f32.mxu0 0.0
  %1184 = vmatmul.mubr.f32.gmra.mrb[0].mxu0 %v884
  %v1185 = vpop.f32.mrb[0].mxu0
  %v1186 = vadd.f32 0.0, %v1185
  %v1187 = vpop.f32.mrb[0].mxu0
  %1188 = vmatprep.mubr.f32.mxu0 0.0
  %1189 = vmatmul.mubr.f32.gmra.mrb[0].mxu0 %v887
  %v1190 = vpop.f32.mrb[0].mxu0
  %v1191 = vadd.f32 0.0, %v1190
  %v1192 = vpop.f32.mrb[0].mxu0
  %1193 = vmatprep.mubr.f32.mxu0 0.0
  %1194 = vmatmul.mubr.f32.gmra.mrb[0].mxu0 %v890
  %v1195 = vpop.f32.mrb[0].mxu0
  %v1196 = vadd.f32 0.0, %v1195
  %v1197 = vpop.f32.mrb[0].mxu0
  %1198 = vmatprep.mubr.f32.mxu0 0.0
  %1199 = vmatmul.mubr.f32.gmra.mrb[0].mxu0 %v893
  %v1200 = vpop.f32.mrb[0].mxu0
  %v1201 = vadd.f32 0.0, %v1200
  %v1202 = vpop.f32.mrb[0].mxu0
  %1203 = vmatprep.mubr.f32.mxu0 0.0
  %1204 = vmatmul.mubr.f32.gmra.mrb[0].mxu0 %v896
  %v1205 = vpop.f32.mrb[0].mxu0
  %v1206 = vadd.f32 0.0, %v1205
  %v1207 = vpop.f32.mrb[0].mxu0
  %1208 = vmatprep.mubr.f32.mxu0 0.0
  %1209 = vmatmul.mubr.f32.gmra.mrb[0].mxu0 %v899
  %v1210 = vpop.f32.mrb[0].mxu0
  %v1211 = vadd.f32 0.0, %v1210
  %v1212 = vpop.f32.mrb[0].mxu0
  %1213 = vmatprep.mubr.f32.mxu0 0.0
  %1214 = vmatmul.mubr.f32.gmra.mrb[0].mxu0 %v902
  %v1215 = vpop.f32.mrb[0].mxu0
  %v1216 = vadd.f32 0.0, %v1215
  %v1217 = vpop.f32.mrb[0].mxu0
  %1218 = vmatprep.mubr.f32.mxu0 0.0
  %1219 = vmatmul.mubr.f32.gmra.mrb[0].mxu0 %v905
  %v1220 = vpop.f32.mrb[0].mxu0
  %v1221 = vadd.f32 0.0, %v1220
  %v1222 = vpop.f32.mrb[0].mxu0
  %1223 = vmatprep.mubr.f32.mxu0 0.0
  %1224 = vmatmul.mubr.f32.gmra.mrb[0].mxu0 %v908
  %v1225 = vpop.f32.mrb[0].mxu0
  %v1226 = vadd.f32 0.0, %v1225
  %v1227 = vpop.f32.mrb[0].mxu0
  %1228 = vmatprep.mubr.f32.mxu0 0.0
  %1229 = vmatmul.mubr.f32.gmra.mrb[0].mxu0 %v911
  %v1230 = vpop.f32.mrb[0].mxu0
  %v1231 = vadd.f32 0.0, %v1230
  %v1232 = vpop.f32.mrb[0].mxu0
  %1233 = vmatprep.mubr.f32.mxu0 0.0
  %1234 = vmatmul.mubr.f32.gmra.mrb[0].mxu0 %v914
  %v1235 = vpop.f32.mrb[0].mxu0
  %v1236 = vadd.f32 0.0, %v1235
  %v1237 = vpop.f32.mrb[0].mxu0
  %1238 = vmatprep.mubr.f32.mxu0 0.0
  %1239 = vmatmul.mubr.f32.gmra.mrb[0].mxu0 %v917
  %v1240 = vpop.f32.mrb[0].mxu0
  %v1241 = vadd.f32 0.0, %v1240
  %v1242 = vpop.f32.mrb[0].mxu0
  %1243 = vmatprep.mubr.f32.mxu0 0.0
  %1244 = vmatmul.mubr.f32.gmra.mrb[0].mxu0 %v920
  %v1245 = vpop.f32.mrb[0].mxu0
  %v1246 = vadd.f32 0.0, %v1245
  %v1247 = vpop.f32.mrb[0].mxu0
  %1248 = vmatprep.mubr.f32.mxu0 0.0
  %1249 = vmatmul.mubr.f32.gmra.mrb[0].mxu0 %v923
  %v1250 = vpop.f32.mrb[0].mxu0
  %v1251 = vadd.f32 0.0, %v1250
  %v1252 = vpop.f32.mrb[0].mxu0
  %1253 = vmatprep.mubr.f32.mxu0 0.0
  %1254 = vmatmul.mubr.f32.gmra.mrb[0].mxu0 %v926
  %v1255 = vpop.f32.mrb[0].mxu0
  %v1256 = vadd.f32 0.0, %v1255
  %v1257 = vpop.f32.mrb[0].mxu0
  %1258 = vmatprep.mubr.f32.mxu0 0.0
  %1259 = vmatmul.mubr.f32.gmra.mrb[0].mxu0 %v929
  %v1260 = vpop.f32.mrb[0].mxu0
  %v1261 = vadd.f32 0.0, %v1260
  %v1262 = vpop.f32.mrb[0].mxu0
  %1263 = vmatprep.mubr.f32.mxu0 0.0
  %1264 = vmatmul.mubr.f32.gmra.mrb[0].mxu0 %v932
  %v1265 = vpop.f32.mrb[0].mxu0
  %v1266 = vadd.f32 0.0, %v1265
  %v1267 = vpop.f32.mrb[0].mxu0
  %1268 = vmatprep.mubr.f32.mxu0 0.0
  %1269 = vmatmul.mubr.f32.gmra.mrb[0].mxu0 %v935
  %v1270 = vpop.f32.mrb[0].mxu0
  %v1271 = vadd.f32 0.0, %v1270
  %v1272 = vpop.f32.mrb[0].mxu0
  %1273 = vmatprep.mubr.f32.mxu0 0.0
  %1274 = vmatmul.mubr.f32.gmra.mrb[0].mxu0 %v938
  %v1275 = vpop.f32.mrb[0].mxu0
  %v1276 = vadd.f32 0.0, %v1275
  %v1277 = vpop.f32.mrb[0].mxu0
  %1278 = vmatprep.mubr.f32.mxu0 0.0
  %1279 = vmatmul.mubr.f32.gmra.mrb[0].mxu0 %v941
  %v1280 = vpop.f32.mrb[0].mxu0
  %v1281 = vadd.f32 0.0, %v1280
  %v1282 = vpop.f32.mrb[0].mxu0
  %1283 = vmatprep.mubr.f32.mxu0 0.0
  %1284 = vmatmul.mubr.f32.gmra.mrb[0].mxu0 %v944
  %v1285 = vpop.f32.mrb[0].mxu0
  %v1286 = vadd.f32 0.0, %v1285
  %v1287 = vpop.f32.mrb[0].mxu0
  %1288 = vmatprep.mubr.f32.mxu0 0.0
  %1289 = vmatmul.mubr.f32.gmra.mrb[0].mxu0 %v947
  %v1290 = vpop.f32.mrb[0].mxu0
  %v1291 = vadd.f32 0.0, %v1290
  %v1292 = vpop.f32.mrb[0].mxu0
  %1293 = vmatprep.mubr.f32.mxu0 0.0
  %1294 = vmatmul.mubr.f32.gmra.mrb[0].mxu0 %v950
  %v1295 = vpop.f32.mrb[0].mxu0
  %v1296 = vadd.f32 0.0, %v1295
  %v1297 = vpop.f32.mrb[0].mxu0
  %1298 = vmatprep.mubr.f32.mxu0 0.0
  %1299 = vmatmul.mubr.f32.gmra.mrb[0].mxu0 %v953
  %v1300 = vpop.f32.mrb[0].mxu0
  %v1301 = vadd.f32 0.0, %v1300
  %v1302 = vpop.f32.mrb[0].mxu0
  %1303 = vmatprep.mubr.f32.mxu0 0.0
  %1304 = vmatmul.mubr.f32.gmra.mrb[0].mxu0 %v956
  %v1305 = vpop.f32.mrb[0].mxu0
  %v1306 = vadd.f32 0.0, %v1305
  %v1307 = vpop.f32.mrb[0].mxu0
  %1308 = vmatprep.mubr.f32.mxu0 0.0
  %1309 = vmatmul.mubr.f32.gmra.mrb[0].mxu0 %v959
  %v1310 = vpop.f32.mrb[0].mxu0
  %v1311 = vadd.f32 0.0, %v1310
  %v1312 = vpop.f32.mrb[0].mxu0
  %1313 = vmatprep.mubr.f32.mxu0 0.0
  %1314 = vmatmul.mubr.f32.gmra.mrb[0].mxu0 %v962
  %v1315 = vpop.f32.mrb[0].mxu0
  %v1316 = vadd.f32 0.0, %v1315
  %v1317 = vpop.f32.mrb[0].mxu0
  %1318 = vmatprep.mubr.f32.mxu0 0.0
  %1319 = vmatmul.mubr.f32.gmra.mrb[0].mxu0 %v965
  %v1320 = vpop.f32.mrb[0].mxu0
  %v1321 = vadd.f32 0.0, %v1320
  %v1322 = vpop.f32.mrb[0].mxu0
  %1323 = vmatprep.mubr.f32.mxu0 0.0
  %1324 = vmatmul.mubr.f32.gmra.mrb[0].mxu0 %v968
  %v1325 = vpop.f32.mrb[0].mxu0
  %v1326 = vadd.f32 0.0, %v1325
  %v1327 = vpop.f32.mrb[0].mxu0
  %1328 = vmatprep.mubr.f32.mxu0 0.0
  %1329 = vmatmul.mubr.f32.gmra.mrb[0].mxu0 %v971
  %v1330 = vpop.f32.mrb[0].mxu0
  %v1331 = vadd.f32 0.0, %v1330
  %v1332 = vpop.f32.mrb[0].mxu0
  %1333 = vmatprep.mubr.f32.mxu0 0.0
  %1334 = vmatmul.mubr.f32.gmra.mrb[0].mxu0 %v974
  %v1335 = vpop.f32.mrb[0].mxu0
  %v1336 = vadd.f32 0.0, %v1335
  %v1337 = vpop.f32.mrb[0].mxu0
  %1338 = vmatprep.mubr.f32.mxu0 0.0
  %1339 = vmatmul.mubr.f32.gmra.mrb[0].mxu0 %v977
  %v1340 = vpop.f32.mrb[0].mxu0
  %v1341 = vadd.f32 0.0, %v1340
  %v1342 = vpop.f32.mrb[0].mxu0
  %1343 = vmatprep.mubr.f32.mxu0 0.0
  %1344 = vmatmul.mubr.f32.gmra.mrb[0].mxu0 %v980
  %v1345 = vpop.f32.mrb[0].mxu0
  %v1346 = vadd.f32 0.0, %v1345
  %v1347 = vpop.f32.mrb[0].mxu0
  %1348 = vmatprep.mubr.f32.mxu0 0.0
  %1349 = vmatmul.mubr.f32.gmra.mrb[0].mxu0 %v983
  %v1350 = vpop.f32.mrb[0].mxu0
  %v1351 = vadd.f32 0.0, %v1350
  %v1352 = vpop.f32.mrb[0].mxu0
  %1353 = vmatprep.mubr.f32.mxu0 0.0
  %1354 = vmatmul.mubr.f32.gmra.mrb[0].mxu0 %v986
  %v1355 = vpop.f32.mrb[0].mxu0
  %v1356 = vadd.f32 0.0, %v1355
  %v1357 = vpop.f32.mrb[0].mxu0
  %1358 = vmatprep.mubr.f32.mxu0 0.0
  %1359 = vmatmul.mubr.f32.gmra.mrb[0].mxu0 %v989
  %v1360 = vpop.f32.mrb[0].mxu0
  %v1361 = vadd.f32 0.0, %v1360
  %v1362 = vpop.f32.mrb[0].mxu0
  %1363 = vmatprep.mubr.f32.mxu0 0.0
  %1364 = vmatmul.mubr.f32.gmra.mrb[0].mxu0 %v992
  %v1365 = vpop.f32.mrb[0].mxu0
  %v1366 = vadd.f32 0.0, %v1365
  %v1367 = vpop.f32.mrb[0].mxu0
  %1368 = vmatprep.mubr.f32.mxu0 0.0
  %1369 = vmatmul.mubr.f32.gmra.mrb[0].mxu0 %v995
  %v1370 = vpop.f32.mrb[0].mxu0
  %v1371 = vadd.f32 0.0, %v1370
  %v1372 = vpop.f32.mrb[0].mxu0
  %1373 = vmatprep.mubr.f32.mxu0 0.0
  %1374 = vmatmul.mubr.f32.gmra.mrb[0].mxu0 %v998
  %v1375 = vpop.f32.mrb[0].mxu0
  %v1376 = vadd.f32 0.0, %v1375
  %v1377 = vpop.f32.mrb[0].mxu0
  %1378 = vmatprep.mubr.f32.mxu0 0.0
  %1379 = vmatmul.mubr.f32.gmra.mrb[0].mxu0 %v1001
  %v1380 = vpop.f32.mrb[0].mxu0
  %v1381 = vadd.f32 0.0, %v1380
  %v1382 = vpop.f32.mrb[0].mxu0
  %1383 = vmatprep.mubr.f32.mxu0 0.0
  %1384 = vmatmul.mubr.f32.gmra.mrb[0].mxu0 %v1004
  %v1385 = vpop.f32.mrb[0].mxu0
  %v1386 = vadd.f32 0.0, %v1385
  %v1387 = vpop.f32.mrb[0].mxu0
  %1388 = vmatprep.mubr.f32.mxu0 0.0
  %1389 = vmatmul.mubr.f32.gmra.mrb[0].mxu0 %v1007
  %v1390 = vpop.f32.mrb[0].mxu0
  %v1391 = vadd.f32 0.0, %v1390
  %v1392 = vpop.f32.mrb[0].mxu0
  %1393 = vdwg.mxu0
  %v1394 = vsel %vm357, %v1076, -inf
  %1395 = vmax.xlane.f32.xlu0 %v1394
  %v1396 = vpop.xlane.xlu0 %1395
  %v1397 = vsel %vm357, %v1081, -inf
  %1398 = vmax.xlane.f32.xlu0 %v1397
  %v1399 = vpop.xlane.xlu0 %1398
  %v1400 = vsel %vm357, %v1086, -inf
  %1401 = vmax.xlane.f32.xlu0 %v1400
  %v1402 = vpop.xlane.xlu0 %1401
  %v1403 = vsel %vm357, %v1091, -inf
  %1404 = vmax.xlane.f32.xlu0 %v1403
  %v1405 = vpop.xlane.xlu0 %1404
  %v1406 = vsel %vm357, %v1096, -inf
  %1407 = vmax.xlane.f32.xlu0 %v1406
  %v1408 = vpop.xlane.xlu0 %1407
  %v1409 = vsel %vm357, %v1101, -inf
  %1410 = vmax.xlane.f32.xlu0 %v1409
  %v1411 = vpop.xlane.xlu0 %1410
  %v1412 = vsel %vm357, %v1106, -inf
  %1413 = vmax.xlane.f32.xlu0 %v1412
  %v1414 = vpop.xlane.xlu0 %1413
  %v1415 = vsel %vm357, %v1111, -inf
  %1416 = vmax.xlane.f32.xlu0 %v1415
  %v1417 = vpop.xlane.xlu0 %1416
  %v1418 = vsel %vm357, %v1116, -inf
  %1419 = vmax.xlane.f32.xlu0 %v1418
  %v1420 = vpop.xlane.xlu0 %1419
  %v1421 = vsel %vm357, %v1121, -inf
  %1422 = vmax.xlane.f32.xlu0 %v1421
  %v1423 = vpop.xlane.xlu0 %1422
  %v1424 = vsel %vm357, %v1126, -inf
  %1425 = vmax.xlane.f32.xlu0 %v1424
  %v1426 = vpop.xlane.xlu0 %1425
  %v1427 = vsel %vm357, %v1131, -inf
  %1428 = vmax.xlane.f32.xlu0 %v1427
  %v1429 = vpop.xlane.xlu0 %1428
  %v1430 = vsel %vm357, %v1136, -inf
  %1431 = vmax.xlane.f32.xlu0 %v1430
  %v1432 = vpop.xlane.xlu0 %1431
  %v1433 = vsel %vm357, %v1141, -inf
  %1434 = vmax.xlane.f32.xlu0 %v1433
  %v1435 = vpop.xlane.xlu0 %1434
  %v1436 = vsel %vm357, %v1146, -inf
  %1437 = vmax.xlane.f32.xlu0 %v1436
  %v1438 = vpop.xlane.xlu0 %1437
  %v1439 = vsel %vm357, %v1151, -inf
  %1440 = vmax.xlane.f32.xlu0 %v1439
  %v1441 = vpop.xlane.xlu0 %1440
  %v1442 = vsel %vm357, %v1156, -inf
  %1443 = vmax.xlane.f32.xlu0 %v1442
  %v1444 = vpop.xlane.xlu0 %1443
  %v1445 = vsel %vm357, %v1161, -inf
  %1446 = vmax.xlane.f32.xlu0 %v1445
  %v1447 = vpop.xlane.xlu0 %1446
  %v1448 = vsel %vm357, %v1166, -inf
  %1449 = vmax.xlane.f32.xlu0 %v1448
  %v1450 = vpop.xlane.xlu0 %1449
  %v1451 = vsel %vm357, %v1171, -inf
  %1452 = vmax.xlane.f32.xlu0 %v1451
  %v1453 = vpop.xlane.xlu0 %1452
  %v1454 = vsel %vm357, %v1176, -inf
  %1455 = vmax.xlane.f32.xlu0 %v1454
  %v1456 = vpop.xlane.xlu0 %1455
  %v1457 = vsel %vm357, %v1181, -inf
  %1458 = vmax.xlane.f32.xlu0 %v1457
  %v1459 = vpop.xlane.xlu0 %1458
  %v1460 = vsel %vm357, %v1186, -inf
  %1461 = vmax.xlane.f32.xlu0 %v1460
  %v1462 = vpop.xlane.xlu0 %1461
  %v1463 = vsel %vm357, %v1191, -inf
  %1464 = vmax.xlane.f32.xlu0 %v1463
  %v1465 = vpop.xlane.xlu0 %1464
  %v1466 = vsel %vm357, %v1196, -inf
  %1467 = vmax.xlane.f32.xlu0 %v1466
  %v1468 = vpop.xlane.xlu0 %1467
  %v1469 = vsel %vm357, %v1201, -inf
  %1470 = vmax.xlane.f32.xlu0 %v1469
  %v1471 = vpop.xlane.xlu0 %1470
  %v1472 = vsel %vm357, %v1206, -inf
  %1473 = vmax.xlane.f32.xlu0 %v1472
  %v1474 = vpop.xlane.xlu0 %1473
  %v1475 = vsel %vm357, %v1211, -inf
  %1476 = vmax.xlane.f32.xlu0 %v1475
  %v1477 = vpop.xlane.xlu0 %1476
  %v1478 = vsel %vm357, %v1216, -inf
  %1479 = vmax.xlane.f32.xlu0 %v1478
  %v1480 = vpop.xlane.xlu0 %1479
  %v1481 = vsel %vm357, %v1221, -inf
  %1482 = vmax.xlane.f32.xlu0 %v1481
  %v1483 = vpop.xlane.xlu0 %1482
  %v1484 = vsel %vm357, %v1226, -inf
  %1485 = vmax.xlane.f32.xlu0 %v1484
  %v1486 = vpop.xlane.xlu0 %1485
  %v1487 = vsel %vm357, %v1231, -inf
  %1488 = vmax.xlane.f32.xlu0 %v1487
  %v1489 = vpop.xlane.xlu0 %1488
  %v1490 = vsel %vm357, %v1236, -inf
  %1491 = vmax.xlane.f32.xlu0 %v1490
  %v1492 = vpop.xlane.xlu0 %1491
  %v1493 = vsel %vm357, %v1241, -inf
  %1494 = vmax.xlane.f32.xlu0 %v1493
  %v1495 = vpop.xlane.xlu0 %1494
  %v1496 = vsel %vm357, %v1246, -inf
  %1497 = vmax.xlane.f32.xlu0 %v1496
  %v1498 = vpop.xlane.xlu0 %1497
  %v1499 = vsel %vm357, %v1251, -inf
  %1500 = vmax.xlane.f32.xlu0 %v1499
  %v1501 = vpop.xlane.xlu0 %1500
  %v1502 = vsel %vm357, %v1256, -inf
  %1503 = vmax.xlane.f32.xlu0 %v1502
  %v1504 = vpop.xlane.xlu0 %1503
  %v1505 = vsel %vm357, %v1261, -inf
  %1506 = vmax.xlane.f32.xlu0 %v1505
  %v1507 = vpop.xlane.xlu0 %1506
  %v1508 = vsel %vm357, %v1266, -inf
  %1509 = vmax.xlane.f32.xlu0 %v1508
  %v1510 = vpop.xlane.xlu0 %1509
  %v1511 = vsel %vm357, %v1271, -inf
  %1512 = vmax.xlane.f32.xlu0 %v1511
  %v1513 = vpop.xlane.xlu0 %1512
  %v1514 = vsel %vm357, %v1276, -inf
  %1515 = vmax.xlane.f32.xlu0 %v1514
  %v1516 = vpop.xlane.xlu0 %1515
  %v1517 = vsel %vm357, %v1281, -inf
  %1518 = vmax.xlane.f32.xlu0 %v1517
  %v1519 = vpop.xlane.xlu0 %1518
  %v1520 = vsel %vm357, %v1286, -inf
  %1521 = vmax.xlane.f32.xlu0 %v1520
  %v1522 = vpop.xlane.xlu0 %1521
  %v1523 = vsel %vm357, %v1291, -inf
  %1524 = vmax.xlane.f32.xlu0 %v1523
  %v1525 = vpop.xlane.xlu0 %1524
  %v1526 = vsel %vm357, %v1296, -inf
  %1527 = vmax.xlane.f32.xlu0 %v1526
  %v1528 = vpop.xlane.xlu0 %1527
  %v1529 = vsel %vm357, %v1301, -inf
  %1530 = vmax.xlane.f32.xlu0 %v1529
  %v1531 = vpop.xlane.xlu0 %1530
  %v1532 = vsel %vm357, %v1306, -inf
  %1533 = vmax.xlane.f32.xlu0 %v1532
  %v1534 = vpop.xlane.xlu0 %1533
  %v1535 = vsel %vm357, %v1311, -inf
  %1536 = vmax.xlane.f32.xlu0 %v1535
  %v1537 = vpop.xlane.xlu0 %1536
  %v1538 = vsel %vm357, %v1316, -inf
  %1539 = vmax.xlane.f32.xlu0 %v1538
  %v1540 = vpop.xlane.xlu0 %1539
  %v1541 = vsel %vm357, %v1321, -inf
  %1542 = vmax.xlane.f32.xlu0 %v1541
  %v1543 = vpop.xlane.xlu0 %1542
  %v1544 = vsel %vm357, %v1326, -inf
  %1545 = vmax.xlane.f32.xlu0 %v1544
  %v1546 = vpop.xlane.xlu0 %1545
  %v1547 = vsel %vm357, %v1331, -inf
  %1548 = vmax.xlane.f32.xlu0 %v1547
  %v1549 = vpop.xlane.xlu0 %1548
  %v1550 = vsel %vm357, %v1336, -inf
  %1551 = vmax.xlane.f32.xlu0 %v1550
  %v1552 = vpop.xlane.xlu0 %1551
  %v1553 = vsel %vm357, %v1341, -inf
  %1554 = vmax.xlane.f32.xlu0 %v1553
  %v1555 = vpop.xlane.xlu0 %1554
  %v1556 = vsel %vm357, %v1346, -inf
  %1557 = vmax.xlane.f32.xlu0 %v1556
  %v1558 = vpop.xlane.xlu0 %1557
  %v1559 = vsel %vm357, %v1351, -inf
  %1560 = vmax.xlane.f32.xlu0 %v1559
  %v1561 = vpop.xlane.xlu0 %1560
  %v1562 = vsel %vm357, %v1356, -inf
  %1563 = vmax.xlane.f32.xlu0 %v1562
  %v1564 = vpop.xlane.xlu0 %1563
  %v1565 = vsel %vm357, %v1361, -inf
  %1566 = vmax.xlane.f32.xlu0 %v1565
  %v1567 = vpop.xlane.xlu0 %1566
  %v1568 = vsel %vm357, %v1366, -inf
  %1569 = vmax.xlane.f32.xlu0 %v1568
  %v1570 = vpop.xlane.xlu0 %1569
  %v1571 = vsel %vm357, %v1371, -inf
  %1572 = vmax.xlane.f32.xlu0 %v1571
  %v1573 = vpop.xlane.xlu0 %1572
  %v1574 = vsel %vm357, %v1376, -inf
  %1575 = vmax.xlane.f32.xlu0 %v1574
  %v1576 = vpop.xlane.xlu0 %1575
  %v1577 = vsel %vm357, %v1381, -inf
  %1578 = vmax.xlane.f32.xlu0 %v1577
  %v1579 = vpop.xlane.xlu0 %1578
  %v1580 = vsel %vm357, %v1386, -inf
  %1581 = vmax.xlane.f32.xlu0 %v1580
  %v1582 = vpop.xlane.xlu0 %1581
  %v1583 = vsel %vm357, %v1391, -inf
  %1584 = vmax.xlane.f32.xlu0 %v1583
  %v1585 = vpop.xlane.xlu0 %1584
  %v1586 = vsub.f32 %v1076, %v1396
  %v1587 = vsub.f32 %v1081, %v1399
  %v1588 = vsub.f32 %v1086, %v1402
  %v1589 = vsub.f32 %v1091, %v1405
  %v1590 = vsub.f32 %v1096, %v1408
  %v1591 = vsub.f32 %v1101, %v1411
  %v1592 = vsub.f32 %v1106, %v1414
  %v1593 = vsub.f32 %v1111, %v1417
  %v1594 = vsub.f32 %v1116, %v1420
  %v1595 = vsub.f32 %v1121, %v1423
  %v1596 = vsub.f32 %v1126, %v1426
  %v1597 = vsub.f32 %v1131, %v1429
  %v1598 = vsub.f32 %v1136, %v1432
  %v1599 = vsub.f32 %v1141, %v1435
  %v1600 = vsub.f32 %v1146, %v1438
  %v1601 = vsub.f32 %v1151, %v1441
  %v1602 = vsub.f32 %v1156, %v1444
  %v1603 = vsub.f32 %v1161, %v1447
  %v1604 = vsub.f32 %v1166, %v1450
  %v1605 = vsub.f32 %v1171, %v1453
  %v1606 = vsub.f32 %v1176, %v1456
  %v1607 = vsub.f32 %v1181, %v1459
  %v1608 = vsub.f32 %v1186, %v1462
  %v1609 = vsub.f32 %v1191, %v1465
  %v1610 = vsub.f32 %v1196, %v1468
  %v1611 = vsub.f32 %v1201, %v1471
  %v1612 = vsub.f32 %v1206, %v1474
  %v1613 = vsub.f32 %v1211, %v1477
  %v1614 = vsub.f32 %v1216, %v1480
  %v1615 = vsub.f32 %v1221, %v1483
  %v1616 = vsub.f32 %v1226, %v1486
  %v1617 = vsub.f32 %v1231, %v1489
  %v1618 = vsub.f32 %v1236, %v1492
  %v1619 = vsub.f32 %v1241, %v1495
  %v1620 = vsub.f32 %v1246, %v1498
  %v1621 = vsub.f32 %v1251, %v1501
  %v1622 = vsub.f32 %v1256, %v1504
  %v1623 = vsub.f32 %v1261, %v1507
  %v1624 = vsub.f32 %v1266, %v1510
  %v1625 = vsub.f32 %v1271, %v1513
  %v1626 = vsub.f32 %v1276, %v1516
  %v1627 = vsub.f32 %v1281, %v1519
  %v1628 = vsub.f32 %v1286, %v1522
  %v1629 = vsub.f32 %v1291, %v1525
  %v1630 = vsub.f32 %v1296, %v1528
  %v1631 = vsub.f32 %v1301, %v1531
  %v1632 = vsub.f32 %v1306, %v1534
  %v1633 = vsub.f32 %v1311, %v1537
  %v1634 = vsub.f32 %v1316, %v1540
  %v1635 = vsub.f32 %v1321, %v1543
  %v1636 = vsub.f32 %v1326, %v1546
  %v1637 = vsub.f32 %v1331, %v1549
  %v1638 = vsub.f32 %v1336, %v1552
  %v1639 = vsub.f32 %v1341, %v1555
  %v1640 = vsub.f32 %v1346, %v1558
  %v1641 = vsub.f32 %v1351, %v1561
  %v1642 = vsub.f32 %v1356, %v1564
  %v1643 = vsub.f32 %v1361, %v1567
  %v1644 = vsub.f32 %v1366, %v1570
  %v1645 = vsub.f32 %v1371, %v1573
  %v1646 = vsub.f32 %v1376, %v1576
  %v1647 = vsub.f32 %v1381, %v1579
  %v1648 = vsub.f32 %v1386, %v1582
  %v1649 = vsub.f32 %v1391, %v1585
  %v1650 = vmul.f32 %v1586, 1.442695
  %v1651 = vpow.pop %v1650
  %v1652 = vmul.f32 %v1587, 1.442695
  %v1653 = vpow.pop %v1652
  %v1654 = vmul.f32 %v1588, 1.442695
  %v1655 = vpow.pop %v1654
  %v1656 = vmul.f32 %v1589, 1.442695
  %v1657 = vpow.pop %v1656
  %v1658 = vmul.f32 %v1590, 1.442695
  %v1659 = vpow.pop %v1658
  %v1660 = vmul.f32 %v1591, 1.442695
  %v1661 = vpow.pop %v1660
  %v1662 = vmul.f32 %v1592, 1.442695
  %v1663 = vpow.pop %v1662
  %v1664 = vmul.f32 %v1593, 1.442695
  %v1665 = vpow.pop %v1664
  %v1666 = vmul.f32 %v1594, 1.442695
  %v1667 = vpow.pop %v1666
  %v1668 = vmul.f32 %v1595, 1.442695
  %v1669 = vpow.pop %v1668
  %v1670 = vmul.f32 %v1596, 1.442695
  %v1671 = vpow.pop %v1670
  %v1672 = vmul.f32 %v1597, 1.442695
  %v1673 = vpow.pop %v1672
  %v1674 = vmul.f32 %v1598, 1.442695
  %v1675 = vpow.pop %v1674
  %v1676 = vmul.f32 %v1599, 1.442695
  %v1677 = vpow.pop %v1676
  %v1678 = vmul.f32 %v1600, 1.442695
  %v1679 = vpow.pop %v1678
  %v1680 = vmul.f32 %v1601, 1.442695
  %v1681 = vpow.pop %v1680
  %v1682 = vmul.f32 %v1602, 1.442695
  %v1683 = vpow.pop %v1682
  %v1684 = vmul.f32 %v1603, 1.442695
  %v1685 = vpow.pop %v1684
  %v1686 = vmul.f32 %v1604, 1.442695
  %v1687 = vpow.pop %v1686
  %v1688 = vmul.f32 %v1605, 1.442695
  %v1689 = vpow.pop %v1688
  %v1690 = vmul.f32 %v1606, 1.442695
  %v1691 = vpow.pop %v1690
  %v1692 = vmul.f32 %v1607, 1.442695
  %v1693 = vpow.pop %v1692
  %v1694 = vmul.f32 %v1608, 1.442695
  %v1695 = vpow.pop %v1694
  %v1696 = vmul.f32 %v1609, 1.442695
  %v1697 = vpow.pop %v1696
  %v1698 = vmul.f32 %v1610, 1.442695
  %v1699 = vpow.pop %v1698
  %v1700 = vmul.f32 %v1611, 1.442695
  %v1701 = vpow.pop %v1700
  %v1702 = vmul.f32 %v1612, 1.442695
  %v1703 = vpow.pop %v1702
  %v1704 = vmul.f32 %v1613, 1.442695
  %v1705 = vpow.pop %v1704
  %v1706 = vmul.f32 %v1614, 1.442695
  %v1707 = vpow.pop %v1706
  %v1708 = vmul.f32 %v1615, 1.442695
  %v1709 = vpow.pop %v1708
  %v1710 = vmul.f32 %v1616, 1.442695
  %v1711 = vpow.pop %v1710
  %v1712 = vmul.f32 %v1617, 1.442695
  %v1713 = vpow.pop %v1712
  %v1714 = vmul.f32 %v1618, 1.442695
  %v1715 = vpow.pop %v1714
  %v1716 = vmul.f32 %v1619, 1.442695
  %v1717 = vpow.pop %v1716
  %v1718 = vmul.f32 %v1620, 1.442695
  %v1719 = vpow.pop %v1718
  %v1720 = vmul.f32 %v1621, 1.442695
  %v1721 = vpow.pop %v1720
  %v1722 = vmul.f32 %v1622, 1.442695
  %v1723 = vpow.pop %v1722
  %v1724 = vmul.f32 %v1623, 1.442695
  %v1725 = vpow.pop %v1724
  %v1726 = vmul.f32 %v1624, 1.442695
  %v1727 = vpow.pop %v1726
  %v1728 = vmul.f32 %v1625, 1.442695
  %v1729 = vpow.pop %v1728
  %v1730 = vmul.f32 %v1626, 1.442695
  %v1731 = vpow.pop %v1730
  %v1732 = vmul.f32 %v1627, 1.442695
  %v1733 = vpow.pop %v1732
  %v1734 = vmul.f32 %v1628, 1.442695
  %v1735 = vpow.pop %v1734
  %v1736 = vmul.f32 %v1629, 1.442695
  %v1737 = vpow.pop %v1736
  %v1738 = vmul.f32 %v1630, 1.442695
  %v1739 = vpow.pop %v1738
  %v1740 = vmul.f32 %v1631, 1.442695
  %v1741 = vpow.pop %v1740
  %v1742 = vmul.f32 %v1632, 1.442695
  %v1743 = vpow.pop %v1742
  %v1744 = vmul.f32 %v1633, 1.442695
  %v1745 = vpow.pop %v1744
  %v1746 = vmul.f32 %v1634, 1.442695
  %v1747 = vpow.pop %v1746
  %v1748 = vmul.f32 %v1635, 1.442695
  %v1749 = vpow.pop %v1748
  %v1750 = vmul.f32 %v1636, 1.442695
  %v1751 = vpow.pop %v1750
  %v1752 = vmul.f32 %v1637, 1.442695
  %v1753 = vpow.pop %v1752
  %v1754 = vmul.f32 %v1638, 1.442695
  %v1755 = vpow.pop %v1754
  %v1756 = vmul.f32 %v1639, 1.442695
  %v1757 = vpow.pop %v1756
  %v1758 = vmul.f32 %v1640, 1.442695
  %v1759 = vpow.pop %v1758
  %v1760 = vmul.f32 %v1641, 1.442695
  %v1761 = vpow.pop %v1760
  %v1762 = vmul.f32 %v1642, 1.442695
  %v1763 = vpow.pop %v1762
  %v1764 = vmul.f32 %v1643, 1.442695
  %v1765 = vpow.pop %v1764
  %v1766 = vmul.f32 %v1644, 1.442695
  %v1767 = vpow.pop %v1766
  %v1768 = vmul.f32 %v1645, 1.442695
  %v1769 = vpow.pop %v1768
  %v1770 = vmul.f32 %v1646, 1.442695
  %v1771 = vpow.pop %v1770
  %v1772 = vmul.f32 %v1647, 1.442695
  %v1773 = vpow.pop %v1772
  %v1774 = vmul.f32 %v1648, 1.442695
  %v1775 = vpow.pop %v1774
  %v1776 = vmul.f32 %v1649, 1.442695
  %v1777 = vpow.pop %v1776
  %v1778 = vsel %vm357, %v1651, 0.0
  %1779 = vadd.xlane.f32.xlu0 %v1778
  %v1780 = vpop.xlane.xlu0 %1779
  %v1781 = vsel %vm357, %v1653, 0.0
  %1782 = vadd.xlane.f32.xlu0 %v1781
  %v1783 = vpop.xlane.xlu0 %1782
  %v1784 = vsel %vm357, %v1655, 0.0
  %1785 = vadd.xlane.f32.xlu0 %v1784
  %v1786 = vpop.xlane.xlu0 %1785
  %v1787 = vsel %vm357, %v1657, 0.0
  %1788 = vadd.xlane.f32.xlu0 %v1787
  %v1789 = vpop.xlane.xlu0 %1788
  %v1790 = vsel %vm357, %v1659, 0.0
  %1791 = vadd.xlane.f32.xlu0 %v1790
  %v1792 = vpop.xlane.xlu0 %1791
  %v1793 = vsel %vm357, %v1661, 0.0
  %1794 = vadd.xlane.f32.xlu0 %v1793
  %v1795 = vpop.xlane.xlu0 %1794
  %v1796 = vsel %vm357, %v1663, 0.0
  %1797 = vadd.xlane.f32.xlu0 %v1796
  %v1798 = vpop.xlane.xlu0 %1797
  %v1799 = vsel %vm357, %v1665, 0.0
  %1800 = vadd.xlane.f32.xlu0 %v1799
  %v1801 = vpop.xlane.xlu0 %1800
  %v1802 = vsel %vm357, %v1667, 0.0
  %1803 = vadd.xlane.f32.xlu0 %v1802
  %v1804 = vpop.xlane.xlu0 %1803
  %v1805 = vsel %vm357, %v1669, 0.0
  %1806 = vadd.xlane.f32.xlu0 %v1805
  %v1807 = vpop.xlane.xlu0 %1806
  %v1808 = vsel %vm357, %v1671, 0.0
  %1809 = vadd.xlane.f32.xlu0 %v1808
  %v1810 = vpop.xlane.xlu0 %1809
  %v1811 = vsel %vm357, %v1673, 0.0
  %1812 = vadd.xlane.f32.xlu0 %v1811
  %v1813 = vpop.xlane.xlu0 %1812
  %v1814 = vsel %vm357, %v1675, 0.0
  %1815 = vadd.xlane.f32.xlu0 %v1814
  %v1816 = vpop.xlane.xlu0 %1815
  %v1817 = vsel %vm357, %v1677, 0.0
  %1818 = vadd.xlane.f32.xlu0 %v1817
  %v1819 = vpop.xlane.xlu0 %1818
  %v1820 = vsel %vm357, %v1679, 0.0
  %1821 = vadd.xlane.f32.xlu0 %v1820
  %v1822 = vpop.xlane.xlu0 %1821
  %v1823 = vsel %vm357, %v1681, 0.0
  %1824 = vadd.xlane.f32.xlu0 %v1823
  %v1825 = vpop.xlane.xlu0 %1824
  %v1826 = vsel %vm357, %v1683, 0.0
  %1827 = vadd.xlane.f32.xlu0 %v1826
  %v1828 = vpop.xlane.xlu0 %1827
  %v1829 = vsel %vm357, %v1685, 0.0
  %1830 = vadd.xlane.f32.xlu0 %v1829
  %v1831 = vpop.xlane.xlu0 %1830
  %v1832 = vsel %vm357, %v1687, 0.0
  %1833 = vadd.xlane.f32.xlu0 %v1832
  %v1834 = vpop.xlane.xlu0 %1833
  %v1835 = vsel %vm357, %v1689, 0.0
  %1836 = vadd.xlane.f32.xlu0 %v1835
  %v1837 = vpop.xlane.xlu0 %1836
  %v1838 = vsel %vm357, %v1691, 0.0
  %1839 = vadd.xlane.f32.xlu0 %v1838
  %v1840 = vpop.xlane.xlu0 %1839
  %v1841 = vsel %vm357, %v1693, 0.0
  %1842 = vadd.xlane.f32.xlu0 %v1841
  %v1843 = vpop.xlane.xlu0 %1842
  %v1844 = vsel %vm357, %v1695, 0.0
  %1845 = vadd.xlane.f32.xlu0 %v1844
  %v1846 = vpop.xlane.xlu0 %1845
  %v1847 = vsel %vm357, %v1697, 0.0
  %1848 = vadd.xlane.f32.xlu0 %v1847
  %v1849 = vpop.xlane.xlu0 %1848
  %v1850 = vsel %vm357, %v1699, 0.0
  %1851 = vadd.xlane.f32.xlu0 %v1850
  %v1852 = vpop.xlane.xlu0 %1851
  %v1853 = vsel %vm357, %v1701, 0.0
  %1854 = vadd.xlane.f32.xlu0 %v1853
  %v1855 = vpop.xlane.xlu0 %1854
  %v1856 = vsel %vm357, %v1703, 0.0
  %1857 = vadd.xlane.f32.xlu0 %v1856
  %v1858 = vpop.xlane.xlu0 %1857
  %v1859 = vsel %vm357, %v1705, 0.0
  %1860 = vadd.xlane.f32.xlu0 %v1859
  %v1861 = vpop.xlane.xlu0 %1860
  %v1862 = vsel %vm357, %v1707, 0.0
  %1863 = vadd.xlane.f32.xlu0 %v1862
  %v1864 = vpop.xlane.xlu0 %1863
  %v1865 = vsel %vm357, %v1709, 0.0
  %1866 = vadd.xlane.f32.xlu0 %v1865
  %v1867 = vpop.xlane.xlu0 %1866
  %v1868 = vsel %vm357, %v1711, 0.0
  %1869 = vadd.xlane.f32.xlu0 %v1868
  %v1870 = vpop.xlane.xlu0 %1869
  %v1871 = vsel %vm357, %v1713, 0.0
  %1872 = vadd.xlane.f32.xlu0 %v1871
  %v1873 = vpop.xlane.xlu0 %1872
  %v1874 = vsel %vm357, %v1715, 0.0
  %1875 = vadd.xlane.f32.xlu0 %v1874
  %v1876 = vpop.xlane.xlu0 %1875
  %v1877 = vsel %vm357, %v1717, 0.0
  %1878 = vadd.xlane.f32.xlu0 %v1877
  %v1879 = vpop.xlane.xlu0 %1878
  %v1880 = vsel %vm357, %v1719, 0.0
  %1881 = vadd.xlane.f32.xlu0 %v1880
  %v1882 = vpop.xlane.xlu0 %1881
  %v1883 = vsel %vm357, %v1721, 0.0
  %1884 = vadd.xlane.f32.xlu0 %v1883
  %v1885 = vpop.xlane.xlu0 %1884
  %v1886 = vsel %vm357, %v1723, 0.0
  %1887 = vadd.xlane.f32.xlu0 %v1886
  %v1888 = vpop.xlane.xlu0 %1887
  %v1889 = vsel %vm357, %v1725, 0.0
  %1890 = vadd.xlane.f32.xlu0 %v1889
  %v1891 = vpop.xlane.xlu0 %1890
  %v1892 = vsel %vm357, %v1727, 0.0
  %1893 = vadd.xlane.f32.xlu0 %v1892
  %v1894 = vpop.xlane.xlu0 %1893
  %v1895 = vsel %vm357, %v1729, 0.0
  %1896 = vadd.xlane.f32.xlu0 %v1895
  %v1897 = vpop.xlane.xlu0 %1896
  %v1898 = vsel %vm357, %v1731, 0.0
  %1899 = vadd.xlane.f32.xlu0 %v1898
  %v1900 = vpop.xlane.xlu0 %1899
  %v1901 = vsel %vm357, %v1733, 0.0
  %1902 = vadd.xlane.f32.xlu0 %v1901
  %v1903 = vpop.xlane.xlu0 %1902
  %v1904 = vsel %vm357, %v1735, 0.0
  %1905 = vadd.xlane.f32.xlu0 %v1904
  %v1906 = vpop.xlane.xlu0 %1905
  %v1907 = vsel %vm357, %v1737, 0.0
  %1908 = vadd.xlane.f32.xlu0 %v1907
  %v1909 = vpop.xlane.xlu0 %1908
  %v1910 = vsel %vm357, %v1739, 0.0
  %1911 = vadd.xlane.f32.xlu0 %v1910
  %v1912 = vpop.xlane.xlu0 %1911
  %v1913 = vsel %vm357, %v1741, 0.0
  %1914 = vadd.xlane.f32.xlu0 %v1913
  %v1915 = vpop.xlane.xlu0 %1914
  %v1916 = vsel %vm357, %v1743, 0.0
  %1917 = vadd.xlane.f32.xlu0 %v1916
  %v1918 = vpop.xlane.xlu0 %1917
  %v1919 = vsel %vm357, %v1745, 0.0
  %1920 = vadd.xlane.f32.xlu0 %v1919
  %v1921 = vpop.xlane.xlu0 %1920
  %v1922 = vsel %vm357, %v1747, 0.0
  %1923 = vadd.xlane.f32.xlu0 %v1922
  %v1924 = vpop.xlane.xlu0 %1923
  %v1925 = vsel %vm357, %v1749, 0.0
  %1926 = vadd.xlane.f32.xlu0 %v1925
  %v1927 = vpop.xlane.xlu0 %1926
  %v1928 = vsel %vm357, %v1751, 0.0
  %1929 = vadd.xlane.f32.xlu0 %v1928
  %v1930 = vpop.xlane.xlu0 %1929
  %v1931 = vsel %vm357, %v1753, 0.0
  %1932 = vadd.xlane.f32.xlu0 %v1931
  %v1933 = vpop.xlane.xlu0 %1932
  %v1934 = vsel %vm357, %v1755, 0.0
  %1935 = vadd.xlane.f32.xlu0 %v1934
  %v1936 = vpop.xlane.xlu0 %1935
  %v1937 = vsel %vm357, %v1757, 0.0
  %1938 = vadd.xlane.f32.xlu0 %v1937
  %v1939 = vpop.xlane.xlu0 %1938
  %v1940 = vsel %vm357, %v1759, 0.0
  %1941 = vadd.xlane.f32.xlu0 %v1940
  %v1942 = vpop.xlane.xlu0 %1941
  %v1943 = vsel %vm357, %v1761, 0.0
  %1944 = vadd.xlane.f32.xlu0 %v1943
  %v1945 = vpop.xlane.xlu0 %1944
  %v1946 = vsel %vm357, %v1763, 0.0
  %1947 = vadd.xlane.f32.xlu0 %v1946
  %v1948 = vpop.xlane.xlu0 %1947
  %v1949 = vsel %vm357, %v1765, 0.0
  %1950 = vadd.xlane.f32.xlu0 %v1949
  %v1951 = vpop.xlane.xlu0 %1950
  %v1952 = vsel %vm357, %v1767, 0.0
  %1953 = vadd.xlane.f32.xlu0 %v1952
  %v1954 = vpop.xlane.xlu0 %1953
  %v1955 = vsel %vm357, %v1769, 0.0
  %1956 = vadd.xlane.f32.xlu0 %v1955
  %v1957 = vpop.xlane.xlu0 %1956
  %v1958 = vsel %vm357, %v1771, 0.0
  %1959 = vadd.xlane.f32.xlu0 %v1958
  %v1960 = vpop.xlane.xlu0 %1959
  %v1961 = vsel %vm357, %v1773, 0.0
  %1962 = vadd.xlane.f32.xlu0 %v1961
  %v1963 = vpop.xlane.xlu0 %1962
  %v1964 = vsel %vm357, %v1775, 0.0
  %1965 = vadd.xlane.f32.xlu0 %v1964
  %v1966 = vpop.xlane.xlu0 %1965
  %v1967 = vsel %vm357, %v1777, 0.0
  %1968 = vadd.xlane.f32.xlu0 %v1967
  %v1969 = vpop.xlane.xlu0 %1968
  %v1970 = vrcp.pop %v1780
  %v1971 = vrcp.pop %v1783
  %v1972 = vrcp.pop %v1786
  %v1973 = vrcp.pop %v1789
  %v1974 = vrcp.pop %v1792
  %v1975 = vrcp.pop %v1795
  %v1976 = vrcp.pop %v1798
  %v1977 = vrcp.pop %v1801
  %v1978 = vrcp.pop %v1804
  %v1979 = vrcp.pop %v1807
  %v1980 = vrcp.pop %v1810
  %v1981 = vrcp.pop %v1813
  %v1982 = vrcp.pop %v1816
  %v1983 = vrcp.pop %v1819
  %v1984 = vrcp.pop %v1822
  %v1985 = vrcp.pop %v1825
  %v1986 = vrcp.pop %v1828
  %v1987 = vrcp.pop %v1831
  %v1988 = vrcp.pop %v1834
  %v1989 = vrcp.pop %v1837
  %v1990 = vrcp.pop %v1840
  %v1991 = vrcp.pop %v1843
  %v1992 = vrcp.pop %v1846
  %v1993 = vrcp.pop %v1849
  %v1994 = vrcp.pop %v1852
  %v1995 = vrcp.pop %v1855
  %v1996 = vrcp.pop %v1858
  %v1997 = vrcp.pop %v1861
  %v1998 = vrcp.pop %v1864
  %v1999 = vrcp.pop %v1867
  %v2000 = vrcp.pop %v1870
  %v2001 = vrcp.pop %v1873
  %v2002 = vrcp.pop %v1876
  %v2003 = vrcp.pop %v1879
  %v2004 = vrcp.pop %v1882
  %v2005 = vrcp.pop %v1885
  %v2006 = vrcp.pop %v1888
  %v2007 = vrcp.pop %v1891
  %v2008 = vrcp.pop %v1894
  %v2009 = vrcp.pop %v1897
  %v2010 = vrcp.pop %v1900
  %v2011 = vrcp.pop %v1903
  %v2012 = vrcp.pop %v1906
  %v2013 = vrcp.pop %v1909
  %v2014 = vrcp.pop %v1912
  %v2015 = vrcp.pop %v1915
  %v2016 = vrcp.pop %v1918
  %v2017 = vrcp.pop %v1921
  %v2018 = vrcp.pop %v1924
  %v2019 = vrcp.pop %v1927
  %v2020 = vrcp.pop %v1930
  %v2021 = vrcp.pop %v1933
  %v2022 = vrcp.pop %v1936
  %v2023 = vrcp.pop %v1939
  %v2024 = vrcp.pop %v1942
  %v2025 = vrcp.pop %v1945
  %v2026 = vrcp.pop %v1948
  %v2027 = vrcp.pop %v1951
  %v2028 = vrcp.pop %v1954
  %v2029 = vrcp.pop %v1957
  %v2030 = vrcp.pop %v1960
  %v2031 = vrcp.pop %v1963
  %v2032 = vrcp.pop %v1966
  %v2033 = vrcp.pop %v1969
  %v2034 = vmul.f32 %v1651, %v1970
  %v2035 = vmul.f32 %v1653, %v1971
  %v2036 = vmul.f32 %v1655, %v1972
  %v2037 = vmul.f32 %v1657, %v1973
  %v2038 = vmul.f32 %v1659, %v1974
  %v2039 = vmul.f32 %v1661, %v1975
  %v2040 = vmul.f32 %v1663, %v1976
  %v2041 = vmul.f32 %v1665, %v1977
  %v2042 = vmul.f32 %v1667, %v1978
  %v2043 = vmul.f32 %v1669, %v1979
  %v2044 = vmul.f32 %v1671, %v1980
  %v2045 = vmul.f32 %v1673, %v1981
  %v2046 = vmul.f32 %v1675, %v1982
  %v2047 = vmul.f32 %v1677, %v1983
  %v2048 = vmul.f32 %v1679, %v1984
  %v2049 = vmul.f32 %v1681, %v1985
  %v2050 = vmul.f32 %v1683, %v1986
  %v2051 = vmul.f32 %v1685, %v1987
  %v2052 = vmul.f32 %v1687, %v1988
  %v2053 = vmul.f32 %v1689, %v1989
  %v2054 = vmul.f32 %v1691, %v1990
  %v2055 = vmul.f32 %v1693, %v1991
  %v2056 = vmul.f32 %v1695, %v1992
  %v2057 = vmul.f32 %v1697, %v1993
  %v2058 = vmul.f32 %v1699, %v1994
  %v2059 = vmul.f32 %v1701, %v1995
  %v2060 = vmul.f32 %v1703, %v1996
  %v2061 = vmul.f32 %v1705, %v1997
  %v2062 = vmul.f32 %v1707, %v1998
  %v2063 = vmul.f32 %v1709, %v1999
  %v2064 = vmul.f32 %v1711, %v2000
  %v2065 = vmul.f32 %v1713, %v2001
  %v2066 = vmul.f32 %v1715, %v2002
  %v2067 = vmul.f32 %v1717, %v2003
  %v2068 = vmul.f32 %v1719, %v2004
  %v2069 = vmul.f32 %v1721, %v2005
  %v2070 = vmul.f32 %v1723, %v2006
  %v2071 = vmul.f32 %v1725, %v2007
  %v2072 = vmul.f32 %v1727, %v2008
  %v2073 = vmul.f32 %v1729, %v2009
  %v2074 = vmul.f32 %v1731, %v2010
  %v2075 = vmul.f32 %v1733, %v2011
  %v2076 = vmul.f32 %v1735, %v2012
  %v2077 = vmul.f32 %v1737, %v2013
  %v2078 = vmul.f32 %v1739, %v2014
  %v2079 = vmul.f32 %v1741, %v2015
  %v2080 = vmul.f32 %v1743, %v2016
  %v2081 = vmul.f32 %v1745, %v2017
  %v2082 = vmul.f32 %v1747, %v2018
  %v2083 = vmul.f32 %v1749, %v2019
  %v2084 = vmul.f32 %v1751, %v2020
  %v2085 = vmul.f32 %v1753, %v2021
  %v2086 = vmul.f32 %v1755, %v2022
  %v2087 = vmul.f32 %v1757, %v2023
  %v2088 = vmul.f32 %v1759, %v2024
  %v2089 = vmul.f32 %v1761, %v2025
  %v2090 = vmul.f32 %v1763, %v2026
  %v2091 = vmul.f32 %v1765, %v2027
  %v2092 = vmul.f32 %v1767, %v2028
  %v2093 = vmul.f32 %v1769, %v2029
  %v2094 = vmul.f32 %v1771, %v2030
  %v2095 = vmul.f32 %v1773, %v2031
  %v2096 = vmul.f32 %v1775, %v2032
  %v2097 = vmul.f32 %v1777, %v2033
  %v2098 = vld [vmem:[#allocation5] sm:$0xff]
  %v2099 = vld [vmem:[#allocation5 + $0x8] sm:$0xff]
  %v2100 = vld [vmem:[#allocation5 + $0x10] sm:$0xff]
  %v2101 = vld [vmem:[#allocation5 + $0x18] sm:$0xff]
  %v2102 = vld [vmem:[#allocation5 + $0x20] sm:$0xff]
  %v2103 = vld [vmem:[#allocation5 + $0x28] sm:$0xff]
  %v2104 = vld [vmem:[#allocation5 + $0x30] sm:$0xff]
  %v2105 = vld [vmem:[#allocation5 + $0x38] sm:$0xff]
  %v2107 = vsel %vm357, %v2034, 0
  %v2110 = vsel %vm357, %v2035, 0
  %v2113 = vsel %vm357, %v2036, 0
  %v2116 = vsel %vm357, %v2037, 0
  %v2119 = vsel %vm357, %v2038, 0
  %v2122 = vsel %vm357, %v2039, 0
  %v2125 = vsel %vm357, %v2040, 0
  %v2128 = vsel %vm357, %v2041, 0
  %v2131 = vsel %vm357, %v2042, 0
  %v2134 = vsel %vm357, %v2043, 0
  %v2137 = vsel %vm357, %v2044, 0
  %v2140 = vsel %vm357, %v2045, 0
  %v2143 = vsel %vm357, %v2046, 0
  %v2146 = vsel %vm357, %v2047, 0
  %v2149 = vsel %vm357, %v2048, 0
  %v2152 = vsel %vm357, %v2049, 0
  %v2155 = vsel %vm357, %v2050, 0
  %v2158 = vsel %vm357, %v2051, 0
  %v2161 = vsel %vm357, %v2052, 0
  %v2164 = vsel %vm357, %v2053, 0
  %v2167 = vsel %vm357, %v2054, 0
  %v2170 = vsel %vm357, %v2055, 0
  %v2173 = vsel %vm357, %v2056, 0
  %v2176 = vsel %vm357, %v2057, 0
  %v2179 = vsel %vm357, %v2058, 0
  %v2182 = vsel %vm357, %v2059, 0
  %v2185 = vsel %vm357, %v2060, 0
  %v2188 = vsel %vm357, %v2061, 0
  %v2191 = vsel %vm357, %v2062, 0
  %v2194 = vsel %vm357, %v2063, 0
  %v2197 = vsel %vm357, %v2064, 0
  %v2200 = vsel %vm357, %v2065, 0
  %v2203 = vsel %vm357, %v2066, 0
  %v2206 = vsel %vm357, %v2067, 0
  %v2209 = vsel %vm357, %v2068, 0
  %v2212 = vsel %vm357, %v2069, 0
  %v2215 = vsel %vm357, %v2070, 0
  %v2218 = vsel %vm357, %v2071, 0
  %v2221 = vsel %vm357, %v2072, 0
  %v2224 = vsel %vm357, %v2073, 0
  %v2227 = vsel %vm357, %v2074, 0
  %v2230 = vsel %vm357, %v2075, 0
  %v2233 = vsel %vm357, %v2076, 0
  %v2236 = vsel %vm357, %v2077, 0
  %v2239 = vsel %vm357, %v2078, 0
  %v2242 = vsel %vm357, %v2079, 0
  %v2245 = vsel %vm357, %v2080, 0
  %v2248 = vsel %vm357, %v2081, 0
  %v2251 = vsel %vm357, %v2082, 0
  %v2254 = vsel %vm357, %v2083, 0
  %v2257 = vsel %vm357, %v2084, 0
  %v2260 = vsel %vm357, %v2085, 0
  %v2263 = vsel %vm357, %v2086, 0
  %v2266 = vsel %vm357, %v2087, 0
  %v2269 = vsel %vm357, %v2088, 0
  %v2272 = vsel %vm357, %v2089, 0
  %v2275 = vsel %vm357, %v2090, 0
  %v2278 = vsel %vm357, %v2091, 0
  %v2281 = vsel %vm357, %v2092, 0
  %v2284 = vsel %vm357, %v2093, 0
  %v2287 = vsel %vm357, %v2094, 0
  %v2290 = vsel %vm357, %v2095, 0
  %v2293 = vsel %vm357, %v2096, 0
  %v2296 = vsel %vm357, %v2097, 0
  %2298 = vmatprep.subr.mxu0 0.0
  %2299 = vmatpush1.msra.mxu0 %v2098
  %2300 = vmatprep.subr.mxu0 0.0
  %2301 = vmatpush1.msra.mxu0 %v2099
  %2302 = vmatprep.subr.mxu0 0.0
  %2303 = vmatpush1.msra.mxu0 %v2100
  %2304 = vmatprep.subr.mxu0 0.0
  %2305 = vmatpush1.msra.mxu0 %v2101
  %2306 = vmatprep.subr.mxu0 0.0
  %2307 = vmatpush1.msra.mxu0 %v2102
  %2308 = vmatprep.subr.mxu0 0.0
  %2309 = vmatpush1.msra.mxu0 %v2103
  %2310 = vmatprep.subr.mxu0 0.0
  %2311 = vmatpush1.msra.mxu0 %v2104
  %2312 = vmatprep.subr.mxu0 0.0
  %2313 = vmatpush1.msra.mxu0 %v2105
  %2314 = vmatprep.subr.mxu0 0.0
  %2315 = vmatpush1.msra.mxu0 0.0
  %2316 = vmatprep.subr.mxu0 0.0
  %2317 = vmatpush1.msra.mxu0 0.0
  %2318 = vmatprep.subr.mxu0 0.0
  %2319 = vmatpush1.msra.mxu0 0.0
  %2320 = vmatprep.subr.mxu0 0.0
  %2321 = vmatpush1.msra.mxu0 0.0
  %2322 = vmatprep.subr.mxu0 0.0
  %2323 = vmatpush1.msra.mxu0 0.0
  %2324 = vmatprep.subr.mxu0 0.0
  %2325 = vmatpush1.msra.mxu0 0.0
  %2326 = vmatprep.subr.mxu0 0.0
  %2327 = vmatpush1.msra.mxu0 0.0
  %2328 = vmatprep.subr.mxu0 0.0
  %2329 = vmatpush1.msra.mxu0 0.0
  %2330 = vmatprep.subr.mxu0 0.0
  %2331 = vmatpush1.msra.mxu0 0.0
  %2332 = vmatprep.subr.mxu0 0.0
  %2333 = vmatpush1.msra.mxu0 0.0
  %2334 = vmatprep.subr.mxu0 0.0
  %2335 = vmatpush1.msra.mxu0 0.0
  %2336 = vmatprep.subr.mxu0 0.0
  %2337 = vmatpush1.msra.mxu0 0.0
  %2338 = vmatprep.subr.mxu0 0.0
  %2339 = vmatpush1.msra.mxu0 0.0
  %2340 = vmatprep.subr.mxu0 0.0
  %2341 = vmatpush1.msra.mxu0 0.0
  %2342 = vmatprep.subr.mxu0 0.0
  %2343 = vmatpush1.msra.mxu0 0.0
  %2344 = vmatprep.subr.mxu0 0.0
  %2345 = vmatpush1.msra.mxu0 0.0
  %2346 = vmatprep.subr.mxu0 0.0
  %2347 = vmatpush1.msra.mxu0 0.0
  %2348 = vmatprep.subr.mxu0 0.0
  %2349 = vmatpush1.msra.mxu0 0.0
  %2350 = vmatprep.subr.mxu0 0.0
  %2351 = vmatpush1.msra.mxu0 0.0
  %2352 = vmatprep.subr.mxu0 0.0
  %2353 = vmatpush1.msra.mxu0 0.0
  %2354 = vmatprep.subr.mxu0 0.0
  %2355 = vmatpush1.msra.mxu0 0.0
  %2356 = vmatprep.subr.mxu0 0.0
  %2357 = vmatpush1.msra.mxu0 0.0
  %2358 = vmatprep.subr.mxu0 0.0
  %2359 = vmatpush1.msra.mxu0 0.0
  %2360 = vmatprep.subr.mxu0 0.0
  %2361 = vmatpush1.msra.mxu0 0.0
  %2362 = vmatprep.mubr.f32.mxu0 0.0
  %2363 = vmatmul.mubr.f32.gmra.mrb[0].mxu0 %v2107
  %v2364 = vpop.f32.mrb[0].mxu0
  %v2365 = vadd.f32 0.0, %v2364
  %v2366 = vpop.f32.mrb[0].mxu0
  %2367 = vmatprep.mubr.f32.mxu0 0.0
  %2368 = vmatmul.mubr.f32.gmra.mrb[0].mxu0 %v2110
  %v2369 = vpop.f32.mrb[0].mxu0
  %v2370 = vadd.f32 0.0, %v2369
  %v2371 = vpop.f32.mrb[0].mxu0
  %2372 = vmatprep.mubr.f32.mxu0 0.0
  %2373 = vmatmul.mubr.f32.gmra.mrb[0].mxu0 %v2113
  %v2374 = vpop.f32.mrb[0].mxu0
  %v2375 = vadd.f32 0.0, %v2374
  %v2376 = vpop.f32.mrb[0].mxu0
  %2377 = vmatprep.mubr.f32.mxu0 0.0
  %2378 = vmatmul.mubr.f32.gmra.mrb[0].mxu0 %v2116
  %v2379 = vpop.f32.mrb[0].mxu0
  %v2380 = vadd.f32 0.0, %v2379
  %v2381 = vpop.f32.mrb[0].mxu0
  %2382 = vmatprep.mubr.f32.mxu0 0.0
  %2383 = vmatmul.mubr.f32.gmra.mrb[0].mxu0 %v2119
  %v2384 = vpop.f32.mrb[0].mxu0
  %v2385 = vadd.f32 0.0, %v2384
  %v2386 = vpop.f32.mrb[0].mxu0
  %2387 = vmatprep.mubr.f32.mxu0 0.0
  %2388 = vmatmul.mubr.f32.gmra.mrb[0].mxu0 %v2122
  %v2389 = vpop.f32.mrb[0].mxu0
  %v2390 = vadd.f32 0.0, %v2389
  %v2391 = vpop.f32.mrb[0].mxu0
  %2392 = vmatprep.mubr.f32.mxu0 0.0
  %2393 = vmatmul.mubr.f32.gmra.mrb[0].mxu0 %v2125
  %v2394 = vpop.f32.mrb[0].mxu0
  %v2395 = vadd.f32 0.0, %v2394
  %v2396 = vpop.f32.mrb[0].mxu0
  %2397 = vmatprep.mubr.f32.mxu0 0.0
  %2398 = vmatmul.mubr.f32.gmra.mrb[0].mxu0 %v2128
  %v2399 = vpop.f32.mrb[0].mxu0
  %v2400 = vadd.f32 0.0, %v2399
  %v2401 = vpop.f32.mrb[0].mxu0
  %2402 = vmatprep.mubr.f32.mxu0 0.0
  %2403 = vmatmul.mubr.f32.gmra.mrb[0].mxu0 %v2131
  %v2404 = vpop.f32.mrb[0].mxu0
  %v2405 = vadd.f32 0.0, %v2404
  %v2406 = vpop.f32.mrb[0].mxu0
  %2407 = vmatprep.mubr.f32.mxu0 0.0
  %2408 = vmatmul.mubr.f32.gmra.mrb[0].mxu0 %v2134
  %v2409 = vpop.f32.mrb[0].mxu0
  %v2410 = vadd.f32 0.0, %v2409
  %v2411 = vpop.f32.mrb[0].mxu0
  %2412 = vmatprep.mubr.f32.mxu0 0.0
  %2413 = vmatmul.mubr.f32.gmra.mrb[0].mxu0 %v2137
  %v2414 = vpop.f32.mrb[0].mxu0
  %v2415 = vadd.f32 0.0, %v2414
  %v2416 = vpop.f32.mrb[0].mxu0
  %2417 = vmatprep.mubr.f32.mxu0 0.0
  %2418 = vmatmul.mubr.f32.gmra.mrb[0].mxu0 %v2140
  %v2419 = vpop.f32.mrb[0].mxu0
  %v2420 = vadd.f32 0.0, %v2419
  %v2421 = vpop.f32.mrb[0].mxu0
  %2422 = vmatprep.mubr.f32.mxu0 0.0
  %2423 = vmatmul.mubr.f32.gmra.mrb[0].mxu0 %v2143
  %v2424 = vpop.f32.mrb[0].mxu0
  %v2425 = vadd.f32 0.0, %v2424
  %v2426 = vpop.f32.mrb[0].mxu0
  %2427 = vmatprep.mubr.f32.mxu0 0.0
  %2428 = vmatmul.mubr.f32.gmra.mrb[0].mxu0 %v2146
  %v2429 = vpop.f32.mrb[0].mxu0
  %v2430 = vadd.f32 0.0, %v2429
  %v2431 = vpop.f32.mrb[0].mxu0
  %2432 = vmatprep.mubr.f32.mxu0 0.0
  %2433 = vmatmul.mubr.f32.gmra.mrb[0].mxu0 %v2149
  %v2434 = vpop.f32.mrb[0].mxu0
  %v2435 = vadd.f32 0.0, %v2434
  %v2436 = vpop.f32.mrb[0].mxu0
  %2437 = vmatprep.mubr.f32.mxu0 0.0
  %2438 = vmatmul.mubr.f32.gmra.mrb[0].mxu0 %v2152
  %v2439 = vpop.f32.mrb[0].mxu0
  %v2440 = vadd.f32 0.0, %v2439
  %v2441 = vpop.f32.mrb[0].mxu0
  %2442 = vmatprep.mubr.f32.mxu0 0.0
  %2443 = vmatmul.mubr.f32.gmra.mrb[0].mxu0 %v2155
  %v2444 = vpop.f32.mrb[0].mxu0
  %v2445 = vadd.f32 0.0, %v2444
  %v2446 = vpop.f32.mrb[0].mxu0
  %2447 = vmatprep.mubr.f32.mxu0 0.0
  %2448 = vmatmul.mubr.f32.gmra.mrb[0].mxu0 %v2158
  %v2449 = vpop.f32.mrb[0].mxu0
  %v2450 = vadd.f32 0.0, %v2449
  %v2451 = vpop.f32.mrb[0].mxu0
  %2452 = vmatprep.mubr.f32.mxu0 0.0
  %2453 = vmatmul.mubr.f32.gmra.mrb[0].mxu0 %v2161
  %v2454 = vpop.f32.mrb[0].mxu0
  %v2455 = vadd.f32 0.0, %v2454
  %v2456 = vpop.f32.mrb[0].mxu0
  %2457 = vmatprep.mubr.f32.mxu0 0.0
  %2458 = vmatmul.mubr.f32.gmra.mrb[0].mxu0 %v2164
  %v2459 = vpop.f32.mrb[0].mxu0
  %v2460 = vadd.f32 0.0, %v2459
  %v2461 = vpop.f32.mrb[0].mxu0
  %2462 = vmatprep.mubr.f32.mxu0 0.0
  %2463 = vmatmul.mubr.f32.gmra.mrb[0].mxu0 %v2167
  %v2464 = vpop.f32.mrb[0].mxu0
  %v2465 = vadd.f32 0.0, %v2464
  %v2466 = vpop.f32.mrb[0].mxu0
  %2467 = vmatprep.mubr.f32.mxu0 0.0
  %2468 = vmatmul.mubr.f32.gmra.mrb[0].mxu0 %v2170
  %v2469 = vpop.f32.mrb[0].mxu0
  %v2470 = vadd.f32 0.0, %v2469
  %v2471 = vpop.f32.mrb[0].mxu0
  %2472 = vmatprep.mubr.f32.mxu0 0.0
  %2473 = vmatmul.mubr.f32.gmra.mrb[0].mxu0 %v2173
  %v2474 = vpop.f32.mrb[0].mxu0
  %v2475 = vadd.f32 0.0, %v2474
  %v2476 = vpop.f32.mrb[0].mxu0
  %2477 = vmatprep.mubr.f32.mxu0 0.0
  %2478 = vmatmul.mubr.f32.gmra.mrb[0].mxu0 %v2176
  %v2479 = vpop.f32.mrb[0].mxu0
  %v2480 = vadd.f32 0.0, %v2479
  %v2481 = vpop.f32.mrb[0].mxu0
  %2482 = vmatprep.mubr.f32.mxu0 0.0
  %2483 = vmatmul.mubr.f32.gmra.mrb[0].mxu0 %v2179
  %v2484 = vpop.f32.mrb[0].mxu0
  %v2485 = vadd.f32 0.0, %v2484
  %v2486 = vpop.f32.mrb[0].mxu0
  %2487 = vmatprep.mubr.f32.mxu0 0.0
  %2488 = vmatmul.mubr.f32.gmra.mrb[0].mxu0 %v2182
  %v2489 = vpop.f32.mrb[0].mxu0
  %v2490 = vadd.f32 0.0, %v2489
  %v2491 = vpop.f32.mrb[0].mxu0
  %2492 = vmatprep.mubr.f32.mxu0 0.0
  %2493 = vmatmul.mubr.f32.gmra.mrb[0].mxu0 %v2185
  %v2494 = vpop.f32.mrb[0].mxu0
  %v2495 = vadd.f32 0.0, %v2494
  %v2496 = vpop.f32.mrb[0].mxu0
  %2497 = vmatprep.mubr.f32.mxu0 0.0
  %2498 = vmatmul.mubr.f32.gmra.mrb[0].mxu0 %v2188
  %v2499 = vpop.f32.mrb[0].mxu0
  %v2500 = vadd.f32 0.0, %v2499
  %v2501 = vpop.f32.mrb[0].mxu0
  %2502 = vmatprep.mubr.f32.mxu0 0.0
  %2503 = vmatmul.mubr.f32.gmra.mrb[0].mxu0 %v2191
  %v2504 = vpop.f32.mrb[0].mxu0
  %v2505 = vadd.f32 0.0, %v2504
  %v2506 = vpop.f32.mrb[0].mxu0
  %2507 = vmatprep.mubr.f32.mxu0 0.0
  %2508 = vmatmul.mubr.f32.gmra.mrb[0].mxu0 %v2194
  %v2509 = vpop.f32.mrb[0].mxu0
  %v2510 = vadd.f32 0.0, %v2509
  %v2511 = vpop.f32.mrb[0].mxu0
  %2512 = vmatprep.mubr.f32.mxu0 0.0
  %2513 = vmatmul.mubr.f32.gmra.mrb[0].mxu0 %v2197
  %v2514 = vpop.f32.mrb[0].mxu0
  %v2515 = vadd.f32 0.0, %v2514
  %v2516 = vpop.f32.mrb[0].mxu0
  %2517 = vmatprep.mubr.f32.mxu0 0.0
  %2518 = vmatmul.mubr.f32.gmra.mrb[0].mxu0 %v2200
  %v2519 = vpop.f32.mrb[0].mxu0
  %v2520 = vadd.f32 0.0, %v2519
  %v2521 = vpop.f32.mrb[0].mxu0
  %2522 = vmatprep.mubr.f32.mxu0 0.0
  %2523 = vmatmul.mubr.f32.gmra.mrb[0].mxu0 %v2203
  %v2524 = vpop.f32.mrb[0].mxu0
  %v2525 = vadd.f32 0.0, %v2524
  %v2526 = vpop.f32.mrb[0].mxu0
  %2527 = vmatprep.mubr.f32.mxu0 0.0
  %2528 = vmatmul.mubr.f32.gmra.mrb[0].mxu0 %v2206
  %v2529 = vpop.f32.mrb[0].mxu0
  %v2530 = vadd.f32 0.0, %v2529
  %v2531 = vpop.f32.mrb[0].mxu0
  %2532 = vmatprep.mubr.f32.mxu0 0.0
  %2533 = vmatmul.mubr.f32.gmra.mrb[0].mxu0 %v2209
  %v2534 = vpop.f32.mrb[0].mxu0
  %v2535 = vadd.f32 0.0, %v2534
  %v2536 = vpop.f32.mrb[0].mxu0
  %2537 = vmatprep.mubr.f32.mxu0 0.0
  %2538 = vmatmul.mubr.f32.gmra.mrb[0].mxu0 %v2212
  %v2539 = vpop.f32.mrb[0].mxu0
  %v2540 = vadd.f32 0.0, %v2539
  %v2541 = vpop.f32.mrb[0].mxu0
  %2542 = vmatprep.mubr.f32.mxu0 0.0
  %2543 = vmatmul.mubr.f32.gmra.mrb[0].mxu0 %v2215
  %v2544 = vpop.f32.mrb[0].mxu0
  %v2545 = vadd.f32 0.0, %v2544
  %v2546 = vpop.f32.mrb[0].mxu0
  %2547 = vmatprep.mubr.f32.mxu0 0.0
  %2548 = vmatmul.mubr.f32.gmra.mrb[0].mxu0 %v2218
  %v2549 = vpop.f32.mrb[0].mxu0
  %v2550 = vadd.f32 0.0, %v2549
  %v2551 = vpop.f32.mrb[0].mxu0
  %2552 = vmatprep.mubr.f32.mxu0 0.0
  %2553 = vmatmul.mubr.f32.gmra.mrb[0].mxu0 %v2221
  %v2554 = vpop.f32.mrb[0].mxu0
  %v2555 = vadd.f32 0.0, %v2554
  %v2556 = vpop.f32.mrb[0].mxu0
  %2557 = vmatprep.mubr.f32.mxu0 0.0
  %2558 = vmatmul.mubr.f32.gmra.mrb[0].mxu0 %v2224
  %v2559 = vpop.f32.mrb[0].mxu0
  %v2560 = vadd.f32 0.0, %v2559
  %v2561 = vpop.f32.mrb[0].mxu0
  %2562 = vmatprep.mubr.f32.mxu0 0.0
  %2563 = vmatmul.mubr.f32.gmra.mrb[0].mxu0 %v2227
  %v2564 = vpop.f32.mrb[0].mxu0
  %v2565 = vadd.f32 0.0, %v2564
  %v2566 = vpop.f32.mrb[0].mxu0
  %2567 = vmatprep.mubr.f32.mxu0 0.0
  %2568 = vmatmul.mubr.f32.gmra.mrb[0].mxu0 %v2230
  %v2569 = vpop.f32.mrb[0].mxu0
  %v2570 = vadd.f32 0.0, %v2569
  %v2571 = vpop.f32.mrb[0].mxu0
  %2572 = vmatprep.mubr.f32.mxu0 0.0
  %2573 = vmatmul.mubr.f32.gmra.mrb[0].mxu0 %v2233
  %v2574 = vpop.f32.mrb[0].mxu0
  %v2575 = vadd.f32 0.0, %v2574
  %v2576 = vpop.f32.mrb[0].mxu0
  %2577 = vmatprep.mubr.f32.mxu0 0.0
  %2578 = vmatmul.mubr.f32.gmra.mrb[0].mxu0 %v2236
  %v2579 = vpop.f32.mrb[0].mxu0
  %v2580 = vadd.f32 0.0, %v2579
  %v2581 = vpop.f32.mrb[0].mxu0
  %2582 = vmatprep.mubr.f32.mxu0 0.0
  %2583 = vmatmul.mubr.f32.gmra.mrb[0].mxu0 %v2239
  %v2584 = vpop.f32.mrb[0].mxu0
  %v2585 = vadd.f32 0.0, %v2584
  %v2586 = vpop.f32.mrb[0].mxu0
  %2587 = vmatprep.mubr.f32.mxu0 0.0
  %2588 = vmatmul.mubr.f32.gmra.mrb[0].mxu0 %v2242
  %v2589 = vpop.f32.mrb[0].mxu0
  %v2590 = vadd.f32 0.0, %v2589
  %v2591 = vpop.f32.mrb[0].mxu0
  %2592 = vmatprep.mubr.f32.mxu0 0.0
  %2593 = vmatmul.mubr.f32.gmra.mrb[0].mxu0 %v2245
  %v2594 = vpop.f32.mrb[0].mxu0
  %v2595 = vadd.f32 0.0, %v2594
  %v2596 = vpop.f32.mrb[0].mxu0
  %2597 = vmatprep.mubr.f32.mxu0 0.0
  %2598 = vmatmul.mubr.f32.gmra.mrb[0].mxu0 %v2248
  %v2599 = vpop.f32.mrb[0].mxu0
  %v2600 = vadd.f32 0.0, %v2599
  %v2601 = vpop.f32.mrb[0].mxu0
  %2602 = vmatprep.mubr.f32.mxu0 0.0
  %2603 = vmatmul.mubr.f32.gmra.mrb[0].mxu0 %v2251
  %v2604 = vpop.f32.mrb[0].mxu0
  %v2605 = vadd.f32 0.0, %v2604
  %v2606 = vpop.f32.mrb[0].mxu0
  %2607 = vmatprep.mubr.f32.mxu0 0.0
  %2608 = vmatmul.mubr.f32.gmra.mrb[0].mxu0 %v2254
  %v2609 = vpop.f32.mrb[0].mxu0
  %v2610 = vadd.f32 0.0, %v2609
  %v2611 = vpop.f32.mrb[0].mxu0
  %2612 = vmatprep.mubr.f32.mxu0 0.0
  %2613 = vmatmul.mubr.f32.gmra.mrb[0].mxu0 %v2257
  %v2614 = vpop.f32.mrb[0].mxu0
  %v2615 = vadd.f32 0.0, %v2614
  %v2616 = vpop.f32.mrb[0].mxu0
  %2617 = vmatprep.mubr.f32.mxu0 0.0
  %2618 = vmatmul.mubr.f32.gmra.mrb[0].mxu0 %v2260
  %v2619 = vpop.f32.mrb[0].mxu0
  %v2620 = vadd.f32 0.0, %v2619
  %v2621 = vpop.f32.mrb[0].mxu0
  %2622 = vmatprep.mubr.f32.mxu0 0.0
  %2623 = vmatmul.mubr.f32.gmra.mrb[0].mxu0 %v2263
  %v2624 = vpop.f32.mrb[0].mxu0
  %v2625 = vadd.f32 0.0, %v2624
  %v2626 = vpop.f32.mrb[0].mxu0
  %2627 = vmatprep.mubr.f32.mxu0 0.0
  %2628 = vmatmul.mubr.f32.gmra.mrb[0].mxu0 %v2266
  %v2629 = vpop.f32.mrb[0].mxu0
  %v2630 = vadd.f32 0.0, %v2629
  %v2631 = vpop.f32.mrb[0].mxu0
  %2632 = vmatprep.mubr.f32.mxu0 0.0
  %2633 = vmatmul.mubr.f32.gmra.mrb[0].mxu0 %v2269
  %v2634 = vpop.f32.mrb[0].mxu0
  %v2635 = vadd.f32 0.0, %v2634
  %v2636 = vpop.f32.mrb[0].mxu0
  %2637 = vmatprep.mubr.f32.mxu0 0.0
  %2638 = vmatmul.mubr.f32.gmra.mrb[0].mxu0 %v2272
  %v2639 = vpop.f32.mrb[0].mxu0
  %v2640 = vadd.f32 0.0, %v2639
  %v2641 = vpop.f32.mrb[0].mxu0
  %2642 = vmatprep.mubr.f32.mxu0 0.0
  %2643 = vmatmul.mubr.f32.gmra.mrb[0].mxu0 %v2275
  %v2644 = vpop.f32.mrb[0].mxu0
  %v2645 = vadd.f32 0.0, %v2644
  %v2646 = vpop.f32.mrb[0].mxu0
  %2647 = vmatprep.mubr.f32.mxu0 0.0
  %2648 = vmatmul.mubr.f32.gmra.mrb[0].mxu0 %v2278
  %v2649 = vpop.f32.mrb[0].mxu0
  %v2650 = vadd.f32 0.0, %v2649
  %v2651 = vpop.f32.mrb[0].mxu0
  %2652 = vmatprep.mubr.f32.mxu0 0.0
  %2653 = vmatmul.mubr.f32.gmra.mrb[0].mxu0 %v2281
  %v2654 = vpop.f32.mrb[0].mxu0
  %v2655 = vadd.f32 0.0, %v2654
  %v2656 = vpop.f32.mrb[0].mxu0
  %2657 = vmatprep.mubr.f32.mxu0 0.0
  %2658 = vmatmul.mubr.f32.gmra.mrb[0].mxu0 %v2284
  %v2659 = vpop.f32.mrb[0].mxu0
  %v2660 = vadd.f32 0.0, %v2659
  %v2661 = vpop.f32.mrb[0].mxu0
  %2662 = vmatprep.mubr.f32.mxu0 0.0
  %2663 = vmatmul.mubr.f32.gmra.mrb[0].mxu0 %v2287
  %v2664 = vpop.f32.mrb[0].mxu0
  %v2665 = vadd.f32 0.0, %v2664
  %v2666 = vpop.f32.mrb[0].mxu0
  %2667 = vmatprep.mubr.f32.mxu0 0.0
  %2668 = vmatmul.mubr.f32.gmra.mrb[0].mxu0 %v2290
  %v2669 = vpop.f32.mrb[0].mxu0
  %v2670 = vadd.f32 0.0, %v2669
  %v2671 = vpop.f32.mrb[0].mxu0
  %2672 = vmatprep.mubr.f32.mxu0 0.0
  %2673 = vmatmul.mubr.f32.gmra.mrb[0].mxu0 %v2293
  %v2674 = vpop.f32.mrb[0].mxu0
  %v2675 = vadd.f32 0.0, %v2674
  %v2676 = vpop.f32.mrb[0].mxu0
  %2677 = vmatprep.mubr.f32.mxu0 0.0
  %2678 = vmatmul.mubr.f32.gmra.mrb[0].mxu0 %v2296
  %v2679 = vpop.f32.mrb[0].mxu0
  %v2680 = vadd.f32 0.0, %v2679
  %v2681 = vpop.f32.mrb[0].mxu0
  %2682 = vdwg.mxu0
  %2683 = vst.msk [vmem:[#allocation6] sm:$0xff] %vm364, %v2365
  %2684 = vst.msk [vmem:[#allocation6 + $0x8] sm:$0xff] %vm364, %v2370
  %2685 = vst.msk [vmem:[#allocation6 + $0x10] sm:$0xff] %vm364, %v2375
  %2686 = vst.msk [vmem:[#allocation6 + $0x18] sm:$0xff] %vm364, %v2380
  %2687 = vst.msk [vmem:[#allocation6 + $0x20] sm:$0xff] %vm364, %v2385
  %2688 = vst.msk [vmem:[#allocation6 + $0x28] sm:$0xff] %vm364, %v2390
  %2689 = vst.msk [vmem:[#allocation6 + $0x30] sm:$0xff] %vm364, %v2395
  %2690 = vst.msk [vmem:[#allocation6 + $0x38] sm:$0xff] %vm364, %v2400
  %2691 = vst.msk [vmem:[#allocation6 + $0x40] sm:$0xff] %vm364, %v2405
  %2692 = vst.msk [vmem:[#allocation6 + $0x48] sm:$0xff] %vm364, %v2410
  %2693 = vst.msk [vmem:[#allocation6 + $0x50] sm:$0xff] %vm364, %v2415
  %2694 = vst.msk [vmem:[#allocation6 + $0x58] sm:$0xff] %vm364, %v2420
  %2695 = vst.msk [vmem:[#allocation6 + $0x60] sm:$0xff] %vm364, %v2425
  %2696 = vst.msk [vmem:[#allocation6 + $0x68] sm:$0xff] %vm364, %v2430
  %2697 = vst.msk [vmem:[#allocation6 + $0x70] sm:$0xff] %vm364, %v2435
  %2698 = vst.msk [vmem:[#allocation6 + $0x78] sm:$0xff] %vm364, %v2440
  %2699 = vst.msk [vmem:[#allocation6 + $0x80] sm:$0xff] %vm364, %v2445
  %2700 = vst.msk [vmem:[#allocation6 + $0x88] sm:$0xff] %vm364, %v2450
  %2701 = vst.msk [vmem:[#allocation6 + $0x90] sm:$0xff] %vm364, %v2455
  %2702 = vst.msk [vmem:[#allocation6 + $0x98] sm:$0xff] %vm364, %v2460
  %2703 = vst.msk [vmem:[#allocation6 + $0xa0] sm:$0xff] %vm364, %v2465
  %2704 = vst.msk [vmem:[#allocation6 + $0xa8] sm:$0xff] %vm364, %v2470
  %2705 = vst.msk [vmem:[#allocation6 + $0xb0] sm:$0xff] %vm364, %v2475
  %2706 = vst.msk [vmem:[#allocation6 + $0xb8] sm:$0xff] %vm364, %v2480
  %2707 = vst.msk [vmem:[#allocation6 + $0xc0] sm:$0xff] %vm364, %v2485
  %2708 = vst.msk [vmem:[#allocation6 + $0xc8] sm:$0xff] %vm364, %v2490
  %2709 = vst.msk [vmem:[#allocation6 + $0xd0] sm:$0xff] %vm364, %v2495
  %2710 = vst.msk [vmem:[#allocation6 + $0xd8] sm:$0xff] %vm364, %v2500
  %2711 = vst.msk [vmem:[#allocation6 + $0xe0] sm:$0xff] %vm364, %v2505
  %2712 = vst.msk [vmem:[#allocation6 + $0xe8] sm:$0xff] %vm364, %v2510
  %2713 = vst.msk [vmem:[#allocation6 + $0xf0] sm:$0xff] %vm364, %v2515
  %2714 = vst.msk [vmem:[#allocation6 + $0xf8] sm:$0xff] %vm364, %v2520
  %2715 = vst.msk [vmem:[#allocation6 + $0x100] sm:$0xff] %vm364, %v2525
  %2716 = vst.msk [vmem:[#allocation6 + $0x108] sm:$0xff] %vm364, %v2530
  %2717 = vst.msk [vmem:[#allocation6 + $0x110] sm:$0xff] %vm364, %v2535
  %2718 = vst.msk [vmem:[#allocation6 + $0x118] sm:$0xff] %vm364, %v2540
  %2719 = vst.msk [vmem:[#allocation6 + $0x120] sm:$0xff] %vm364, %v2545
  %2720 = vst.msk [vmem:[#allocation6 + $0x128] sm:$0xff] %vm364, %v2550
  %2721 = vst.msk [vmem:[#allocation6 + $0x130] sm:$0xff] %vm364, %v2555
  %2722 = vst.msk [vmem:[#allocation6 + $0x138] sm:$0xff] %vm364, %v2560
  %2723 = vst.msk [vmem:[#allocation6 + $0x140] sm:$0xff] %vm364, %v2565
  %2724 = vst.msk [vmem:[#allocation6 + $0x148] sm:$0xff] %vm364, %v2570
  %2725 = vst.msk [vmem:[#allocation6 + $0x150] sm:$0xff] %vm364, %v2575
  %2726 = vst.msk [vmem:[#allocation6 + $0x158] sm:$0xff] %vm364, %v2580
  %2727 = vst.msk [vmem:[#allocation6 + $0x160] sm:$0xff] %vm364, %v2585
  %2728 = vst.msk [vmem:[#allocation6 + $0x168] sm:$0xff] %vm364, %v2590
  %2729 = vst.msk [vmem:[#allocation6 + $0x170] sm:$0xff] %vm364, %v2595
  %2730 = vst.msk [vmem:[#allocation6 + $0x178] sm:$0xff] %vm364, %v2600
  %2731 = vst.msk [vmem:[#allocation6 + $0x180] sm:$0xff] %vm364, %v2605
  %2732 = vst.msk [vmem:[#allocation6 + $0x188] sm:$0xff] %vm364, %v2610
  %2733 = vst.msk [vmem:[#allocation6 + $0x190] sm:$0xff] %vm364, %v2615
  %2734 = vst.msk [vmem:[#allocation6 + $0x198] sm:$0xff] %vm364, %v2620
  %2735 = vst.msk [vmem:[#allocation6 + $0x1a0] sm:$0xff] %vm364, %v2625
  %2736 = vst.msk [vmem:[#allocation6 + $0x1a8] sm:$0xff] %vm364, %v2630
  %2737 = vst.msk [vmem:[#allocation6 + $0x1b0] sm:$0xff] %vm364, %v2635
  %2738 = vst.msk [vmem:[#allocation6 + $0x1b8] sm:$0xff] %vm364, %v2640
  %2739 = vst.msk [vmem:[#allocation6 + $0x1c0] sm:$0xff] %vm364, %v2645
  %2740 = vst.msk [vmem:[#allocation6 + $0x1c8] sm:$0xff] %vm364, %v2650
  %2741 = vst.msk [vmem:[#allocation6 + $0x1d0] sm:$0xff] %vm364, %v2655
  %2742 = vst.msk [vmem:[#allocation6 + $0x1d8] sm:$0xff] %vm364, %v2660
  %2743 = vst.msk [vmem:[#allocation6 + $0x1e0] sm:$0xff] %vm364, %v2665
  %2744 = vst.msk [vmem:[#allocation6 + $0x1e8] sm:$0xff] %vm364, %v2670
  %2745 = vst.msk [vmem:[#allocation6 + $0x1f0] sm:$0xff] %vm364, %v2675
  %2746 = vst.msk [vmem:[#allocation6 + $0x1f8] sm:$0xff] %vm364, %v2680
  %v2747 = vld [vmem:[%s5] sm:$0xff]
  %v2748 = vld [vmem:[#allocation6] sm:$0xff]
  %v2749 = vld [vmem:[#allocation6 + $0x8] sm:$0xff]
  %v2750 = vld [vmem:[#allocation6 + $0x10] sm:$0xff]
  %v2751 = vld [vmem:[#allocation6 + $0x18] sm:$0xff]
  %vm2752 = vcmask 261120
  %v2754 = vsel %vm2752, %v2747, 0
  %2756 = vmatprep.subr.mxu0 0.0
  %2757 = vmatpush1.msra.mxu0 %v2748
  %2758 = vmatprep.subr.mxu0 0.0
  %2759 = vmatpush1.msra.mxu0 %v2749
  %2760 = vmatprep.subr.mxu0 0.0
  %2761 = vmatpush1.msra.mxu0 %v2750
  %2762 = vmatprep.subr.mxu0 0.0
  %2763 = vmatpush1.msra.mxu0 %v2751
  %2764 = vmatprep.subr.mxu0 0.0
  %2765 = vmatpush1.msra.mxu0 0.0
  %2766 = vmatprep.subr.mxu0 0.0
  %2767 = vmatpush1.msra.mxu0 0.0
  %2768 = vmatprep.subr.mxu0 0.0
  %2769 = vmatpush1.msra.mxu0 0.0
  %2770 = vmatprep.subr.mxu0 0.0
  %2771 = vmatpush1.msra.mxu0 0.0
  %2772 = vmatprep.subr.mxu0 0.0
  %2773 = vmatpush1.msra.mxu0 0.0
  %2774 = vmatprep.subr.mxu0 0.0
  %2775 = vmatpush1.msra.mxu0 0.0
  %2776 = vmatprep.subr.mxu0 0.0
  %2777 = vmatpush1.msra.mxu0 0.0
  %2778 = vmatprep.subr.mxu0 0.0
  %2779 = vmatpush1.msra.mxu0 0.0
  %2780 = vmatprep.subr.mxu0 0.0
  %2781 = vmatpush1.msra.mxu0 0.0
  %2782 = vmatprep.subr.mxu0 0.0
  %2783 = vmatpush1.msra.mxu0 0.0
  %2784 = vmatprep.subr.mxu0 0.0
  %2785 = vmatpush1.msra.mxu0 0.0
  %2786 = vmatprep.subr.mxu0 0.0
  %2787 = vmatpush1.msra.mxu0 0.0
  %2788 = vmatprep.subr.mxu0 0.0
  %2789 = vmatpush1.msra.mxu0 0.0
  %2790 = vmatprep.subr.mxu0 0.0
  %2791 = vmatpush1.msra.mxu0 0.0
  %2792 = vmatprep.subr.mxu0 0.0
  %2793 = vmatpush1.msra.mxu0 0.0
  %2794 = vmatprep.subr.mxu0 0.0
  %2795 = vmatpush1.msra.mxu0 0.0
  %2796 = vmatprep.subr.mxu0 0.0
  %2797 = vmatpush1.msra.mxu0 0.0
  %2798 = vmatprep.subr.mxu0 0.0
  %2799 = vmatpush1.msra.mxu0 0.0
  %2800 = vmatprep.subr.mxu0 0.0
  %2801 = vmatpush1.msra.mxu0 0.0
  %2802 = vmatprep.subr.mxu0 0.0
  %2803 = vmatpush1.msra.mxu0 0.0
  %2804 = vmatprep.subr.mxu0 0.0
  %2805 = vmatpush1.msra.mxu0 0.0
  %2806 = vmatprep.subr.mxu0 0.0
  %2807 = vmatpush1.msra.mxu0 0.0
  %2808 = vmatprep.subr.mxu0 0.0
  %2809 = vmatpush1.msra.mxu0 0.0
  %2810 = vmatprep.subr.mxu0 0.0
  %2811 = vmatpush1.msra.mxu0 0.0
  %2812 = vmatprep.subr.mxu0 0.0
  %2813 = vmatpush1.msra.mxu0 0.0
  %2814 = vmatprep.subr.mxu0 0.0
  %2815 = vmatpush1.msra.mxu0 0.0
  %2816 = vmatprep.subr.mxu0 0.0
  %2817 = vmatpush1.msra.mxu0 0.0
  %2818 = vmatprep.subr.mxu0 0.0
  %2819 = vmatpush1.msra.mxu0 0.0
  %2820 = vmatprep.mubr.f32.mxu0 0.0
  %2821 = vmatmul.mubr.f32.gmra.mrb[0].mxu0 %v2754
  %v2822 = vpop.f32.mrb[0].mxu0
  %v2823 = vadd.f32 0.0, %v2822
  %v2824 = vpop.f32.mrb[0].mxu0
  %2825 = vdwg.mxu0
  %2826 = vst.msk [vmem:[%s9] sm:$0xff] %vm364, %v2823
  %v2827 = vld [vmem:[#allocation6 + $0x20] sm:$0xff]
  %v2828 = vld [vmem:[#allocation6 + $0x28] sm:$0xff]
  %v2829 = vld [vmem:[#allocation6 + $0x30] sm:$0xff]
  %v2830 = vld [vmem:[#allocation6 + $0x38] sm:$0xff]
  %2831 = vmatprep.subr.mxu0 0.0
  %2832 = vmatpush1.msra.mxu0 %v2827
  %2833 = vmatprep.subr.mxu0 0.0
  %2834 = vmatpush1.msra.mxu0 %v2828
  %2835 = vmatprep.subr.mxu0 0.0
  %2836 = vmatpush1.msra.mxu0 %v2829
  %2837 = vmatprep.subr.mxu0 0.0
  %2838 = vmatpush1.msra.mxu0 %v2830
  %2839 = vmatprep.subr.mxu0 0.0
  %2840 = vmatpush1.msra.mxu0 0.0
  %2841 = vmatprep.subr.mxu0 0.0
  %2842 = vmatpush1.msra.mxu0 0.0
  %2843 = vmatprep.subr.mxu0 0.0
  %2844 = vmatpush1.msra.mxu0 0.0
  %2845 = vmatprep.subr.mxu0 0.0
  %2846 = vmatpush1.msra.mxu0 0.0
  %2847 = vmatprep.subr.mxu0 0.0
  %2848 = vmatpush1.msra.mxu0 0.0
  %2849 = vmatprep.subr.mxu0 0.0
  %2850 = vmatpush1.msra.mxu0 0.0
  %2851 = vmatprep.subr.mxu0 0.0
  %2852 = vmatpush1.msra.mxu0 0.0
  %2853 = vmatprep.subr.mxu0 0.0
  %2854 = vmatpush1.msra.mxu0 0.0
  %2855 = vmatprep.subr.mxu0 0.0
  %2856 = vmatpush1.msra.mxu0 0.0
  %2857 = vmatprep.subr.mxu0 0.0
  %2858 = vmatpush1.msra.mxu0 0.0
  %2859 = vmatprep.subr.mxu0 0.0
  %2860 = vmatpush1.msra.mxu0 0.0
  %2861 = vmatprep.subr.mxu0 0.0
  %2862 = vmatpush1.msra.mxu0 0.0
  %2863 = vmatprep.subr.mxu0 0.0
  %2864 = vmatpush1.msra.mxu0 0.0
  %2865 = vmatprep.subr.mxu0 0.0
  %2866 = vmatpush1.msra.mxu0 0.0
  %2867 = vmatprep.subr.mxu0 0.0
  %2868 = vmatpush1.msra.mxu0 0.0
  %2869 = vmatprep.subr.mxu0 0.0
  %2870 = vmatpush1.msra.mxu0 0.0
  %2871 = vmatprep.subr.mxu0 0.0
  %2872 = vmatpush1.msra.mxu0 0.0
  %2873 = vmatprep.subr.mxu0 0.0
  %2874 = vmatpush1.msra.mxu0 0.0
  %2875 = vmatprep.subr.mxu0 0.0
  %2876 = vmatpush1.msra.mxu0 0.0
  %2877 = vmatprep.subr.mxu0 0.0
  %2878 = vmatpush1.msra.mxu0 0.0
  %2879 = vmatprep.subr.mxu0 0.0
  %2880 = vmatpush1.msra.mxu0 0.0
  %2881 = vmatprep.subr.mxu0 0.0
  %2882 = vmatpush1.msra.mxu0 0.0
  %2883 = vmatprep.subr.mxu0 0.0
  %2884 = vmatpush1.msra.mxu0 0.0
  %2885 = vmatprep.subr.mxu0 0.0
  %2886 = vmatpush1.msra.mxu0 0.0
  %2887 = vmatprep.subr.mxu0 0.0
  %2888 = vmatpush1.msra.mxu0 0.0
  %2889 = vmatprep.subr.mxu0 0.0
  %2890 = vmatpush1.msra.mxu0 0.0
  %2891 = vmatprep.subr.mxu0 0.0
  %2892 = vmatpush1.msra.mxu0 0.0
  %2893 = vmatprep.subr.mxu0 0.0
  %2894 = vmatpush1.msra.mxu0 0.0
  %2895 = vmatprep.mubr.f32.mxu0 0.0
  %2896 = vmatmul.mubr.f32.gmra.mrb[0].mxu0 %v2754
  %v2897 = vpop.f32.mrb[0].mxu0
  %v2898 = vadd.f32 0.0, %v2897
  %v2899 = vpop.f32.mrb[0].mxu0
  %2900 = vdwg.mxu0
  %2902 = vrot.lane.b32.xlu0 %v2898, 16
  %v2903 = vpop.permute.xlu0 %2902
  %vm2905 = vcmask 261248
  %2906 = vst.msk [vmem:[%s9] sm:$0xff] %vm2905, %v2903
  %v2907 = vld [vmem:[#allocation6 + $0x40] sm:$0xff]
  %v2908 = vld [vmem:[#allocation6 + $0x48] sm:$0xff]
  %v2909 = vld [vmem:[#allocation6 + $0x50] sm:$0xff]
  %v2910 = vld [vmem:[#allocation6 + $0x58] sm:$0xff]
  %2911 = vmatprep.subr.mxu0 0.0
  %2912 = vmatpush1.msra.mxu0 %v2907
  %2913 = vmatprep.subr.mxu0 0.0
  %2914 = vmatpush1.msra.mxu0 %v2908
  %2915 = vmatprep.subr.mxu0 0.0
  %2916 = vmatpush1.msra.mxu0 %v2909
  %2917 = vmatprep.subr.mxu0 0.0
  %2918 = vmatpush1.msra.mxu0 %v2910
  %2919 = vmatprep.subr.mxu0 0.0
  %2920 = vmatpush1.msra.mxu0 0.0
  %2921 = vmatprep.subr.mxu0 0.0
  %2922 = vmatpush1.msra.mxu0 0.0
  %2923 = vmatprep.subr.mxu0 0.0
  %2924 = vmatpush1.msra.mxu0 0.0
  %2925 = vmatprep.subr.mxu0 0.0
  %2926 = vmatpush1.msra.mxu0 0.0
  %2927 = vmatprep.subr.mxu0 0.0
  %2928 = vmatpush1.msra.mxu0 0.0
  %2929 = vmatprep.subr.mxu0 0.0
  %2930 = vmatpush1.msra.mxu0 0.0
  %2931 = vmatprep.subr.mxu0 0.0
  %2932 = vmatpush1.msra.mxu0 0.0
  %2933 = vmatprep.subr.mxu0 0.0
  %2934 = vmatpush1.msra.mxu0 0.0
  %2935 = vmatprep.subr.mxu0 0.0
  %2936 = vmatpush1.msra.mxu0 0.0
  %2937 = vmatprep.subr.mxu0 0.0
  %2938 = vmatpush1.msra.mxu0 0.0
  %2939 = vmatprep.subr.mxu0 0.0
  %2940 = vmatpush1.msra.mxu0 0.0
  %2941 = vmatprep.subr.mxu0 0.0
  %2942 = vmatpush1.msra.mxu0 0.0
  %2943 = vmatprep.subr.mxu0 0.0
  %2944 = vmatpush1.msra.mxu0 0.0
  %2945 = vmatprep.subr.mxu0 0.0
  %2946 = vmatpush1.msra.mxu0 0.0
  %2947 = vmatprep.subr.mxu0 0.0
  %2948 = vmatpush1.msra.mxu0 0.0
  %2949 = vmatprep.subr.mxu0 0.0
  %2950 = vmatpush1.msra.mxu0 0.0
  %2951 = vmatprep.subr.mxu0 0.0
  %2952 = vmatpush1.msra.mxu0 0.0
  %2953 = vmatprep.subr.mxu0 0.0
  %2954 = vmatpush1.msra.mxu0 0.0
  %2955 = vmatprep.subr.mxu0 0.0
  %2956 = vmatpush1.msra.mxu0 0.0
  %2957 = vmatprep.subr.mxu0 0.0
  %2958 = vmatpush1.msra.mxu0 0.0
  %2959 = vmatprep.subr.mxu0 0.0
  %2960 = vmatpush1.msra.mxu0 0.0
  %2961 = vmatprep.subr.mxu0 0.0
  %2962 = vmatpush1.msra.mxu0 0.0
  %2963 = vmatprep.subr.mxu0 0.0
  %2964 = vmatpush1.msra.mxu0 0.0
  %2965 = vmatprep.subr.mxu0 0.0
  %2966 = vmatpush1.msra.mxu0 0.0
  %2967 = vmatprep.subr.mxu0 0.0
  %2968 = vmatpush1.msra.mxu0 0.0
  %2969 = vmatprep.subr.mxu0 0.0
  %2970 = vmatpush1.msra.mxu0 0.0
  %2971 = vmatprep.subr.mxu0 0.0
  %2972 = vmatpush1.msra.mxu0 0.0
  %2973 = vmatprep.subr.mxu0 0.0
  %2974 = vmatpush1.msra.mxu0 0.0
  %2975 = vmatprep.mubr.f32.mxu0 0.0
  %2976 = vmatmul.mubr.f32.gmra.mrb[0].mxu0 %v2754
  %v2977 = vpop.f32.mrb[0].mxu0
  %v2978 = vadd.f32 0.0, %v2977
  %v2979 = vpop.f32.mrb[0].mxu0
  %2980 = vdwg.mxu0
  %2982 = vrot.lane.b32.xlu0 %v2978, 32
  %v2983 = vpop.permute.xlu0 %2982
  %vm2985 = vcmask 392448
  %2986 = vst.msk [vmem:[%s9] sm:$0xff] %vm2985, %v2983
  %v2987 = vld [vmem:[#allocation6 + $0x60] sm:$0xff]
  %v2988 = vld [vmem:[#allocation6 + $0x68] sm:$0xff]
  %v2989 = vld [vmem:[#allocation6 + $0x70] sm:$0xff]
  %v2990 = vld [vmem:[#allocation6 + $0x78] sm:$0xff]
  %2991 = vmatprep.subr.mxu0 0.0
  %2992 = vmatpush1.msra.mxu0 %v2987
  %2993 = vmatprep.subr.mxu0 0.0
  %2994 = vmatpush1.msra.mxu0 %v2988
  %2995 = vmatprep.subr.mxu0 0.0
  %2996 = vmatpush1.msra.mxu0 %v2989
  %2997 = vmatprep.subr.mxu0 0.0
  %2998 = vmatpush1.msra.mxu0 %v2990
  %2999 = vmatprep.subr.mxu0 0.0
  %3000 = vmatpush1.msra.mxu0 0.0
  %3001 = vmatprep.subr.mxu0 0.0
  %3002 = vmatpush1.msra.mxu0 0.0
  %3003 = vmatprep.subr.mxu0 0.0
  %3004 = vmatpush1.msra.mxu0 0.0
  %3005 = vmatprep.subr.mxu0 0.0
  %3006 = vmatpush1.msra.mxu0 0.0
  %3007 = vmatprep.subr.mxu0 0.0
  %3008 = vmatpush1.msra.mxu0 0.0
  %3009 = vmatprep.subr.mxu0 0.0
  %3010 = vmatpush1.msra.mxu0 0.0
  %3011 = vmatprep.subr.mxu0 0.0
  %3012 = vmatpush1.msra.mxu0 0.0
  %3013 = vmatprep.subr.mxu0 0.0
  %3014 = vmatpush1.msra.mxu0 0.0
  %3015 = vmatprep.subr.mxu0 0.0
  %3016 = vmatpush1.msra.mxu0 0.0
  %3017 = vmatprep.subr.mxu0 0.0
  %3018 = vmatpush1.msra.mxu0 0.0
  %3019 = vmatprep.subr.mxu0 0.0
  %3020 = vmatpush1.msra.mxu0 0.0
  %3021 = vmatprep.subr.mxu0 0.0
  %3022 = vmatpush1.msra.mxu0 0.0
  %3023 = vmatprep.subr.mxu0 0.0
  %3024 = vmatpush1.msra.mxu0 0.0
  %3025 = vmatprep.subr.mxu0 0.0
  %3026 = vmatpush1.msra.mxu0 0.0
  %3027 = vmatprep.subr.mxu0 0.0
  %3028 = vmatpush1.msra.mxu0 0.0
  %3029 = vmatprep.subr.mxu0 0.0
  %3030 = vmatpush1.msra.mxu0 0.0
  %3031 = vmatprep.subr.mxu0 0.0
  %3032 = vmatpush1.msra.mxu0 0.0
  %3033 = vmatprep.subr.mxu0 0.0
  %3034 = vmatpush1.msra.mxu0 0.0
  %3035 = vmatprep.subr.mxu0 0.0
  %3036 = vmatpush1.msra.mxu0 0.0
  %3037 = vmatprep.subr.mxu0 0.0
  %3038 = vmatpush1.msra.mxu0 0.0
  %3039 = vmatprep.subr.mxu0 0.0
  %3040 = vmatpush1.msra.mxu0 0.0
  %3041 = vmatprep.subr.mxu0 0.0
  %3042 = vmatpush1.msra.mxu0 0.0
  %3043 = vmatprep.subr.mxu0 0.0
  %3044 = vmatpush1.msra.mxu0 0.0
  %3045 = vmatprep.subr.mxu0 0.0
  %3046 = vmatpush1.msra.mxu0 0.0
  %3047 = vmatprep.subr.mxu0 0.0
  %3048 = vmatpush1.msra.mxu0 0.0
  %3049 = vmatprep.subr.mxu0 0.0
  %3050 = vmatpush1.msra.mxu0 0.0
  %3051 = vmatprep.subr.mxu0 0.0
  %3052 = vmatpush1.msra.mxu0 0.0
  %3053 = vmatprep.subr.mxu0 0.0
  %3054 = vmatpush1.msra.mxu0 0.0
  %3055 = vmatprep.mubr.f32.mxu0 0.0
  %3056 = vmatmul.mubr.f32.gmra.mrb[0].mxu0 %v2754
  %v3057 = vpop.f32.mrb[0].mxu0
  %v3058 = vadd.f32 0.0, %v3057
  %v3059 = vpop.f32.mrb[0].mxu0
  %3060 = vdwg.mxu0
  %3062 = vrot.lane.b32.xlu0 %v3058, 48
  %v3063 = vpop.permute.xlu0 %3062
  %vm3065 = vcmask 523648
  %3066 = vst.msk [vmem:[%s9] sm:$0xff] %vm3065, %v3063
  %v3067 = vld [vmem:[#allocation6 + $0x80] sm:$0xff]
  %v3068 = vld [vmem:[#allocation6 + $0x88] sm:$0xff]
  %v3069 = vld [vmem:[#allocation6 + $0x90] sm:$0xff]
  %v3070 = vld [vmem:[#allocation6 + $0x98] sm:$0xff]
  %3071 = vmatprep.subr.mxu0 0.0
  %3072 = vmatpush1.msra.mxu0 %v3067
  %3073 = vmatprep.subr.mxu0 0.0
  %3074 = vmatpush1.msra.mxu0 %v3068
  %3075 = vmatprep.subr.mxu0 0.0
  %3076 = vmatpush1.msra.mxu0 %v3069
  %3077 = vmatprep.subr.mxu0 0.0
  %3078 = vmatpush1.msra.mxu0 %v3070
  %3079 = vmatprep.subr.mxu0 0.0
  %3080 = vmatpush1.msra.mxu0 0.0
  %3081 = vmatprep.subr.mxu0 0.0
  %3082 = vmatpush1.msra.mxu0 0.0
  %3083 = vmatprep.subr.mxu0 0.0
  %3084 = vmatpush1.msra.mxu0 0.0
  %3085 = vmatprep.subr.mxu0 0.0
  %3086 = vmatpush1.msra.mxu0 0.0
  %3087 = vmatprep.subr.mxu0 0.0
  %3088 = vmatpush1.msra.mxu0 0.0
  %3089 = vmatprep.subr.mxu0 0.0
  %3090 = vmatpush1.msra.mxu0 0.0
  %3091 = vmatprep.subr.mxu0 0.0
  %3092 = vmatpush1.msra.mxu0 0.0
  %3093 = vmatprep.subr.mxu0 0.0
  %3094 = vmatpush1.msra.mxu0 0.0
  %3095 = vmatprep.subr.mxu0 0.0
  %3096 = vmatpush1.msra.mxu0 0.0
  %3097 = vmatprep.subr.mxu0 0.0
  %3098 = vmatpush1.msra.mxu0 0.0
  %3099 = vmatprep.subr.mxu0 0.0
  %3100 = vmatpush1.msra.mxu0 0.0
  %3101 = vmatprep.subr.mxu0 0.0
  %3102 = vmatpush1.msra.mxu0 0.0
  %3103 = vmatprep.subr.mxu0 0.0
  %3104 = vmatpush1.msra.mxu0 0.0
  %3105 = vmatprep.subr.mxu0 0.0
  %3106 = vmatpush1.msra.mxu0 0.0
  %3107 = vmatprep.subr.mxu0 0.0
  %3108 = vmatpush1.msra.mxu0 0.0
  %3109 = vmatprep.subr.mxu0 0.0
  %3110 = vmatpush1.msra.mxu0 0.0
  %3111 = vmatprep.subr.mxu0 0.0
  %3112 = vmatpush1.msra.mxu0 0.0
  %3113 = vmatprep.subr.mxu0 0.0
  %3114 = vmatpush1.msra.mxu0 0.0
  %3115 = vmatprep.subr.mxu0 0.0
  %3116 = vmatpush1.msra.mxu0 0.0
  %3117 = vmatprep.subr.mxu0 0.0
  %3118 = vmatpush1.msra.mxu0 0.0
  %3119 = vmatprep.subr.mxu0 0.0
  %3120 = vmatpush1.msra.mxu0 0.0
  %3121 = vmatprep.subr.mxu0 0.0
  %3122 = vmatpush1.msra.mxu0 0.0
  %3123 = vmatprep.subr.mxu0 0.0
  %3124 = vmatpush1.msra.mxu0 0.0
  %3125 = vmatprep.subr.mxu0 0.0
  %3126 = vmatpush1.msra.mxu0 0.0
  %3127 = vmatprep.subr.mxu0 0.0
  %3128 = vmatpush1.msra.mxu0 0.0
  %3129 = vmatprep.subr.mxu0 0.0
  %3130 = vmatpush1.msra.mxu0 0.0
  %3131 = vmatprep.subr.mxu0 0.0
  %3132 = vmatpush1.msra.mxu0 0.0
  %3133 = vmatprep.subr.mxu0 0.0
  %3134 = vmatpush1.msra.mxu0 0.0
  %3135 = vmatprep.mubr.f32.mxu0 0.0
  %3136 = vmatmul.mubr.f32.gmra.mrb[0].mxu0 %v2754
  %v3137 = vpop.f32.mrb[0].mxu0
  %v3138 = vadd.f32 0.0, %v3137
  %v3139 = vpop.f32.mrb[0].mxu0
  %3140 = vdwg.mxu0
  %3142 = vrot.lane.b32.xlu0 %v3138, 64
  %v3143 = vpop.permute.xlu0 %3142
  %vm3145 = vcmask 654848
  %3146 = vst.msk [vmem:[%s9] sm:$0xff] %vm3145, %v3143
  %v3147 = vld [vmem:[#allocation6 + $0xa0] sm:$0xff]
  %v3148 = vld [vmem:[#allocation6 + $0xa8] sm:$0xff]
  %v3149 = vld [vmem:[#allocation6 + $0xb0] sm:$0xff]
  %v3150 = vld [vmem:[#allocation6 + $0xb8] sm:$0xff]
  %3151 = vmatprep.subr.mxu0 0.0
  %3152 = vmatpush1.msra.mxu0 %v3147
  %3153 = vmatprep.subr.mxu0 0.0
  %3154 = vmatpush1.msra.mxu0 %v3148
  %3155 = vmatprep.subr.mxu0 0.0
  %3156 = vmatpush1.msra.mxu0 %v3149
  %3157 = vmatprep.subr.mxu0 0.0
  %3158 = vmatpush1.msra.mxu0 %v3150
  %3159 = vmatprep.subr.mxu0 0.0
  %3160 = vmatpush1.msra.mxu0 0.0
  %3161 = vmatprep.subr.mxu0 0.0
  %3162 = vmatpush1.msra.mxu0 0.0
  %3163 = vmatprep.subr.mxu0 0.0
  %3164 = vmatpush1.msra.mxu0 0.0
  %3165 = vmatprep.subr.mxu0 0.0
  %3166 = vmatpush1.msra.mxu0 0.0
  %3167 = vmatprep.subr.mxu0 0.0
  %3168 = vmatpush1.msra.mxu0 0.0
  %3169 = vmatprep.subr.mxu0 0.0
  %3170 = vmatpush1.msra.mxu0 0.0
  %3171 = vmatprep.subr.mxu0 0.0
  %3172 = vmatpush1.msra.mxu0 0.0
  %3173 = vmatprep.subr.mxu0 0.0
  %3174 = vmatpush1.msra.mxu0 0.0
  %3175 = vmatprep.subr.mxu0 0.0
  %3176 = vmatpush1.msra.mxu0 0.0
  %3177 = vmatprep.subr.mxu0 0.0
  %3178 = vmatpush1.msra.mxu0 0.0
  %3179 = vmatprep.subr.mxu0 0.0
  %3180 = vmatpush1.msra.mxu0 0.0
  %3181 = vmatprep.subr.mxu0 0.0
  %3182 = vmatpush1.msra.mxu0 0.0
  %3183 = vmatprep.subr.mxu0 0.0
  %3184 = vmatpush1.msra.mxu0 0.0
  %3185 = vmatprep.subr.mxu0 0.0
  %3186 = vmatpush1.msra.mxu0 0.0
  %3187 = vmatprep.subr.mxu0 0.0
  %3188 = vmatpush1.msra.mxu0 0.0
  %3189 = vmatprep.subr.mxu0 0.0
  %3190 = vmatpush1.msra.mxu0 0.0
  %3191 = vmatprep.subr.mxu0 0.0
  %3192 = vmatpush1.msra.mxu0 0.0
  %3193 = vmatprep.subr.mxu0 0.0
  %3194 = vmatpush1.msra.mxu0 0.0
  %3195 = vmatprep.subr.mxu0 0.0
  %3196 = vmatpush1.msra.mxu0 0.0
  %3197 = vmatprep.subr.mxu0 0.0
  %3198 = vmatpush1.msra.mxu0 0.0
  %3199 = vmatprep.subr.mxu0 0.0
  %3200 = vmatpush1.msra.mxu0 0.0
  %3201 = vmatprep.subr.mxu0 0.0
  %3202 = vmatpush1.msra.mxu0 0.0
  %3203 = vmatprep.subr.mxu0 0.0
  %3204 = vmatpush1.msra.mxu0 0.0
  %3205 = vmatprep.subr.mxu0 0.0
  %3206 = vmatpush1.msra.mxu0 0.0
  %3207 = vmatprep.subr.mxu0 0.0
  %3208 = vmatpush1.msra.mxu0 0.0
  %3209 = vmatprep.subr.mxu0 0.0
  %3210 = vmatpush1.msra.mxu0 0.0
  %3211 = vmatprep.subr.mxu0 0.0
  %3212 = vmatpush1.msra.mxu0 0.0
  %3213 = vmatprep.subr.mxu0 0.0
  %3214 = vmatpush1.msra.mxu0 0.0
  %3215 = vmatprep.mubr.f32.mxu0 0.0
  %3216 = vmatmul.mubr.f32.gmra.mrb[0].mxu0 %v2754
  %v3217 = vpop.f32.mrb[0].mxu0
  %v3218 = vadd.f32 0.0, %v3217
  %v3219 = vpop.f32.mrb[0].mxu0
  %3220 = vdwg.mxu0
  %3222 = vrot.lane.b32.xlu0 %v3218, 80
  %v3223 = vpop.permute.xlu0 %3222
  %vm3225 = vcmask 786048
  %3226 = vst.msk [vmem:[%s9] sm:$0xff] %vm3225, %v3223
  %v3227 = vld [vmem:[#allocation6 + $0xc0] sm:$0xff]
  %v3228 = vld [vmem:[#allocation6 + $0xc8] sm:$0xff]
  %v3229 = vld [vmem:[#allocation6 + $0xd0] sm:$0xff]
  %v3230 = vld [vmem:[#allocation6 + $0xd8] sm:$0xff]
  %3231 = vmatprep.subr.mxu0 0.0
  %3232 = vmatpush1.msra.mxu0 %v3227
  %3233 = vmatprep.subr.mxu0 0.0
  %3234 = vmatpush1.msra.mxu0 %v3228
  %3235 = vmatprep.subr.mxu0 0.0
  %3236 = vmatpush1.msra.mxu0 %v3229
  %3237 = vmatprep.subr.mxu0 0.0
  %3238 = vmatpush1.msra.mxu0 %v3230
  %3239 = vmatprep.subr.mxu0 0.0
  %3240 = vmatpush1.msra.mxu0 0.0
  %3241 = vmatprep.subr.mxu0 0.0
  %3242 = vmatpush1.msra.mxu0 0.0
  %3243 = vmatprep.subr.mxu0 0.0
  %3244 = vmatpush1.msra.mxu0 0.0
  %3245 = vmatprep.subr.mxu0 0.0
  %3246 = vmatpush1.msra.mxu0 0.0
  %3247 = vmatprep.subr.mxu0 0.0
  %3248 = vmatpush1.msra.mxu0 0.0
  %3249 = vmatprep.subr.mxu0 0.0
  %3250 = vmatpush1.msra.mxu0 0.0
  %3251 = vmatprep.subr.mxu0 0.0
  %3252 = vmatpush1.msra.mxu0 0.0
  %3253 = vmatprep.subr.mxu0 0.0
  %3254 = vmatpush1.msra.mxu0 0.0
  %3255 = vmatprep.subr.mxu0 0.0
  %3256 = vmatpush1.msra.mxu0 0.0
  %3257 = vmatprep.subr.mxu0 0.0
  %3258 = vmatpush1.msra.mxu0 0.0
  %3259 = vmatprep.subr.mxu0 0.0
  %3260 = vmatpush1.msra.mxu0 0.0
  %3261 = vmatprep.subr.mxu0 0.0
  %3262 = vmatpush1.msra.mxu0 0.0
  %3263 = vmatprep.subr.mxu0 0.0
  %3264 = vmatpush1.msra.mxu0 0.0
  %3265 = vmatprep.subr.mxu0 0.0
  %3266 = vmatpush1.msra.mxu0 0.0
  %3267 = vmatprep.subr.mxu0 0.0
  %3268 = vmatpush1.msra.mxu0 0.0
  %3269 = vmatprep.subr.mxu0 0.0
  %3270 = vmatpush1.msra.mxu0 0.0
  %3271 = vmatprep.subr.mxu0 0.0
  %3272 = vmatpush1.msra.mxu0 0.0
  %3273 = vmatprep.subr.mxu0 0.0
  %3274 = vmatpush1.msra.mxu0 0.0
  %3275 = vmatprep.subr.mxu0 0.0
  %3276 = vmatpush1.msra.mxu0 0.0
  %3277 = vmatprep.subr.mxu0 0.0
  %3278 = vmatpush1.msra.mxu0 0.0
  %3279 = vmatprep.subr.mxu0 0.0
  %3280 = vmatpush1.msra.mxu0 0.0
  %3281 = vmatprep.subr.mxu0 0.0
  %3282 = vmatpush1.msra.mxu0 0.0
  %3283 = vmatprep.subr.mxu0 0.0
  %3284 = vmatpush1.msra.mxu0 0.0
  %3285 = vmatprep.subr.mxu0 0.0
  %3286 = vmatpush1.msra.mxu0 0.0
  %3287 = vmatprep.subr.mxu0 0.0
  %3288 = vmatpush1.msra.mxu0 0.0
  %3289 = vmatprep.subr.mxu0 0.0
  %3290 = vmatpush1.msra.mxu0 0.0
  %3291 = vmatprep.subr.mxu0 0.0
  %3292 = vmatpush1.msra.mxu0 0.0
  %3293 = vmatprep.subr.mxu0 0.0
  %3294 = vmatpush1.msra.mxu0 0.0
  %3295 = vmatprep.mubr.f32.mxu0 0.0
  %3296 = vmatmul.mubr.f32.gmra.mrb[0].mxu0 %v2754
  %v3297 = vpop.f32.mrb[0].mxu0
  %v3298 = vadd.f32 0.0, %v3297
  %v3299 = vpop.f32.mrb[0].mxu0
  %3300 = vdwg.mxu0
  %3302 = vrot.lane.b32.xlu0 %v3298, 96
  %v3303 = vpop.permute.xlu0 %3302
  %vm3305 = vcmask 917248
  %3306 = vst.msk [vmem:[%s9] sm:$0xff] %vm3305, %v3303
  %v3307 = vld [vmem:[#allocation6 + $0xe0] sm:$0xff]
  %v3308 = vld [vmem:[#allocation6 + $0xe8] sm:$0xff]
  %v3309 = vld [vmem:[#allocation6 + $0xf0] sm:$0xff]
  %v3310 = vld [vmem:[#allocation6 + $0xf8] sm:$0xff]
  %3311 = vmatprep.subr.mxu0 0.0
  %3312 = vmatpush1.msra.mxu0 %v3307
  %3313 = vmatprep.subr.mxu0 0.0
  %3314 = vmatpush1.msra.mxu0 %v3308
  %3315 = vmatprep.subr.mxu0 0.0
  %3316 = vmatpush1.msra.mxu0 %v3309
  %3317 = vmatprep.subr.mxu0 0.0
  %3318 = vmatpush1.msra.mxu0 %v3310
  %3319 = vmatprep.subr.mxu0 0.0
  %3320 = vmatpush1.msra.mxu0 0.0
  %3321 = vmatprep.subr.mxu0 0.0
  %3322 = vmatpush1.msra.mxu0 0.0
  %3323 = vmatprep.subr.mxu0 0.0
  %3324 = vmatpush1.msra.mxu0 0.0
  %3325 = vmatprep.subr.mxu0 0.0
  %3326 = vmatpush1.msra.mxu0 0.0
  %3327 = vmatprep.subr.mxu0 0.0
  %3328 = vmatpush1.msra.mxu0 0.0
  %3329 = vmatprep.subr.mxu0 0.0
  %3330 = vmatpush1.msra.mxu0 0.0
  %3331 = vmatprep.subr.mxu0 0.0
  %3332 = vmatpush1.msra.mxu0 0.0
  %3333 = vmatprep.subr.mxu0 0.0
  %3334 = vmatpush1.msra.mxu0 0.0
  %3335 = vmatprep.subr.mxu0 0.0
  %3336 = vmatpush1.msra.mxu0 0.0
  %3337 = vmatprep.subr.mxu0 0.0
  %3338 = vmatpush1.msra.mxu0 0.0
  %3339 = vmatprep.subr.mxu0 0.0
  %3340 = vmatpush1.msra.mxu0 0.0
  %3341 = vmatprep.subr.mxu0 0.0
  %3342 = vmatpush1.msra.mxu0 0.0
  %3343 = vmatprep.subr.mxu0 0.0
  %3344 = vmatpush1.msra.mxu0 0.0
  %3345 = vmatprep.subr.mxu0 0.0
  %3346 = vmatpush1.msra.mxu0 0.0
  %3347 = vmatprep.subr.mxu0 0.0
  %3348 = vmatpush1.msra.mxu0 0.0
  %3349 = vmatprep.subr.mxu0 0.0
  %3350 = vmatpush1.msra.mxu0 0.0
  %3351 = vmatprep.subr.mxu0 0.0
  %3352 = vmatpush1.msra.mxu0 0.0
  %3353 = vmatprep.subr.mxu0 0.0
  %3354 = vmatpush1.msra.mxu0 0.0
  %3355 = vmatprep.subr.mxu0 0.0
  %3356 = vmatpush1.msra.mxu0 0.0
  %3357 = vmatprep.subr.mxu0 0.0
  %3358 = vmatpush1.msra.mxu0 0.0
  %3359 = vmatprep.subr.mxu0 0.0
  %3360 = vmatpush1.msra.mxu0 0.0
  %3361 = vmatprep.subr.mxu0 0.0
  %3362 = vmatpush1.msra.mxu0 0.0
  %3363 = vmatprep.subr.mxu0 0.0
  %3364 = vmatpush1.msra.mxu0 0.0
  %3365 = vmatprep.subr.mxu0 0.0
  %3366 = vmatpush1.msra.mxu0 0.0
  %3367 = vmatprep.subr.mxu0 0.0
  %3368 = vmatpush1.msra.mxu0 0.0
  %3369 = vmatprep.subr.mxu0 0.0
  %3370 = vmatpush1.msra.mxu0 0.0
  %3371 = vmatprep.subr.mxu0 0.0
  %3372 = vmatpush1.msra.mxu0 0.0
  %3373 = vmatprep.subr.mxu0 0.0
  %3374 = vmatpush1.msra.mxu0 0.0
  %3375 = vmatprep.mubr.f32.mxu0 0.0
  %3376 = vmatmul.mubr.f32.gmra.mrb[0].mxu0 %v2754
  %v3377 = vpop.f32.mrb[0].mxu0
  %v3378 = vadd.f32 0.0, %v3377
  %v3379 = vpop.f32.mrb[0].mxu0
  %3380 = vdwg.mxu0
  %3382 = vrot.lane.b32.xlu0 %v3378, 112
  %v3383 = vpop.permute.xlu0 %3382
  %vm3385 = vcmask 1048448
  %3386 = vst.msk [vmem:[%s9] sm:$0xff] %vm3385, %v3383
  %v3387 = vld [vmem:[#allocation6 + $0x100] sm:$0xff]
  %v3388 = vld [vmem:[#allocation6 + $0x108] sm:$0xff]
  %v3389 = vld [vmem:[#allocation6 + $0x110] sm:$0xff]
  %v3390 = vld [vmem:[#allocation6 + $0x118] sm:$0xff]
  %3391 = vmatprep.subr.mxu0 0.0
  %3392 = vmatpush1.msra.mxu0 %v3387
  %3393 = vmatprep.subr.mxu0 0.0
  %3394 = vmatpush1.msra.mxu0 %v3388
  %3395 = vmatprep.subr.mxu0 0.0
  %3396 = vmatpush1.msra.mxu0 %v3389
  %3397 = vmatprep.subr.mxu0 0.0
  %3398 = vmatpush1.msra.mxu0 %v3390
  %3399 = vmatprep.subr.mxu0 0.0
  %3400 = vmatpush1.msra.mxu0 0.0
  %3401 = vmatprep.subr.mxu0 0.0
  %3402 = vmatpush1.msra.mxu0 0.0
  %3403 = vmatprep.subr.mxu0 0.0
  %3404 = vmatpush1.msra.mxu0 0.0
  %3405 = vmatprep.subr.mxu0 0.0
  %3406 = vmatpush1.msra.mxu0 0.0
  %3407 = vmatprep.subr.mxu0 0.0
  %3408 = vmatpush1.msra.mxu0 0.0
  %3409 = vmatprep.subr.mxu0 0.0
  %3410 = vmatpush1.msra.mxu0 0.0
  %3411 = vmatprep.subr.mxu0 0.0
  %3412 = vmatpush1.msra.mxu0 0.0
  %3413 = vmatprep.subr.mxu0 0.0
  %3414 = vmatpush1.msra.mxu0 0.0
  %3415 = vmatprep.subr.mxu0 0.0
  %3416 = vmatpush1.msra.mxu0 0.0
  %3417 = vmatprep.subr.mxu0 0.0
  %3418 = vmatpush1.msra.mxu0 0.0
  %3419 = vmatprep.subr.mxu0 0.0
  %3420 = vmatpush1.msra.mxu0 0.0
  %3421 = vmatprep.subr.mxu0 0.0
  %3422 = vmatpush1.msra.mxu0 0.0
  %3423 = vmatprep.subr.mxu0 0.0
  %3424 = vmatpush1.msra.mxu0 0.0
  %3425 = vmatprep.subr.mxu0 0.0
  %3426 = vmatpush1.msra.mxu0 0.0
  %3427 = vmatprep.subr.mxu0 0.0
  %3428 = vmatpush1.msra.mxu0 0.0
  %3429 = vmatprep.subr.mxu0 0.0
  %3430 = vmatpush1.msra.mxu0 0.0
  %3431 = vmatprep.subr.mxu0 0.0
  %3432 = vmatpush1.msra.mxu0 0.0
  %3433 = vmatprep.subr.mxu0 0.0
  %3434 = vmatpush1.msra.mxu0 0.0
  %3435 = vmatprep.subr.mxu0 0.0
  %3436 = vmatpush1.msra.mxu0 0.0
  %3437 = vmatprep.subr.mxu0 0.0
  %3438 = vmatpush1.msra.mxu0 0.0
  %3439 = vmatprep.subr.mxu0 0.0
  %3440 = vmatpush1.msra.mxu0 0.0
  %3441 = vmatprep.subr.mxu0 0.0
  %3442 = vmatpush1.msra.mxu0 0.0
  %3443 = vmatprep.subr.mxu0 0.0
  %3444 = vmatpush1.msra.mxu0 0.0
  %3445 = vmatprep.subr.mxu0 0.0
  %3446 = vmatpush1.msra.mxu0 0.0
  %3447 = vmatprep.subr.mxu0 0.0
  %3448 = vmatpush1.msra.mxu0 0.0
  %3449 = vmatprep.subr.mxu0 0.0
  %3450 = vmatpush1.msra.mxu0 0.0
  %3451 = vmatprep.subr.mxu0 0.0
  %3452 = vmatpush1.msra.mxu0 0.0
  %3453 = vmatprep.subr.mxu0 0.0
  %3454 = vmatpush1.msra.mxu0 0.0
  %3455 = vmatprep.mubr.f32.mxu0 0.0
  %3456 = vmatmul.mubr.f32.gmra.mrb[0].mxu0 %v2754
  %v3457 = vpop.f32.mrb[0].mxu0
  %v3458 = vadd.f32 0.0, %v3457
  %v3459 = vpop.f32.mrb[0].mxu0
  %3460 = vdwg.mxu0
  %3461 = vst.msk [vmem:[%s9 + $0x8] sm:$0xff] %vm364, %v3458
  %v3462 = vld [vmem:[#allocation6 + $0x120] sm:$0xff]
  %v3463 = vld [vmem:[#allocation6 + $0x128] sm:$0xff]
  %v3464 = vld [vmem:[#allocation6 + $0x130] sm:$0xff]
  %v3465 = vld [vmem:[#allocation6 + $0x138] sm:$0xff]
  %3466 = vmatprep.subr.mxu0 0.0
  %3467 = vmatpush1.msra.mxu0 %v3462
  %3468 = vmatprep.subr.mxu0 0.0
  %3469 = vmatpush1.msra.mxu0 %v3463
  %3470 = vmatprep.subr.mxu0 0.0
  %3471 = vmatpush1.msra.mxu0 %v3464
  %3472 = vmatprep.subr.mxu0 0.0
  %3473 = vmatpush1.msra.mxu0 %v3465
  %3474 = vmatprep.subr.mxu0 0.0
  %3475 = vmatpush1.msra.mxu0 0.0
  %3476 = vmatprep.subr.mxu0 0.0
  %3477 = vmatpush1.msra.mxu0 0.0
  %3478 = vmatprep.subr.mxu0 0.0
  %3479 = vmatpush1.msra.mxu0 0.0
  %3480 = vmatprep.subr.mxu0 0.0
  %3481 = vmatpush1.msra.mxu0 0.0
  %3482 = vmatprep.subr.mxu0 0.0
  %3483 = vmatpush1.msra.mxu0 0.0
  %3484 = vmatprep.subr.mxu0 0.0
  %3485 = vmatpush1.msra.mxu0 0.0
  %3486 = vmatprep.subr.mxu0 0.0
  %3487 = vmatpush1.msra.mxu0 0.0
  %3488 = vmatprep.subr.mxu0 0.0
  %3489 = vmatpush1.msra.mxu0 0.0
  %3490 = vmatprep.subr.mxu0 0.0
  %3491 = vmatpush1.msra.mxu0 0.0
  %3492 = vmatprep.subr.mxu0 0.0
  %3493 = vmatpush1.msra.mxu0 0.0
  %3494 = vmatprep.subr.mxu0 0.0
  %3495 = vmatpush1.msra.mxu0 0.0
  %3496 = vmatprep.subr.mxu0 0.0
  %3497 = vmatpush1.msra.mxu0 0.0
  %3498 = vmatprep.subr.mxu0 0.0
  %3499 = vmatpush1.msra.mxu0 0.0
  %3500 = vmatprep.subr.mxu0 0.0
  %3501 = vmatpush1.msra.mxu0 0.0
  %3502 = vmatprep.subr.mxu0 0.0
  %3503 = vmatpush1.msra.mxu0 0.0
  %3504 = vmatprep.subr.mxu0 0.0
  %3505 = vmatpush1.msra.mxu0 0.0
  %3506 = vmatprep.subr.mxu0 0.0
  %3507 = vmatpush1.msra.mxu0 0.0
  %3508 = vmatprep.subr.mxu0 0.0
  %3509 = vmatpush1.msra.mxu0 0.0
  %3510 = vmatprep.subr.mxu0 0.0
  %3511 = vmatpush1.msra.mxu0 0.0
  %3512 = vmatprep.subr.mxu0 0.0
  %3513 = vmatpush1.msra.mxu0 0.0
  %3514 = vmatprep.subr.mxu0 0.0
  %3515 = vmatpush1.msra.mxu0 0.0
  %3516 = vmatprep.subr.mxu0 0.0
  %3517 = vmatpush1.msra.mxu0 0.0
  %3518 = vmatprep.subr.mxu0 0.0
  %3519 = vmatpush1.msra.mxu0 0.0
  %3520 = vmatprep.subr.mxu0 0.0
  %3521 = vmatpush1.msra.mxu0 0.0
  %3522 = vmatprep.subr.mxu0 0.0
  %3523 = vmatpush1.msra.mxu0 0.0
  %3524 = vmatprep.subr.mxu0 0.0
  %3525 = vmatpush1.msra.mxu0 0.0
  %3526 = vmatprep.subr.mxu0 0.0
  %3527 = vmatpush1.msra.mxu0 0.0
  %3528 = vmatprep.subr.mxu0 0.0
  %3529 = vmatpush1.msra.mxu0 0.0
  %3530 = vmatprep.mubr.f32.mxu0 0.0
  %3531 = vmatmul.mubr.f32.gmra.mrb[0].mxu0 %v2754
  %v3532 = vpop.f32.mrb[0].mxu0
  %v3533 = vadd.f32 0.0, %v3532
  %v3534 = vpop.f32.mrb[0].mxu0
  %3535 = vdwg.mxu0
  %3537 = vrot.lane.b32.xlu0 %v3533, 16
  %v3538 = vpop.permute.xlu0 %3537
  %3540 = vst.msk [vmem:[%s9 + $0x8] sm:$0xff] %vm2905, %v3538
  %v3541 = vld [vmem:[#allocation6 + $0x140] sm:$0xff]
  %v3542 = vld [vmem:[#allocation6 + $0x148] sm:$0xff]
  %v3543 = vld [vmem:[#allocation6 + $0x150] sm:$0xff]
  %v3544 = vld [vmem:[#allocation6 + $0x158] sm:$0xff]
  %3545 = vmatprep.subr.mxu0 0.0
  %3546 = vmatpush1.msra.mxu0 %v3541
  %3547 = vmatprep.subr.mxu0 0.0
  %3548 = vmatpush1.msra.mxu0 %v3542
  %3549 = vmatprep.subr.mxu0 0.0
  %3550 = vmatpush1.msra.mxu0 %v3543
  %3551 = vmatprep.subr.mxu0 0.0
  %3552 = vmatpush1.msra.mxu0 %v3544
  %3553 = vmatprep.subr.mxu0 0.0
  %3554 = vmatpush1.msra.mxu0 0.0
  %3555 = vmatprep.subr.mxu0 0.0
  %3556 = vmatpush1.msra.mxu0 0.0
  %3557 = vmatprep.subr.mxu0 0.0
  %3558 = vmatpush1.msra.mxu0 0.0
  %3559 = vmatprep.subr.mxu0 0.0
  %3560 = vmatpush1.msra.mxu0 0.0
  %3561 = vmatprep.subr.mxu0 0.0
  %3562 = vmatpush1.msra.mxu0 0.0
  %3563 = vmatprep.subr.mxu0 0.0
  %3564 = vmatpush1.msra.mxu0 0.0
  %3565 = vmatprep.subr.mxu0 0.0
  %3566 = vmatpush1.msra.mxu0 0.0
  %3567 = vmatprep.subr.mxu0 0.0
  %3568 = vmatpush1.msra.mxu0 0.0
  %3569 = vmatprep.subr.mxu0 0.0
  %3570 = vmatpush1.msra.mxu0 0.0
  %3571 = vmatprep.subr.mxu0 0.0
  %3572 = vmatpush1.msra.mxu0 0.0
  %3573 = vmatprep.subr.mxu0 0.0
  %3574 = vmatpush1.msra.mxu0 0.0
  %3575 = vmatprep.subr.mxu0 0.0
  %3576 = vmatpush1.msra.mxu0 0.0
  %3577 = vmatprep.subr.mxu0 0.0
  %3578 = vmatpush1.msra.mxu0 0.0
  %3579 = vmatprep.subr.mxu0 0.0
  %3580 = vmatpush1.msra.mxu0 0.0
  %3581 = vmatprep.subr.mxu0 0.0
  %3582 = vmatpush1.msra.mxu0 0.0
  %3583 = vmatprep.subr.mxu0 0.0
  %3584 = vmatpush1.msra.mxu0 0.0
  %3585 = vmatprep.subr.mxu0 0.0
  %3586 = vmatpush1.msra.mxu0 0.0
  %3587 = vmatprep.subr.mxu0 0.0
  %3588 = vmatpush1.msra.mxu0 0.0
  %3589 = vmatprep.subr.mxu0 0.0
  %3590 = vmatpush1.msra.mxu0 0.0
  %3591 = vmatprep.subr.mxu0 0.0
  %3592 = vmatpush1.msra.mxu0 0.0
  %3593 = vmatprep.subr.mxu0 0.0
  %3594 = vmatpush1.msra.mxu0 0.0
  %3595 = vmatprep.subr.mxu0 0.0
  %3596 = vmatpush1.msra.mxu0 0.0
  %3597 = vmatprep.subr.mxu0 0.0
  %3598 = vmatpush1.msra.mxu0 0.0
  %3599 = vmatprep.subr.mxu0 0.0
  %3600 = vmatpush1.msra.mxu0 0.0
  %3601 = vmatprep.subr.mxu0 0.0
  %3602 = vmatpush1.msra.mxu0 0.0
  %3603 = vmatprep.subr.mxu0 0.0
  %3604 = vmatpush1.msra.mxu0 0.0
  %3605 = vmatprep.subr.mxu0 0.0
  %3606 = vmatpush1.msra.mxu0 0.0
  %3607 = vmatprep.subr.mxu0 0.0
  %3608 = vmatpush1.msra.mxu0 0.0
  %3609 = vmatprep.mubr.f32.mxu0 0.0
  %3610 = vmatmul.mubr.f32.gmra.mrb[0].mxu0 %v2754
  %v3611 = vpop.f32.mrb[0].mxu0
  %v3612 = vadd.f32 0.0, %v3611
  %v3613 = vpop.f32.mrb[0].mxu0
  %3614 = vdwg.mxu0
  %3616 = vrot.lane.b32.xlu0 %v3612, 32
  %v3617 = vpop.permute.xlu0 %3616
  %3619 = vst.msk [vmem:[%s9 + $0x8] sm:$0xff] %vm2985, %v3617
  %v3620 = vld [vmem:[#allocation6 + $0x160] sm:$0xff]
  %v3621 = vld [vmem:[#allocation6 + $0x168] sm:$0xff]
  %v3622 = vld [vmem:[#allocation6 + $0x170] sm:$0xff]
  %v3623 = vld [vmem:[#allocation6 + $0x178] sm:$0xff]
  %3624 = vmatprep.subr.mxu0 0.0
  %3625 = vmatpush1.msra.mxu0 %v3620
  %3626 = vmatprep.subr.mxu0 0.0
  %3627 = vmatpush1.msra.mxu0 %v3621
  %3628 = vmatprep.subr.mxu0 0.0
  %3629 = vmatpush1.msra.mxu0 %v3622
  %3630 = vmatprep.subr.mxu0 0.0
  %3631 = vmatpush1.msra.mxu0 %v3623
  %3632 = vmatprep.subr.mxu0 0.0
  %3633 = vmatpush1.msra.mxu0 0.0
  %3634 = vmatprep.subr.mxu0 0.0
  %3635 = vmatpush1.msra.mxu0 0.0
  %3636 = vmatprep.subr.mxu0 0.0
  %3637 = vmatpush1.msra.mxu0 0.0
  %3638 = vmatprep.subr.mxu0 0.0
  %3639 = vmatpush1.msra.mxu0 0.0
  %3640 = vmatprep.subr.mxu0 0.0
  %3641 = vmatpush1.msra.mxu0 0.0
  %3642 = vmatprep.subr.mxu0 0.0
  %3643 = vmatpush1.msra.mxu0 0.0
  %3644 = vmatprep.subr.mxu0 0.0
  %3645 = vmatpush1.msra.mxu0 0.0
  %3646 = vmatprep.subr.mxu0 0.0
  %3647 = vmatpush1.msra.mxu0 0.0
  %3648 = vmatprep.subr.mxu0 0.0
  %3649 = vmatpush1.msra.mxu0 0.0
  %3650 = vmatprep.subr.mxu0 0.0
  %3651 = vmatpush1.msra.mxu0 0.0
  %3652 = vmatprep.subr.mxu0 0.0
  %3653 = vmatpush1.msra.mxu0 0.0
  %3654 = vmatprep.subr.mxu0 0.0
  %3655 = vmatpush1.msra.mxu0 0.0
  %3656 = vmatprep.subr.mxu0 0.0
  %3657 = vmatpush1.msra.mxu0 0.0
  %3658 = vmatprep.subr.mxu0 0.0
  %3659 = vmatpush1.msra.mxu0 0.0
  %3660 = vmatprep.subr.mxu0 0.0
  %3661 = vmatpush1.msra.mxu0 0.0
  %3662 = vmatprep.subr.mxu0 0.0
  %3663 = vmatpush1.msra.mxu0 0.0
  %3664 = vmatprep.subr.mxu0 0.0
  %3665 = vmatpush1.msra.mxu0 0.0
  %3666 = vmatprep.subr.mxu0 0.0
  %3667 = vmatpush1.msra.mxu0 0.0
  %3668 = vmatprep.subr.mxu0 0.0
  %3669 = vmatpush1.msra.mxu0 0.0
  %3670 = vmatprep.subr.mxu0 0.0
  %3671 = vmatpush1.msra.mxu0 0.0
  %3672 = vmatprep.subr.mxu0 0.0
  %3673 = vmatpush1.msra.mxu0 0.0
  %3674 = vmatprep.subr.mxu0 0.0
  %3675 = vmatpush1.msra.mxu0 0.0
  %3676 = vmatprep.subr.mxu0 0.0
  %3677 = vmatpush1.msra.mxu0 0.0
  %3678 = vmatprep.subr.mxu0 0.0
  %3679 = vmatpush1.msra.mxu0 0.0
  %3680 = vmatprep.subr.mxu0 0.0
  %3681 = vmatpush1.msra.mxu0 0.0
  %3682 = vmatprep.subr.mxu0 0.0
  %3683 = vmatpush1.msra.mxu0 0.0
  %3684 = vmatprep.subr.mxu0 0.0
  %3685 = vmatpush1.msra.mxu0 0.0
  %3686 = vmatprep.subr.mxu0 0.0
  %3687 = vmatpush1.msra.mxu0 0.0
  %3688 = vmatprep.mubr.f32.mxu0 0.0
  %3689 = vmatmul.mubr.f32.gmra.mrb[0].mxu0 %v2754
  %v3690 = vpop.f32.mrb[0].mxu0
  %v3691 = vadd.f32 0.0, %v3690
  %v3692 = vpop.f32.mrb[0].mxu0
  %3693 = vdwg.mxu0
  %3695 = vrot.lane.b32.xlu0 %v3691, 48
  %v3696 = vpop.permute.xlu0 %3695
  %3698 = vst.msk [vmem:[%s9 + $0x8] sm:$0xff] %vm3065, %v3696
  %v3699 = vld [vmem:[#allocation6 + $0x180] sm:$0xff]
  %v3700 = vld [vmem:[#allocation6 + $0x188] sm:$0xff]
  %v3701 = vld [vmem:[#allocation6 + $0x190] sm:$0xff]
  %v3702 = vld [vmem:[#allocation6 + $0x198] sm:$0xff]
  %3703 = vmatprep.subr.mxu0 0.0
  %3704 = vmatpush1.msra.mxu0 %v3699
  %3705 = vmatprep.subr.mxu0 0.0
  %3706 = vmatpush1.msra.mxu0 %v3700
  %3707 = vmatprep.subr.mxu0 0.0
  %3708 = vmatpush1.msra.mxu0 %v3701
  %3709 = vmatprep.subr.mxu0 0.0
  %3710 = vmatpush1.msra.mxu0 %v3702
  %3711 = vmatprep.subr.mxu0 0.0
  %3712 = vmatpush1.msra.mxu0 0.0
  %3713 = vmatprep.subr.mxu0 0.0
  %3714 = vmatpush1.msra.mxu0 0.0
  %3715 = vmatprep.subr.mxu0 0.0
  %3716 = vmatpush1.msra.mxu0 0.0
  %3717 = vmatprep.subr.mxu0 0.0
  %3718 = vmatpush1.msra.mxu0 0.0
  %3719 = vmatprep.subr.mxu0 0.0
  %3720 = vmatpush1.msra.mxu0 0.0
  %3721 = vmatprep.subr.mxu0 0.0
  %3722 = vmatpush1.msra.mxu0 0.0
  %3723 = vmatprep.subr.mxu0 0.0
  %3724 = vmatpush1.msra.mxu0 0.0
  %3725 = vmatprep.subr.mxu0 0.0
  %3726 = vmatpush1.msra.mxu0 0.0
  %3727 = vmatprep.subr.mxu0 0.0
  %3728 = vmatpush1.msra.mxu0 0.0
  %3729 = vmatprep.subr.mxu0 0.0
  %3730 = vmatpush1.msra.mxu0 0.0
  %3731 = vmatprep.subr.mxu0 0.0
  %3732 = vmatpush1.msra.mxu0 0.0
  %3733 = vmatprep.subr.mxu0 0.0
  %3734 = vmatpush1.msra.mxu0 0.0
  %3735 = vmatprep.subr.mxu0 0.0
  %3736 = vmatpush1.msra.mxu0 0.0
  %3737 = vmatprep.subr.mxu0 0.0
  %3738 = vmatpush1.msra.mxu0 0.0
  %3739 = vmatprep.subr.mxu0 0.0
  %3740 = vmatpush1.msra.mxu0 0.0
  %3741 = vmatprep.subr.mxu0 0.0
  %3742 = vmatpush1.msra.mxu0 0.0
  %3743 = vmatprep.subr.mxu0 0.0
  %3744 = vmatpush1.msra.mxu0 0.0
  %3745 = vmatprep.subr.mxu0 0.0
  %3746 = vmatpush1.msra.mxu0 0.0
  %3747 = vmatprep.subr.mxu0 0.0
  %3748 = vmatpush1.msra.mxu0 0.0
  %3749 = vmatprep.subr.mxu0 0.0
  %3750 = vmatpush1.msra.mxu0 0.0
  %3751 = vmatprep.subr.mxu0 0.0
  %3752 = vmatpush1.msra.mxu0 0.0
  %3753 = vmatprep.subr.mxu0 0.0
  %3754 = vmatpush1.msra.mxu0 0.0
  %3755 = vmatprep.subr.mxu0 0.0
  %3756 = vmatpush1.msra.mxu0 0.0
  %3757 = vmatprep.subr.mxu0 0.0
  %3758 = vmatpush1.msra.mxu0 0.0
  %3759 = vmatprep.subr.mxu0 0.0
  %3760 = vmatpush1.msra.mxu0 0.0
  %3761 = vmatprep.subr.mxu0 0.0
  %3762 = vmatpush1.msra.mxu0 0.0
  %3763 = vmatprep.subr.mxu0 0.0
  %3764 = vmatpush1.msra.mxu0 0.0
  %3765 = vmatprep.subr.mxu0 0.0
  %3766 = vmatpush1.msra.mxu0 0.0
  %3767 = vmatprep.mubr.f32.mxu0 0.0
  %3768 = vmatmul.mubr.f32.gmra.mrb[0].mxu0 %v2754
  %v3769 = vpop.f32.mrb[0].mxu0
  %v3770 = vadd.f32 0.0, %v3769
  %v3771 = vpop.f32.mrb[0].mxu0
  %3772 = vdwg.mxu0
  %3774 = vrot.lane.b32.xlu0 %v3770, 64
  %v3775 = vpop.permute.xlu0 %3774
  %3777 = vst.msk [vmem:[%s9 + $0x8] sm:$0xff] %vm3145, %v3775
  %v3778 = vld [vmem:[#allocation6 + $0x1a0] sm:$0xff]
  %v3779 = vld [vmem:[#allocation6 + $0x1a8] sm:$0xff]
  %v3780 = vld [vmem:[#allocation6 + $0x1b0] sm:$0xff]
  %v3781 = vld [vmem:[#allocation6 + $0x1b8] sm:$0xff]
  %3782 = vmatprep.subr.mxu0 0.0
  %3783 = vmatpush1.msra.mxu0 %v3778
  %3784 = vmatprep.subr.mxu0 0.0
  %3785 = vmatpush1.msra.mxu0 %v3779
  %3786 = vmatprep.subr.mxu0 0.0
  %3787 = vmatpush1.msra.mxu0 %v3780
  %3788 = vmatprep.subr.mxu0 0.0
  %3789 = vmatpush1.msra.mxu0 %v3781
  %3790 = vmatprep.subr.mxu0 0.0
  %3791 = vmatpush1.msra.mxu0 0.0
  %3792 = vmatprep.subr.mxu0 0.0
  %3793 = vmatpush1.msra.mxu0 0.0
  %3794 = vmatprep.subr.mxu0 0.0
  %3795 = vmatpush1.msra.mxu0 0.0
  %3796 = vmatprep.subr.mxu0 0.0
  %3797 = vmatpush1.msra.mxu0 0.0
  %3798 = vmatprep.subr.mxu0 0.0
  %3799 = vmatpush1.msra.mxu0 0.0
  %3800 = vmatprep.subr.mxu0 0.0
  %3801 = vmatpush1.msra.mxu0 0.0
  %3802 = vmatprep.subr.mxu0 0.0
  %3803 = vmatpush1.msra.mxu0 0.0
  %3804 = vmatprep.subr.mxu0 0.0
  %3805 = vmatpush1.msra.mxu0 0.0
  %3806 = vmatprep.subr.mxu0 0.0
  %3807 = vmatpush1.msra.mxu0 0.0
  %3808 = vmatprep.subr.mxu0 0.0
  %3809 = vmatpush1.msra.mxu0 0.0
  %3810 = vmatprep.subr.mxu0 0.0
  %3811 = vmatpush1.msra.mxu0 0.0
  %3812 = vmatprep.subr.mxu0 0.0
  %3813 = vmatpush1.msra.mxu0 0.0
  %3814 = vmatprep.subr.mxu0 0.0
  %3815 = vmatpush1.msra.mxu0 0.0
  %3816 = vmatprep.subr.mxu0 0.0
  %3817 = vmatpush1.msra.mxu0 0.0
  %3818 = vmatprep.subr.mxu0 0.0
  %3819 = vmatpush1.msra.mxu0 0.0
  %3820 = vmatprep.subr.mxu0 0.0
  %3821 = vmatpush1.msra.mxu0 0.0
  %3822 = vmatprep.subr.mxu0 0.0
  %3823 = vmatpush1.msra.mxu0 0.0
  %3824 = vmatprep.subr.mxu0 0.0
  %3825 = vmatpush1.msra.mxu0 0.0
  %3826 = vmatprep.subr.mxu0 0.0
  %3827 = vmatpush1.msra.mxu0 0.0
  %3828 = vmatprep.subr.mxu0 0.0
  %3829 = vmatpush1.msra.mxu0 0.0
  %3830 = vmatprep.subr.mxu0 0.0
  %3831 = vmatpush1.msra.mxu0 0.0
  %3832 = vmatprep.subr.mxu0 0.0
  %3833 = vmatpush1.msra.mxu0 0.0
  %3834 = vmatprep.subr.mxu0 0.0
  %3835 = vmatpush1.msra.mxu0 0.0
  %3836 = vmatprep.subr.mxu0 0.0
  %3837 = vmatpush1.msra.mxu0 0.0
  %3838 = vmatprep.subr.mxu0 0.0
  %3839 = vmatpush1.msra.mxu0 0.0
  %3840 = vmatprep.subr.mxu0 0.0
  %3841 = vmatpush1.msra.mxu0 0.0
  %3842 = vmatprep.subr.mxu0 0.0
  %3843 = vmatpush1.msra.mxu0 0.0
  %3844 = vmatprep.subr.mxu0 0.0
  %3845 = vmatpush1.msra.mxu0 0.0
  %3846 = vmatprep.mubr.f32.mxu0 0.0
  %3847 = vmatmul.mubr.f32.gmra.mrb[0].mxu0 %v2754
  %v3848 = vpop.f32.mrb[0].mxu0
  %v3849 = vadd.f32 0.0, %v3848
  %v3850 = vpop.f32.mrb[0].mxu0
  %3851 = vdwg.mxu0
  %3853 = vrot.lane.b32.xlu0 %v3849, 80
  %v3854 = vpop.permute.xlu0 %3853
  %3856 = vst.msk [vmem:[%s9 + $0x8] sm:$0xff] %vm3225, %v3854
  %v3857 = vld [vmem:[#allocation6 + $0x1c0] sm:$0xff]
  %v3858 = vld [vmem:[#allocation6 + $0x1c8] sm:$0xff]
  %v3859 = vld [vmem:[#allocation6 + $0x1d0] sm:$0xff]
  %v3860 = vld [vmem:[#allocation6 + $0x1d8] sm:$0xff]
  %3861 = vmatprep.subr.mxu0 0.0
  %3862 = vmatpush1.msra.mxu0 %v3857
  %3863 = vmatprep.subr.mxu0 0.0
  %3864 = vmatpush1.msra.mxu0 %v3858
  %3865 = vmatprep.subr.mxu0 0.0
  %3866 = vmatpush1.msra.mxu0 %v3859
  %3867 = vmatprep.subr.mxu0 0.0
  %3868 = vmatpush1.msra.mxu0 %v3860
  %3869 = vmatprep.subr.mxu0 0.0
  %3870 = vmatpush1.msra.mxu0 0.0
  %3871 = vmatprep.subr.mxu0 0.0
  %3872 = vmatpush1.msra.mxu0 0.0
  %3873 = vmatprep.subr.mxu0 0.0
  %3874 = vmatpush1.msra.mxu0 0.0
  %3875 = vmatprep.subr.mxu0 0.0
  %3876 = vmatpush1.msra.mxu0 0.0
  %3877 = vmatprep.subr.mxu0 0.0
  %3878 = vmatpush1.msra.mxu0 0.0
  %3879 = vmatprep.subr.mxu0 0.0
  %3880 = vmatpush1.msra.mxu0 0.0
  %3881 = vmatprep.subr.mxu0 0.0
  %3882 = vmatpush1.msra.mxu0 0.0
  %3883 = vmatprep.subr.mxu0 0.0
  %3884 = vmatpush1.msra.mxu0 0.0
  %3885 = vmatprep.subr.mxu0 0.0
  %3886 = vmatpush1.msra.mxu0 0.0
  %3887 = vmatprep.subr.mxu0 0.0
  %3888 = vmatpush1.msra.mxu0 0.0
  %3889 = vmatprep.subr.mxu0 0.0
  %3890 = vmatpush1.msra.mxu0 0.0
  %3891 = vmatprep.subr.mxu0 0.0
  %3892 = vmatpush1.msra.mxu0 0.0
  %3893 = vmatprep.subr.mxu0 0.0
  %3894 = vmatpush1.msra.mxu0 0.0
  %3895 = vmatprep.subr.mxu0 0.0
  %3896 = vmatpush1.msra.mxu0 0.0
  %3897 = vmatprep.subr.mxu0 0.0
  %3898 = vmatpush1.msra.mxu0 0.0
  %3899 = vmatprep.subr.mxu0 0.0
  %3900 = vmatpush1.msra.mxu0 0.0
  %3901 = vmatprep.subr.mxu0 0.0
  %3902 = vmatpush1.msra.mxu0 0.0
  %3903 = vmatprep.subr.mxu0 0.0
  %3904 = vmatpush1.msra.mxu0 0.0
  %3905 = vmatprep.subr.mxu0 0.0
  %3906 = vmatpush1.msra.mxu0 0.0
  %3907 = vmatprep.subr.mxu0 0.0
  %3908 = vmatpush1.msra.mxu0 0.0
  %3909 = vmatprep.subr.mxu0 0.0
  %3910 = vmatpush1.msra.mxu0 0.0
  %3911 = vmatprep.subr.mxu0 0.0
  %3912 = vmatpush1.msra.mxu0 0.0
  %3913 = vmatprep.subr.mxu0 0.0
  %3914 = vmatpush1.msra.mxu0 0.0
  %3915 = vmatprep.subr.mxu0 0.0
  %3916 = vmatpush1.msra.mxu0 0.0
  %3917 = vmatprep.subr.mxu0 0.0
  %3918 = vmatpush1.msra.mxu0 0.0
  %3919 = vmatprep.subr.mxu0 0.0
  %3920 = vmatpush1.msra.mxu0 0.0
  %3921 = vmatprep.subr.mxu0 0.0
  %3922 = vmatpush1.msra.mxu0 0.0
  %3923 = vmatprep.subr.mxu0 0.0
  %3924 = vmatpush1.msra.mxu0 0.0
  %3925 = vmatprep.mubr.f32.mxu0 0.0
  %3926 = vmatmul.mubr.f32.gmra.mrb[0].mxu0 %v2754
  %v3927 = vpop.f32.mrb[0].mxu0
  %v3928 = vadd.f32 0.0, %v3927
  %v3929 = vpop.f32.mrb[0].mxu0
  %3930 = vdwg.mxu0
  %3932 = vrot.lane.b32.xlu0 %v3928, 96
  %v3933 = vpop.permute.xlu0 %3932
  %3935 = vst.msk [vmem:[%s9 + $0x8] sm:$0xff] %vm3305, %v3933
  %v3936 = vld [vmem:[#allocation6 + $0x1e0] sm:$0xff]
  %v3937 = vld [vmem:[#allocation6 + $0x1e8] sm:$0xff]
  %v3938 = vld [vmem:[#allocation6 + $0x1f0] sm:$0xff]
  %v3939 = vld [vmem:[#allocation6 + $0x1f8] sm:$0xff]
  %3940 = vmatprep.subr.mxu0 0.0
  %3941 = vmatpush1.msra.mxu0 %v3936
  %3942 = vmatprep.subr.mxu0 0.0
  %3943 = vmatpush1.msra.mxu0 %v3937
  %3944 = vmatprep.subr.mxu0 0.0
  %3945 = vmatpush1.msra.mxu0 %v3938
  %3946 = vmatprep.subr.mxu0 0.0
  %3947 = vmatpush1.msra.mxu0 %v3939
  %3948 = vmatprep.subr.mxu0 0.0
  %3949 = vmatpush1.msra.mxu0 0.0
  %3950 = vmatprep.subr.mxu0 0.0
  %3951 = vmatpush1.msra.mxu0 0.0
  %3952 = vmatprep.subr.mxu0 0.0
  %3953 = vmatpush1.msra.mxu0 0.0
  %3954 = vmatprep.subr.mxu0 0.0
  %3955 = vmatpush1.msra.mxu0 0.0
  %3956 = vmatprep.subr.mxu0 0.0
  %3957 = vmatpush1.msra.mxu0 0.0
  %3958 = vmatprep.subr.mxu0 0.0
  %3959 = vmatpush1.msra.mxu0 0.0
  %3960 = vmatprep.subr.mxu0 0.0
  %3961 = vmatpush1.msra.mxu0 0.0
  %3962 = vmatprep.subr.mxu0 0.0
  %3963 = vmatpush1.msra.mxu0 0.0
  %3964 = vmatprep.subr.mxu0 0.0
  %3965 = vmatpush1.msra.mxu0 0.0
  %3966 = vmatprep.subr.mxu0 0.0
  %3967 = vmatpush1.msra.mxu0 0.0
  %3968 = vmatprep.subr.mxu0 0.0
  %3969 = vmatpush1.msra.mxu0 0.0
  %3970 = vmatprep.subr.mxu0 0.0
  %3971 = vmatpush1.msra.mxu0 0.0
  %3972 = vmatprep.subr.mxu0 0.0
  %3973 = vmatpush1.msra.mxu0 0.0
  %3974 = vmatprep.subr.mxu0 0.0
  %3975 = vmatpush1.msra.mxu0 0.0
  %3976 = vmatprep.subr.mxu0 0.0
  %3977 = vmatpush1.msra.mxu0 0.0
  %3978 = vmatprep.subr.mxu0 0.0
  %3979 = vmatpush1.msra.mxu0 0.0
  %3980 = vmatprep.subr.mxu0 0.0
  %3981 = vmatpush1.msra.mxu0 0.0
  %3982 = vmatprep.subr.mxu0 0.0
  %3983 = vmatpush1.msra.mxu0 0.0
  %3984 = vmatprep.subr.mxu0 0.0
  %3985 = vmatpush1.msra.mxu0 0.0
  %3986 = vmatprep.subr.mxu0 0.0
  %3987 = vmatpush1.msra.mxu0 0.0
  %3988 = vmatprep.subr.mxu0 0.0
  %3989 = vmatpush1.msra.mxu0 0.0
  %3990 = vmatprep.subr.mxu0 0.0
  %3991 = vmatpush1.msra.mxu0 0.0
  %3992 = vmatprep.subr.mxu0 0.0
  %3993 = vmatpush1.msra.mxu0 0.0
  %3994 = vmatprep.subr.mxu0 0.0
  %3995 = vmatpush1.msra.mxu0 0.0
  %3996 = vmatprep.subr.mxu0 0.0
  %3997 = vmatpush1.msra.mxu0 0.0
  %3998 = vmatprep.subr.mxu0 0.0
  %3999 = vmatpush1.msra.mxu0 0.0
  %4000 = vmatprep.subr.mxu0 0.0
  %4001 = vmatpush1.msra.mxu0 0.0
  %4002 = vmatprep.subr.mxu0 0.0
  %4003 = vmatpush1.msra.mxu0 0.0
  %4004 = vmatprep.mubr.f32.mxu0 0.0
  %4005 = vmatmul.mubr.f32.gmra.mrb[0].mxu0 %v2754
  %v4006 = vpop.f32.mrb[0].mxu0
  %v4007 = vadd.f32 0.0, %v4006
  %v4008 = vpop.f32.mrb[0].mxu0
  %4009 = vdwg.mxu0
  %4011 = vrot.lane.b32.xlu0 %v4007, 112
  %v4012 = vpop.permute.xlu0 %4011
  %4014 = vst.msk [vmem:[%s9 + $0x8] sm:$0xff] %vm3385, %v4012
  // Predicated region
  $region38: #{mqa_forward.1} parent=0 // pred_check
    _
  $region39: #{mqa_forward.1} parent=0 // pred_check_branch
    %4016 = sbr.rel (0) target = $region41
  $region40: #{mqa_forward.1} parent=0 // pred_region
    _
  $region41: #{mqa_forward.1} parent=0 // pred_fallthru
    _
  // Predicated region
  $region42: #{mqa_forward.1} parent=0 // pred_check
    _
  $region43: #{mqa_forward.1} parent=0 // pred_check_branch
    %4018 = sbr.rel (0) target = $region45
  $region44: #{mqa_forward.1} parent=0 // pred_region
    _
  $region45: #{mqa_forward.1} parent=0 // pred_fallthru
    _

</llo_original>
